<compile_context>
chip_gen: v5e
topology: v5e:2x2
jax: 0.10.0
libtpu: 0.0.40
codegen_flags: <defaults>
</compile_context>

<pallas_src>
import functools

import jax
import jax.numpy as jnp
from jax.experimental import pallas as pl
from jax.experimental.pallas import tpu as pltpu

C_IN = 896    # Block17 input / output channels
C_BR = 128    # branch channels


# ---------------------------------------------------------------------------
# Kernel: NB batch elements per grid step; all matmuls are bf16 x bf16 -> f32.
# ---------------------------------------------------------------------------
def _block17_kernel(x_ref,
                    w01_ref, b01_ref,
                    w1b_ref, b1b_ref,
                    w1c_ref, b1c_ref,
                    w2a_ref, w2b_ref, b2_ref,
                    o_ref, *, nb, h, w):
    f32, bf16 = jnp.float32, jnp.bfloat16
    m = nb * h * w
    relu = lambda v: jnp.maximum(v, 0.0)

    x = x_ref[...]                                         # (M, 896) bf16

    # ---- fused branch0 + branch1[0]: one (M,896)@(896,256) MXU matmul ------
    z = jnp.dot(x, w01_ref[...], preferred_element_type=f32)
    z = relu(z + b01_ref[...])                             # (M, 256) f32
    x0 = z[:, :C_BR]                                       # branch0 out (M,128)
    y = z[:, C_BR:]                                        # branch1[0] out

    # ---- branch1[1]: (1,7) conv along W, pad 3, BN folded, ReLU ------------
    # (W is the sublane axis; taps k=1..6 are sublane-offset slices.)
    y4 = y.reshape(nb, h, w, C_BR)
    zp = jnp.zeros((nb, h, 3, C_BR), f32)
    yp = jnp.concatenate([zp, y4, zp], axis=2)             # (NB, H, W+6, 128)
    acc = jnp.zeros((m, C_BR), f32)
    for k in range(7):                                     # static unrolled taps
        tap = yp[:, :, k:k + w, :].reshape(m, C_BR).astype(bf16)
        acc = acc + jnp.dot(tap, w1b_ref[k], preferred_element_type=f32)
    y = relu(acc + b1b_ref[...])                           # (M, 128) f32

    # ---- branch1[2]: (7,1) conv along H, pad 3 (H is an outer dim: the 7
    # tap slices are free address offsets, no relayout) ----------------------
    y4 = y.reshape(nb, h, w, C_BR)
    zp = jnp.zeros((nb, 3, w, C_BR), f32)
    yp = jnp.concatenate([zp, y4, zp], axis=1)             # (NB, H+6, W, 128)
    acc = jnp.zeros((m, C_BR), f32)
    for k in range(7):
        tap = yp[:, k:k + h, :, :].reshape(m, C_BR).astype(bf16)
        acc = acc + jnp.dot(tap, w1c_ref[k], preferred_element_type=f32)
    x1 = relu(acc + b1c_ref[...])                          # (M, 128) f32

    # ---- conv2d (scale pre-folded into w2/b2) as two half matmuls (no
    # concat), residual add (re-read x), ReLU --------------------------------
    out = jnp.dot(x0.astype(bf16), w2a_ref[...], preferred_element_type=f32)
    out = out + jnp.dot(x1.astype(bf16), w2b_ref[...], preferred_element_type=f32)
    out = out + b2_ref[...] + x_ref[...].astype(f32)
    o_ref[...] = relu(out).astype(o_ref.dtype)


# ---------------------------------------------------------------------------
# Wrapper
# ---------------------------------------------------------------------------
def block17_forward(x_nhwc, packed, *, batch_tile=None):
    N, H, W, C = x_nhwc.shape
    assert C == C_IN

    if batch_tile is None:
        batch_tile = 1
        for nb in (8, 4, 2):          # biggest tile that still leaves grid >= 2
            if N % nb == 0 and N // nb >= 2:
                batch_tile = nb
                break
    NB = batch_tile
    assert N % NB == 0, "batch must be divisible by the batch tile"
    M = NB * H * W

    # Lane-dense 2D slab: rows = (n, h, w), lanes = channels.
    x2 = x_nhwc.reshape(N * H * W, C_IN)

    def fixed(shape):                 # whole-array (grid-invariant) operand
        return pl.BlockSpec(shape, lambda n: (0,) * len(shape))

    kernel = functools.partial(_block17_kernel, nb=NB, h=H, w=W)

    out2 = pl.pallas_call(
        kernel,
        out_shape=jax.ShapeDtypeStruct((N * H * W, C_IN), x_nhwc.dtype),
        grid=(N // NB,),
        in_specs=[
            pl.BlockSpec((M, C_IN), lambda n: (n, 0)),            # x slab
            fixed((C_IN, 2 * C_BR)), fixed((1, 2 * C_BR)),        # fused 1x1
            fixed((7, C_BR, C_BR)), fixed((1, C_BR)),             # (1,7) conv
            fixed((7, C_BR, C_BR)), fixed((1, C_BR)),             # (7,1) conv
            fixed((C_BR, C_IN)), fixed((C_BR, C_IN)),             # conv2d halves
            fixed((1, C_IN)),                                     # conv2d bias
        ],
        out_specs=pl.BlockSpec((M, C_IN), lambda n: (n, 0)),
        compiler_params=pltpu.CompilerParams(
            dimension_semantics=("parallel",),
            vmem_limit_bytes=32 * 1024 * 1024),
    )(x2,
      packed['w01'], packed['b01'],
      packed['w1b'], packed['b1b'],
      packed['w1c'], packed['b1c'],
      packed['w2a'], packed['w2b'], packed['b2'])
    return out2.reshape(N, H, W, C_IN)


# ---------------------------------------------------------------------------
# Parameters: conv weights + eval-mode BN folded, then packed for the kernel
# (branch0/branch1[0] fused, scale folded into conv2d, weights cast to bf16).
# ---------------------------------------------------------------------------
def _fold_bn(w, bn, eps=1e-3):
    gamma, beta, mean, var = bn
    s = gamma / jnp.sqrt(var + eps)           # (Cout,)
    return w * s, beta - mean * s             # scale the output-channel dim


def _bn_params(key, c):
    k1, k2, k3, k4 = jax.random.split(key, 4)
    gamma = 1.0 + 0.1 * jax.random.normal(k1, (c,), jnp.float32)
    beta = 0.1 * jax.random.normal(k2, (c,), jnp.float32)
    mean = 0.1 * jax.random.normal(k3, (c,), jnp.float32)
    var = 0.5 + 0.5 * jnp.abs(jax.random.normal(k4, (c,), jnp.float32))
    return gamma, beta, mean, var


def init_params(key):
    ks = jax.random.split(key, 10)
    s = 0.05
    # raw conv weights, contraction (input-channel) dim first, out channels last
    w0_raw = s * jax.random.normal(ks[0], (C_IN, C_BR), jnp.float32)
    w1a_raw = s * jax.random.normal(ks[1], (C_IN, C_BR), jnp.float32)
    w1b_raw = s * jax.random.normal(ks[2], (7, C_BR, C_BR), jnp.float32)  # kw taps
    w1c_raw = s * jax.random.normal(ks[3], (7, C_BR, C_BR), jnp.float32)  # kh taps
    w2 = s * jax.random.normal(ks[4], (2 * C_BR, C_IN), jnp.float32)
    b2 = 0.1 * jax.random.normal(ks[5], (C_IN,), jnp.float32)

    w0, b0 = _fold_bn(w0_raw, _bn_params(ks[6], C_BR))
    w1a, b1a = _fold_bn(w1a_raw, _bn_params(ks[7], C_BR))
    w1b, b1b = _fold_bn(w1b_raw, _bn_params(ks[8], C_BR))
    w1c, b1c = _fold_bn(w1c_raw, _bn_params(ks[9], C_BR))

    return dict(w0=w0, b0=b0, w1a=w1a, b1a=b1a, w1b=w1b, b1b=b1b,
                w1c=w1c, b1c=b1c, w2=w2, b2=b2)


def pack_params(p, scale):
    f32, bf16 = jnp.float32, jnp.bfloat16
    w01 = jnp.concatenate([p['w0'], p['w1a']], axis=1)        # (896, 256)
    b01 = jnp.concatenate([p['b0'], p['b1a']], axis=0)        # (256,)
    w2s = scale * p['w2']                                     # fold scale (fp32)
    b2s = scale * p['b2']
    r = lambda b: b.reshape(1, -1).astype(f32)
    return dict(
        w01=w01.astype(bf16), b01=r(b01),
        w1b=p['w1b'].astype(bf16), b1b=r(p['b1b']),
        w1c=p['w1c'].astype(bf16), b1c=r(p['b1c']),
        w2a=w2s[:C_BR].astype(bf16),                          # x0 half of cat
        w2b=w2s[C_BR:].astype(bf16),                          # x1 half of cat
        b2=r(b2s))


# ---------------------------------------------------------------------------
# Pure-JAX reference (lax.conv, same bf16 cast points) for verification.
# ---------------------------------------------------------------------------
def ref_forward(x, p):
    f32, bf16 = jnp.float32, jnp.bfloat16
    dn = ('NHWC', 'HWIO', 'NHWC')
    conv = lambda v, wgt, pad: jax.lax.conv_general_dilated(
        v, wgt, (1, 1), pad, dimension_numbers=dn,
        preferred_element_type=f32)
    relu = lambda v: jnp.maximum(v, 0.0)

    z = relu(conv(x, p['w01'][None, None], [(0, 0), (0, 0)]) + p['b01'])
    x0 = z[..., :C_BR].astype(bf16)
    y = z[..., C_BR:].astype(bf16)
    y = relu(conv(y, p['w1b'][None], [(0, 0), (3, 3)]) + p['b1b']).astype(bf16)
    x1 = relu(conv(y, p['w1c'][:, None], [(3, 3), (0, 0)]) + p['b1c']).astype(bf16)
    out = (conv(x0, p['w2a'][None, None], [(0, 0), (0, 0)])
           + conv(x1, p['w2b'][None, None], [(0, 0), (0, 0)])
           + p['b2'] + x.astype(f32))
    return relu(out).astype(bf16)


if __name__ == "__main__":
    key = jax.random.PRNGKey(0)
    kx, kp = jax.random.split(key)

    N, H, W = 4, 8, 8
    scale = 0.17

    # PyTorch-style NCHW input, transposed to NHWC + cast to bf16 for the kernel.
    x_nchw = jax.random.normal(kx, (N, C_IN, H, W), jnp.float32)
    x_nhwc = jnp.transpose(x_nchw, (0, 2, 3, 1)).astype(jnp.bfloat16)

    params = init_params(kp)
    packed = pack_params(params, scale)

    out = block17_forward(x_nhwc, packed)
    out = jax.block_until_ready(out)
    assert out.shape == (N, H, W, C_IN)

    ref = ref_forward(x_nhwc, packed)
    diff = jnp.abs(out.astype(jnp.float32) - ref.astype(jnp.float32))
    max_err = float(jnp.max(diff))
    rms_err = float(jnp.sqrt(jnp.mean(diff * diff)))
    if not (max_err < 0.1 and rms_err < 0.015):
        raise AssertionError(
            f"mismatch vs reference: max abs err = {max_err}, rms = {rms_err}")

    print("KERNEL_OK")
</pallas_src>

<mosaic_0001>
module attributes {stable_mosaic.version = 11 : i64} {
  func.func @_block17_kernel(%arg0: i32, %arg1: memref<128x896xbf16, #tpu.memory_space<vmem>>, %arg2: memref<896x256xbf16, #tpu.memory_space<vmem>>, %arg3: memref<1x256xf32, #tpu.memory_space<vmem>>, %arg4: memref<7x128x128xbf16, #tpu.memory_space<vmem>>, %arg5: memref<1x128xf32, #tpu.memory_space<vmem>>, %arg6: memref<7x128x128xbf16, #tpu.memory_space<vmem>>, %arg7: memref<1x128xf32, #tpu.memory_space<vmem>>, %arg8: memref<128x896xbf16, #tpu.memory_space<vmem>>, %arg9: memref<128x896xbf16, #tpu.memory_space<vmem>>, %arg10: memref<1x896xf32, #tpu.memory_space<vmem>>, %arg11: memref<128x896xbf16, #tpu.memory_space<vmem>>) attributes {dimension_semantics = [#tpu.dimension_semantics<parallel>], iteration_bounds = array<i64: 2>, scalar_prefetch = 0 : i64, scratch_operands = 0 : i64, tpu.core_type = #tpu.core_type<tc>, window_params = [{transform_indices = @transform_0, window_bounds = array<i64: 128, 896>}, {pipeline_mode = #tpu.pipeline_mode<synchronous>, transform_indices = @transform_1, window_bounds = array<i64: 896, 256>}, {pipeline_mode = #tpu.pipeline_mode<synchronous>, transform_indices = @transform_2, window_bounds = array<i64: 1, 256>}, {pipeline_mode = #tpu.pipeline_mode<synchronous>, transform_indices = @transform_3, window_bounds = array<i64: 7, 128, 128>}, {pipeline_mode = #tpu.pipeline_mode<synchronous>, transform_indices = @transform_4, window_bounds = array<i64: 1, 128>}, {pipeline_mode = #tpu.pipeline_mode<synchronous>, transform_indices = @transform_5, window_bounds = array<i64: 7, 128, 128>}, {pipeline_mode = #tpu.pipeline_mode<synchronous>, transform_indices = @transform_6, window_bounds = array<i64: 1, 128>}, {pipeline_mode = #tpu.pipeline_mode<synchronous>, transform_indices = @transform_7, window_bounds = array<i64: 128, 896>}, {pipeline_mode = #tpu.pipeline_mode<synchronous>, transform_indices = @transform_8, window_bounds = array<i64: 128, 896>}, {pipeline_mode = #tpu.pipeline_mode<synchronous>, transform_indices = @transform_9, window_bounds = array<i64: 1, 896>}, {transform_indices = @transform_10, window_bounds = array<i64: 128, 896>}]} {
    %c0 = arith.constant 0 : index
    %c0_0 = arith.constant 0 : index
    %0 = vector.load %arg1[%c0, %c0_0] : memref<128x896xbf16, #tpu.memory_space<vmem>>, vector<128x896xbf16>
    %c0_1 = arith.constant 0 : index
    %c0_2 = arith.constant 0 : index
    %1 = vector.load %arg2[%c0_1, %c0_2] : memref<896x256xbf16, #tpu.memory_space<vmem>>, vector<896x256xbf16>
    %cst = arith.constant dense<0.000000e+00> : vector<128x256xf32>
    %2 = tpu.matmul %0, %1, %cst {dimension_numbers = #tpu.dot_dimension_numbers<[1], [0], [0], [1], [0, 0, 1, 1], [], []>} : vector<128x896xbf16>, vector<896x256xbf16>, vector<128x256xf32> -> vector<128x256xf32>
    %c0_3 = arith.constant 0 : index
    %c0_4 = arith.constant 0 : index
    %3 = vector.load %arg3[%c0_3, %c0_4] : memref<1x256xf32, #tpu.memory_space<vmem>>, vector<1x256xf32>
    %4 = vector.broadcast %3 : vector<1x256xf32> to vector<128x256xf32>
    %5 = arith.addf %2, %4 : vector<128x256xf32>
    %cst_5 = arith.constant 0.000000e+00 : f32
    %6 = vector.broadcast %cst_5 : f32 to vector<128x256xf32>
    %7 = arith.maximumf %5, %6 : vector<128x256xf32>
    %8 = vector.extract_strided_slice %7 {offsets = [0, 0], sizes = [128, 128], strides = [1, 1]} : vector<128x256xf32> to vector<128x128xf32>
    %9 = vector.extract_strided_slice %7 {offsets = [0, 128], sizes = [128, 128], strides = [1, 1]} : vector<128x256xf32> to vector<128x128xf32>
    %10 = vector.shape_cast %9 : vector<128x128xf32> to vector<2x8x8x128xf32>
    %cst_6 = arith.constant 0.000000e+00 : f32
    %11 = vector.broadcast %cst_6 : f32 to vector<2x8x3x128xf32>
    %12 = tpu.concatenate %11, %10, %11 in 2 : vector<2x8x3x128xf32>, vector<2x8x8x128xf32>, vector<2x8x3x128xf32> -> vector<2x8x14x128xf32>
    %cst_7 = arith.constant 0.000000e+00 : f32
    %13 = vector.broadcast %cst_7 : f32 to vector<128x128xf32>
    %14 = vector.extract_strided_slice %12 {offsets = [0, 0, 0, 0], sizes = [2, 8, 8, 128], strides = [1, 1, 1, 1]} : vector<2x8x14x128xf32> to vector<2x8x8x128xf32>
    %15 = vector.shape_cast %14 : vector<2x8x8x128xf32> to vector<128x128xf32>
    %16 = arith.truncf %15 : vector<128x128xf32> to vector<128x128xbf16>
    %c0_8 = arith.constant 0 : index
    %c0_9 = arith.constant 0 : index
    %c0_10 = arith.constant 0 : index
    %17 = vector.load %arg4[%c0_8, %c0_9, %c0_10] : memref<7x128x128xbf16, #tpu.memory_space<vmem>>, vector<1x128x128xbf16>
    %18 = vector.shape_cast %17 : vector<1x128x128xbf16> to vector<128x128xbf16>
    %cst_11 = arith.constant dense<0.000000e+00> : vector<128x128xf32>
    %19 = tpu.matmul %16, %18, %cst_11 {dimension_numbers = #tpu.dot_dimension_numbers<[1], [0], [0], [1], [0, 0, 1, 1], [], []>} : vector<128x128xbf16>, vector<128x128xbf16>, vector<128x128xf32> -> vector<128x128xf32>
    %20 = arith.addf %13, %19 : vector<128x128xf32>
    %21 = vector.extract_strided_slice %12 {offsets = [0, 0, 1, 0], sizes = [2, 8, 8, 128], strides = [1, 1, 1, 1]} : vector<2x8x14x128xf32> to vector<2x8x8x128xf32>
    %22 = vector.shape_cast %21 : vector<2x8x8x128xf32> to vector<128x128xf32>
    %23 = arith.truncf %22 : vector<128x128xf32> to vector<128x128xbf16>
    %c1 = arith.constant 1 : index
    %c0_12 = arith.constant 0 : index
    %c0_13 = arith.constant 0 : index
    %24 = vector.load %arg4[%c1, %c0_12, %c0_13] : memref<7x128x128xbf16, #tpu.memory_space<vmem>>, vector<1x128x128xbf16>
    %25 = vector.shape_cast %24 : vector<1x128x128xbf16> to vector<128x128xbf16>
    %cst_14 = arith.constant dense<0.000000e+00> : vector<128x128xf32>
    %26 = tpu.matmul %23, %25, %cst_14 {dimension_numbers = #tpu.dot_dimension_numbers<[1], [0], [0], [1], [0, 0, 1, 1], [], []>} : vector<128x128xbf16>, vector<128x128xbf16>, vector<128x128xf32> -> vector<128x128xf32>
    %27 = arith.addf %20, %26 : vector<128x128xf32>
    %28 = vector.extract_strided_slice %12 {offsets = [0, 0, 2, 0], sizes = [2, 8, 8, 128], strides = [1, 1, 1, 1]} : vector<2x8x14x128xf32> to vector<2x8x8x128xf32>
    %29 = vector.shape_cast %28 : vector<2x8x8x128xf32> to vector<128x128xf32>
    %30 = arith.truncf %29 : vector<128x128xf32> to vector<128x128xbf16>
    %c2 = arith.constant 2 : index
    %c0_15 = arith.constant 0 : index
    %c0_16 = arith.constant 0 : index
    %31 = vector.load %arg4[%c2, %c0_15, %c0_16] : memref<7x128x128xbf16, #tpu.memory_space<vmem>>, vector<1x128x128xbf16>
    %32 = vector.shape_cast %31 : vector<1x128x128xbf16> to vector<128x128xbf16>
    %cst_17 = arith.constant dense<0.000000e+00> : vector<128x128xf32>
    %33 = tpu.matmul %30, %32, %cst_17 {dimension_numbers = #tpu.dot_dimension_numbers<[1], [0], [0], [1], [0, 0, 1, 1], [], []>} : vector<128x128xbf16>, vector<128x128xbf16>, vector<128x128xf32> -> vector<128x128xf32>
    %34 = arith.addf %27, %33 : vector<128x128xf32>
    %35 = vector.extract_strided_slice %12 {offsets = [0, 0, 3, 0], sizes = [2, 8, 8, 128], strides = [1, 1, 1, 1]} : vector<2x8x14x128xf32> to vector<2x8x8x128xf32>
    %36 = vector.shape_cast %35 : vector<2x8x8x128xf32> to vector<128x128xf32>
    %37 = arith.truncf %36 : vector<128x128xf32> to vector<128x128xbf16>
    %c3 = arith.constant 3 : index
    %c0_18 = arith.constant 0 : index
    %c0_19 = arith.constant 0 : index
    %38 = vector.load %arg4[%c3, %c0_18, %c0_19] : memref<7x128x128xbf16, #tpu.memory_space<vmem>>, vector<1x128x128xbf16>
    %39 = vector.shape_cast %38 : vector<1x128x128xbf16> to vector<128x128xbf16>
    %cst_20 = arith.constant dense<0.000000e+00> : vector<128x128xf32>
    %40 = tpu.matmul %37, %39, %cst_20 {dimension_numbers = #tpu.dot_dimension_numbers<[1], [0], [0], [1], [0, 0, 1, 1], [], []>} : vector<128x128xbf16>, vector<128x128xbf16>, vector<128x128xf32> -> vector<128x128xf32>
    %41 = arith.addf %34, %40 : vector<128x128xf32>
    %42 = vector.extract_strided_slice %12 {offsets = [0, 0, 4, 0], sizes = [2, 8, 8, 128], strides = [1, 1, 1, 1]} : vector<2x8x14x128xf32> to vector<2x8x8x128xf32>
    %43 = vector.shape_cast %42 : vector<2x8x8x128xf32> to vector<128x128xf32>
    %44 = arith.truncf %43 : vector<128x128xf32> to vector<128x128xbf16>
    %c4 = arith.constant 4 : index
    %c0_21 = arith.constant 0 : index
    %c0_22 = arith.constant 0 : index
    %45 = vector.load %arg4[%c4, %c0_21, %c0_22] : memref<7x128x128xbf16, #tpu.memory_space<vmem>>, vector<1x128x128xbf16>
    %46 = vector.shape_cast %45 : vector<1x128x128xbf16> to vector<128x128xbf16>
    %cst_23 = arith.constant dense<0.000000e+00> : vector<128x128xf32>
    %47 = tpu.matmul %44, %46, %cst_23 {dimension_numbers = #tpu.dot_dimension_numbers<[1], [0], [0], [1], [0, 0, 1, 1], [], []>} : vector<128x128xbf16>, vector<128x128xbf16>, vector<128x128xf32> -> vector<128x128xf32>
    %48 = arith.addf %41, %47 : vector<128x128xf32>
    %49 = vector.extract_strided_slice %12 {offsets = [0, 0, 5, 0], sizes = [2, 8, 8, 128], strides = [1, 1, 1, 1]} : vector<2x8x14x128xf32> to vector<2x8x8x128xf32>
    %50 = vector.shape_cast %49 : vector<2x8x8x128xf32> to vector<128x128xf32>
    %51 = arith.truncf %50 : vector<128x128xf32> to vector<128x128xbf16>
    %c5 = arith.constant 5 : index
    %c0_24 = arith.constant 0 : index
    %c0_25 = arith.constant 0 : index
    %52 = vector.load %arg4[%c5, %c0_24, %c0_25] : memref<7x128x128xbf16, #tpu.memory_space<vmem>>, vector<1x128x128xbf16>
    %53 = vector.shape_cast %52 : vector<1x128x128xbf16> to vector<128x128xbf16>
    %cst_26 = arith.constant dense<0.000000e+00> : vector<128x128xf32>
    %54 = tpu.matmul %51, %53, %cst_26 {dimension_numbers = #tpu.dot_dimension_numbers<[1], [0], [0], [1], [0, 0, 1, 1], [], []>} : vector<128x128xbf16>, vector<128x128xbf16>, vector<128x128xf32> -> vector<128x128xf32>
    %55 = arith.addf %48, %54 : vector<128x128xf32>
    %56 = vector.extract_strided_slice %12 {offsets = [0, 0, 6, 0], sizes = [2, 8, 8, 128], strides = [1, 1, 1, 1]} : vector<2x8x14x128xf32> to vector<2x8x8x128xf32>
    %57 = vector.shape_cast %56 : vector<2x8x8x128xf32> to vector<128x128xf32>
    %58 = arith.truncf %57 : vector<128x128xf32> to vector<128x128xbf16>
    %c6 = arith.constant 6 : index
    %c0_27 = arith.constant 0 : index
    %c0_28 = arith.constant 0 : index
    %59 = vector.load %arg4[%c6, %c0_27, %c0_28] : memref<7x128x128xbf16, #tpu.memory_space<vmem>>, vector<1x128x128xbf16>
    %60 = vector.shape_cast %59 : vector<1x128x128xbf16> to vector<128x128xbf16>
    %cst_29 = arith.constant dense<0.000000e+00> : vector<128x128xf32>
    %61 = tpu.matmul %58, %60, %cst_29 {dimension_numbers = #tpu.dot_dimension_numbers<[1], [0], [0], [1], [0, 0, 1, 1], [], []>} : vector<128x128xbf16>, vector<128x128xbf16>, vector<128x128xf32> -> vector<128x128xf32>
    %62 = arith.addf %55, %61 : vector<128x128xf32>
    %c0_30 = arith.constant 0 : index
    %c0_31 = arith.constant 0 : index
    %63 = vector.load %arg5[%c0_30, %c0_31] : memref<1x128xf32, #tpu.memory_space<vmem>>, vector<1x128xf32>
    %64 = vector.broadcast %63 : vector<1x128xf32> to vector<128x128xf32>
    %65 = arith.addf %62, %64 : vector<128x128xf32>
    %cst_32 = arith.constant 0.000000e+00 : f32
    %66 = vector.broadcast %cst_32 : f32 to vector<128x128xf32>
    %67 = arith.maximumf %65, %66 : vector<128x128xf32>
    %68 = vector.shape_cast %67 : vector<128x128xf32> to vector<2x8x8x128xf32>
    %cst_33 = arith.constant 0.000000e+00 : f32
    %69 = vector.broadcast %cst_33 : f32 to vector<2x3x8x128xf32>
    %70 = tpu.concatenate %69, %68, %69 in 1 : vector<2x3x8x128xf32>, vector<2x8x8x128xf32>, vector<2x3x8x128xf32> -> vector<2x14x8x128xf32>
    %cst_34 = arith.constant 0.000000e+00 : f32
    %71 = vector.broadcast %cst_34 : f32 to vector<128x128xf32>
    %72 = vector.extract_strided_slice %70 {offsets = [0, 0, 0, 0], sizes = [2, 8, 8, 128], strides = [1, 1, 1, 1]} : vector<2x14x8x128xf32> to vector<2x8x8x128xf32>
    %73 = vector.shape_cast %72 : vector<2x8x8x128xf32> to vector<128x128xf32>
    %74 = arith.truncf %73 : vector<128x128xf32> to vector<128x128xbf16>
    %c0_35 = arith.constant 0 : index
    %c0_36 = arith.constant 0 : index
    %c0_37 = arith.constant 0 : index
    %75 = vector.load %arg6[%c0_35, %c0_36, %c0_37] : memref<7x128x128xbf16, #tpu.memory_space<vmem>>, vector<1x128x128xbf16>
    %76 = vector.shape_cast %75 : vector<1x128x128xbf16> to vector<128x128xbf16>
    %cst_38 = arith.constant dense<0.000000e+00> : vector<128x128xf32>
    %77 = tpu.matmul %74, %76, %cst_38 {dimension_numbers = #tpu.dot_dimension_numbers<[1], [0], [0], [1], [0, 0, 1, 1], [], []>} : vector<128x128xbf16>, vector<128x128xbf16>, vector<128x128xf32> -> vector<128x128xf32>
    %78 = arith.addf %71, %77 : vector<128x128xf32>
    %79 = vector.extract_strided_slice %70 {offsets = [0, 1, 0, 0], sizes = [2, 8, 8, 128], strides = [1, 1, 1, 1]} : vector<2x14x8x128xf32> to vector<2x8x8x128xf32>
    %80 = vector.shape_cast %79 : vector<2x8x8x128xf32> to vector<128x128xf32>
    %81 = arith.truncf %80 : vector<128x128xf32> to vector<128x128xbf16>
    %c1_39 = arith.constant 1 : index
    %c0_40 = arith.constant 0 : index
    %c0_41 = arith.constant 0 : index
    %82 = vector.load %arg6[%c1_39, %c0_40, %c0_41] : memref<7x128x128xbf16, #tpu.memory_space<vmem>>, vector<1x128x128xbf16>
    %83 = vector.shape_cast %82 : vector<1x128x128xbf16> to vector<128x128xbf16>
    %cst_42 = arith.constant dense<0.000000e+00> : vector<128x128xf32>
    %84 = tpu.matmul %81, %83, %cst_42 {dimension_numbers = #tpu.dot_dimension_numbers<[1], [0], [0], [1], [0, 0, 1, 1], [], []>} : vector<128x128xbf16>, vector<128x128xbf16>, vector<128x128xf32> -> vector<128x128xf32>
    %85 = arith.addf %78, %84 : vector<128x128xf32>
    %86 = vector.extract_strided_slice %70 {offsets = [0, 2, 0, 0], sizes = [2, 8, 8, 128], strides = [1, 1, 1, 1]} : vector<2x14x8x128xf32> to vector<2x8x8x128xf32>
    %87 = vector.shape_cast %86 : vector<2x8x8x128xf32> to vector<128x128xf32>
    %88 = arith.truncf %87 : vector<128x128xf32> to vector<128x128xbf16>
    %c2_43 = arith.constant 2 : index
    %c0_44 = arith.constant 0 : index
    %c0_45 = arith.constant 0 : index
    %89 = vector.load %arg6[%c2_43, %c0_44, %c0_45] : memref<7x128x128xbf16, #tpu.memory_space<vmem>>, vector<1x128x128xbf16>
    %90 = vector.shape_cast %89 : vector<1x128x128xbf16> to vector<128x128xbf16>
    %cst_46 = arith.constant dense<0.000000e+00> : vector<128x128xf32>
    %91 = tpu.matmul %88, %90, %cst_46 {dimension_numbers = #tpu.dot_dimension_numbers<[1], [0], [0], [1], [0, 0, 1, 1], [], []>} : vector<128x128xbf16>, vector<128x128xbf16>, vector<128x128xf32> -> vector<128x128xf32>
    %92 = arith.addf %85, %91 : vector<128x128xf32>
    %93 = vector.extract_strided_slice %70 {offsets = [0, 3, 0, 0], sizes = [2, 8, 8, 128], strides = [1, 1, 1, 1]} : vector<2x14x8x128xf32> to vector<2x8x8x128xf32>
    %94 = vector.shape_cast %93 : vector<2x8x8x128xf32> to vector<128x128xf32>
    %95 = arith.truncf %94 : vector<128x128xf32> to vector<128x128xbf16>
    %c3_47 = arith.constant 3 : index
    %c0_48 = arith.constant 0 : index
    %c0_49 = arith.constant 0 : index
    %96 = vector.load %arg6[%c3_47, %c0_48, %c0_49] : memref<7x128x128xbf16, #tpu.memory_space<vmem>>, vector<1x128x128xbf16>
    %97 = vector.shape_cast %96 : vector<1x128x128xbf16> to vector<128x128xbf16>
    %cst_50 = arith.constant dense<0.000000e+00> : vector<128x128xf32>
    %98 = tpu.matmul %95, %97, %cst_50 {dimension_numbers = #tpu.dot_dimension_numbers<[1], [0], [0], [1], [0, 0, 1, 1], [], []>} : vector<128x128xbf16>, vector<128x128xbf16>, vector<128x128xf32> -> vector<128x128xf32>
    %99 = arith.addf %92, %98 : vector<128x128xf32>
    %100 = vector.extract_strided_slice %70 {offsets = [0, 4, 0, 0], sizes = [2, 8, 8, 128], strides = [1, 1, 1, 1]} : vector<2x14x8x128xf32> to vector<2x8x8x128xf32>
    %101 = vector.shape_cast %100 : vector<2x8x8x128xf32> to vector<128x128xf32>
    %102 = arith.truncf %101 : vector<128x128xf32> to vector<128x128xbf16>
    %c4_51 = arith.constant 4 : index
    %c0_52 = arith.constant 0 : index
    %c0_53 = arith.constant 0 : index
    %103 = vector.load %arg6[%c4_51, %c0_52, %c0_53] : memref<7x128x128xbf16, #tpu.memory_space<vmem>>, vector<1x128x128xbf16>
    %104 = vector.shape_cast %103 : vector<1x128x128xbf16> to vector<128x128xbf16>
    %cst_54 = arith.constant dense<0.000000e+00> : vector<128x128xf32>
    %105 = tpu.matmul %102, %104, %cst_54 {dimension_numbers = #tpu.dot_dimension_numbers<[1], [0], [0], [1], [0, 0, 1, 1], [], []>} : vector<128x128xbf16>, vector<128x128xbf16>, vector<128x128xf32> -> vector<128x128xf32>
    %106 = arith.addf %99, %105 : vector<128x128xf32>
    %107 = vector.extract_strided_slice %70 {offsets = [0, 5, 0, 0], sizes = [2, 8, 8, 128], strides = [1, 1, 1, 1]} : vector<2x14x8x128xf32> to vector<2x8x8x128xf32>
    %108 = vector.shape_cast %107 : vector<2x8x8x128xf32> to vector<128x128xf32>
    %109 = arith.truncf %108 : vector<128x128xf32> to vector<128x128xbf16>
    %c5_55 = arith.constant 5 : index
    %c0_56 = arith.constant 0 : index
    %c0_57 = arith.constant 0 : index
    %110 = vector.load %arg6[%c5_55, %c0_56, %c0_57] : memref<7x128x128xbf16, #tpu.memory_space<vmem>>, vector<1x128x128xbf16>
    %111 = vector.shape_cast %110 : vector<1x128x128xbf16> to vector<128x128xbf16>
    %cst_58 = arith.constant dense<0.000000e+00> : vector<128x128xf32>
    %112 = tpu.matmul %109, %111, %cst_58 {dimension_numbers = #tpu.dot_dimension_numbers<[1], [0], [0], [1], [0, 0, 1, 1], [], []>} : vector<128x128xbf16>, vector<128x128xbf16>, vector<128x128xf32> -> vector<128x128xf32>
    %113 = arith.addf %106, %112 : vector<128x128xf32>
    %114 = vector.extract_strided_slice %70 {offsets = [0, 6, 0, 0], sizes = [2, 8, 8, 128], strides = [1, 1, 1, 1]} : vector<2x14x8x128xf32> to vector<2x8x8x128xf32>
    %115 = vector.shape_cast %114 : vector<2x8x8x128xf32> to vector<128x128xf32>
    %116 = arith.truncf %115 : vector<128x128xf32> to vector<128x128xbf16>
    %c6_59 = arith.constant 6 : index
    %c0_60 = arith.constant 0 : index
    %c0_61 = arith.constant 0 : index
    %117 = vector.load %arg6[%c6_59, %c0_60, %c0_61] : memref<7x128x128xbf16, #tpu.memory_space<vmem>>, vector<1x128x128xbf16>
    %118 = vector.shape_cast %117 : vector<1x128x128xbf16> to vector<128x128xbf16>
    %cst_62 = arith.constant dense<0.000000e+00> : vector<128x128xf32>
    %119 = tpu.matmul %116, %118, %cst_62 {dimension_numbers = #tpu.dot_dimension_numbers<[1], [0], [0], [1], [0, 0, 1, 1], [], []>} : vector<128x128xbf16>, vector<128x128xbf16>, vector<128x128xf32> -> vector<128x128xf32>
    %120 = arith.addf %113, %119 : vector<128x128xf32>
    %c0_63 = arith.constant 0 : index
    %c0_64 = arith.constant 0 : index
    %121 = vector.load %arg7[%c0_63, %c0_64] : memref<1x128xf32, #tpu.memory_space<vmem>>, vector<1x128xf32>
    %122 = vector.broadcast %121 : vector<1x128xf32> to vector<128x128xf32>
    %123 = arith.addf %120, %122 : vector<128x128xf32>
    %cst_65 = arith.constant 0.000000e+00 : f32
    %124 = vector.broadcast %cst_65 : f32 to vector<128x128xf32>
    %125 = arith.maximumf %123, %124 : vector<128x128xf32>
    %126 = arith.truncf %8 : vector<128x128xf32> to vector<128x128xbf16>
    %c0_66 = arith.constant 0 : index
    %c0_67 = arith.constant 0 : index
    %127 = vector.load %arg8[%c0_66, %c0_67] : memref<128x896xbf16, #tpu.memory_space<vmem>>, vector<128x896xbf16>
    %cst_68 = arith.constant dense<0.000000e+00> : vector<128x896xf32>
    %128 = tpu.matmul %126, %127, %cst_68 {dimension_numbers = #tpu.dot_dimension_numbers<[1], [0], [0], [1], [0, 0, 1, 1], [], []>} : vector<128x128xbf16>, vector<128x896xbf16>, vector<128x896xf32> -> vector<128x896xf32>
    %129 = arith.truncf %125 : vector<128x128xf32> to vector<128x128xbf16>
    %c0_69 = arith.constant 0 : index
    %c0_70 = arith.constant 0 : index
    %130 = vector.load %arg9[%c0_69, %c0_70] : memref<128x896xbf16, #tpu.memory_space<vmem>>, vector<128x896xbf16>
    %cst_71 = arith.constant dense<0.000000e+00> : vector<128x896xf32>
    %131 = tpu.matmul %129, %130, %cst_71 {dimension_numbers = #tpu.dot_dimension_numbers<[1], [0], [0], [1], [0, 0, 1, 1], [], []>} : vector<128x128xbf16>, vector<128x896xbf16>, vector<128x896xf32> -> vector<128x896xf32>
    %132 = arith.addf %128, %131 : vector<128x896xf32>
    %c0_72 = arith.constant 0 : index
    %c0_73 = arith.constant 0 : index
    %133 = vector.load %arg10[%c0_72, %c0_73] : memref<1x896xf32, #tpu.memory_space<vmem>>, vector<1x896xf32>
    %134 = vector.broadcast %133 : vector<1x896xf32> to vector<128x896xf32>
    %135 = arith.addf %132, %134 : vector<128x896xf32>
    %c0_74 = arith.constant 0 : index
    %c0_75 = arith.constant 0 : index
    %136 = vector.load %arg1[%c0_74, %c0_75] : memref<128x896xbf16, #tpu.memory_space<vmem>>, vector<128x896xbf16>
    %137 = arith.extf %136 : vector<128x896xbf16> to vector<128x896xf32>
    %138 = arith.addf %135, %137 : vector<128x896xf32>
    %cst_76 = arith.constant 0.000000e+00 : f32
    %139 = vector.broadcast %cst_76 : f32 to vector<128x896xf32>
    %140 = arith.maximumf %138, %139 : vector<128x896xf32>
    %141 = arith.truncf %140 : vector<128x896xf32> to vector<128x896xbf16>
    %c0_77 = arith.constant 0 : index
    %c0_78 = arith.constant 0 : index
    %142 = vector.load %arg11[%c0_77, %c0_78] : memref<128x896xbf16, #tpu.memory_space<vmem>>, vector<128x896xbf16>
    tpu.vector_store %arg11[%c0_77, %c0_78], %141 {strides = array<i32>} : memref<128x896xbf16, #tpu.memory_space<vmem>>, vector<128x896xbf16>,
    return
  }
  func.func @transform_0(%arg0: i32) -> (i32, i32) {
    %c0_i32 = arith.constant 0 : i32
    %c0_i32_0 = arith.constant 0 : i32
    return %arg0, %c0_i32 : i32, i32
  }
  func.func @transform_1(%arg0: i32) -> (i32, i32) {
    %c0_i32 = arith.constant 0 : i32
    %c0_i32_0 = arith.constant 0 : i32
    %c0_i32_1 = arith.constant 0 : i32
    return %c0_i32, %c0_i32_0 : i32, i32
  }
  func.func @transform_2(%arg0: i32) -> (i32, i32) {
    %c0_i32 = arith.constant 0 : i32
    %c0_i32_0 = arith.constant 0 : i32
    %c0_i32_1 = arith.constant 0 : i32
    return %c0_i32, %c0_i32_0 : i32, i32
  }
  func.func @transform_3(%arg0: i32) -> (i32, i32, i32) {
    %c0_i32 = arith.constant 0 : i32
    %c0_i32_0 = arith.constant 0 : i32
    %c0_i32_1 = arith.constant 0 : i32
    %c0_i32_2 = arith.constant 0 : i32
    return %c0_i32, %c0_i32_0, %c0_i32_1 : i32, i32, i32
  }
  func.func @transform_4(%arg0: i32) -> (i32, i32) {
    %c0_i32 = arith.constant 0 : i32
    %c0_i32_0 = arith.constant 0 : i32
    %c0_i32_1 = arith.constant 0 : i32
    return %c0_i32, %c0_i32_0 : i32, i32
  }
  func.func @transform_5(%arg0: i32) -> (i32, i32, i32) {
    %c0_i32 = arith.constant 0 : i32
    %c0_i32_0 = arith.constant 0 : i32
    %c0_i32_1 = arith.constant 0 : i32
    %c0_i32_2 = arith.constant 0 : i32
    return %c0_i32, %c0_i32_0, %c0_i32_1 : i32, i32, i32
  }
  func.func @transform_6(%arg0: i32) -> (i32, i32) {
    %c0_i32 = arith.constant 0 : i32
    %c0_i32_0 = arith.constant 0 : i32
    %c0_i32_1 = arith.constant 0 : i32
    return %c0_i32, %c0_i32_0 : i32, i32
  }
  func.func @transform_7(%arg0: i32) -> (i32, i32) {
    %c0_i32 = arith.constant 0 : i32
    %c0_i32_0 = arith.constant 0 : i32
    %c0_i32_1 = arith.constant 0 : i32
    return %c0_i32, %c0_i32_0 : i32, i32
  }
  func.func @transform_8(%arg0: i32) -> (i32, i32) {
    %c0_i32 = arith.constant 0 : i32
    %c0_i32_0 = arith.constant 0 : i32
    %c0_i32_1 = arith.constant 0 : i32
    return %c0_i32, %c0_i32_0 : i32, i32
  }
  func.func @transform_9(%arg0: i32) -> (i32, i32) {
    %c0_i32 = arith.constant 0 : i32
    %c0_i32_0 = arith.constant 0 : i32
    %c0_i32_1 = arith.constant 0 : i32
    return %c0_i32, %c0_i32_0 : i32, i32
  }
  func.func @transform_10(%arg0: i32) -> (i32, i32) {
    %c0_i32 = arith.constant 0 : i32
    %c0_i32_0 = arith.constant 0 : i32
    return %arg0, %c0_i32 : i32, i32
  }
}

</mosaic_0001>

<llo_original>
// kernel: tpu_custom_call.1
$region0: #{tpu_custom_call.1}
  #allocation0 [shape = 'u32[]', space=smem, size = 0x4, offset = 0x4, fixed_abs, tag = 'smem constant byte address 0x4 - core index']
  #allocation1 [shape = 'u32[72,128]{1,0:T(1,128)}', space=vmem, size = 0x9000, scoped, tag = 'internal scratch']
  %s0 = inlined_call_operand.hbm [shape: bf16[256,896], index: 0, kind: input, shape index: {}]
  %s1 = inlined_call_operand.hbm [shape: bf16[896,256], index: 1, kind: input, shape index: {}]
  %s2 = inlined_call_operand.hbm [shape: f32[1,256], index: 2, kind: input, shape index: {}]
  %s3 = inlined_call_operand.hbm [shape: bf16[7,128,128], index: 3, kind: input, shape index: {}]
  %s4 = inlined_call_operand.vmem [shape: f32[1,128], index: 4, kind: input, shape index: {}]
  %s5 = inlined_call_operand.hbm [shape: bf16[7,128,128], index: 5, kind: input, shape index: {}]
  %s6 = inlined_call_operand.hbm [shape: f32[1,128], index: 6, kind: input, shape index: {}]
  %s7 = inlined_call_operand.hbm [shape: bf16[128,896], index: 7, kind: input, shape index: {}]
  %s8 = inlined_call_operand.hbm [shape: bf16[128,896], index: 8, kind: input, shape index: {}]
  %s9 = inlined_call_operand.vmem [shape: f32[1,896], index: 9, kind: input, shape index: {}]
  %s10 = inlined_call_operand.hbm [shape: bf16[256,896], index: 10, kind: output, shape index: {}]
  %s11 = sld [smem:[#allocation0]]
  $region105: #{tpu_custom_call.1} parent=0
    _
  %s13 = ssub.s32 1, %s11
  %s14 = scalar_select 0, %s13, %s11
  $region1: #{tpu_custom_call.1} parent=0
    #allocation2 [shape = 'u8[458752]{0}', space=vmem, size = 0x70000, scoped, tag = 'input window, operand 0']
    #allocation3 [shape = 's32[2]{0}', space=sflag, size = 0x8, scoped, tag = 'scoped memory for tpu_custom_call.1']
    #allocation4 [shape = 's32[2]{0}', space=sflag, size = 0x8, scoped, tag = 'scoped memory for tpu_custom_call.1']
    #allocation5 [shape = 'u8[458752]{0}', space=vmem, size = 0x70000, scoped, tag = 'input window, operand 1, single buffered']
    #allocation6 [shape = 's32[1]{0}', space=sflag, size = 0x4, scoped, tag = 'scoped memory for tpu_custom_call.1']
    #allocation7 [shape = 'u8[1024]{0}', space=vmem, size = 0x400, scoped, tag = 'input window, operand 2, single buffered']
    #allocation8 [shape = 'u8[229376]{0}', space=vmem, size = 0x38000, scoped, tag = 'input window, operand 3, single buffered']
    #allocation9 [shape = 's32[1]{0}', space=sflag, size = 0x4, scoped, tag = 'scoped memory for tpu_custom_call.1']
    #allocation10 [shape = 'u8[229376]{0}', space=vmem, size = 0x38000, scoped, tag = 'input window, operand 5, single buffered']
    #allocation11 [shape = 'u8[512]{0}', space=vmem, size = 0x400, scoped, tag = 'input window, operand 6, single buffered']
    #allocation12 [shape = 's32[1]{0}', space=sflag, size = 0x4, scoped, tag = 'scoped memory for tpu_custom_call.1']
    #allocation13 [shape = 'u8[229376]{0}', space=vmem, size = 0x38000, scoped, tag = 'input window, operand 7, single buffered']
    #allocation14 [shape = 'u8[229376]{0}', space=vmem, size = 0x38000, scoped, tag = 'input window, operand 8, single buffered']
    #allocation15 [shape = 's32[1]{0}', space=sflag, size = 0x4, scoped, tag = 'scoped memory for tpu_custom_call.1']
    #allocation16 [shape = 'u8[458752]{0}', space=vmem, size = 0x70000, scoped, tag = 'output window, operand 0']
    %15 = vsyncpa [#allocation3], 0
    %s16 = scalar_lea.sflag [#allocation3], 1
    %17 = vsyncpa %s16, 0
    %18 = vsyncpa [#allocation6], 0
    %19 = vsyncpa [#allocation9], 0
    %20 = vsyncpa [#allocation12], 0
    %21 = vsyncpa [#allocation15], 0
    %22 = vsyncpa [#allocation4], 0
    %s23 = scalar_lea.sflag [#allocation4], 1
    %24 = vsyncpa %s23, 0
    loop: start=0, step=1, limit=4
    $region2: #{tpu_custom_call.1} parent=1 // loop_pre_header
      _
    $region3: #{tpu_custom_call.1} parent=1 // loop_header
      %s26 = sphi 0, %s30
      %p27 = scmp.ge.s32.totalorder %s26, 4
      %s36 = sphi 0, %s38
      %s39 = sphi 0, %s36
      %s40 = sphi 0, %s39
      %s56 = sphi 0, %s40
      %s60 = sphi 0, %s60
      %s62 = sphi 0, %s60
      %s63 = sphi 0, %s62
      %s77 = sphi 0, %s63
      %s81 = sphi 0, %s81
      %s83 = sphi 0, %s81
      %s84 = sphi 0, %s83
      %s98 = sphi 0, %s84
      %s102 = sphi 0, %s102
      %s104 = sphi 0, %s102
      %s105 = sphi 0, %s104
      %s119 = sphi 0, %s105
      %s123 = sphi 0, %s123
      %s125 = sphi 0, %s123
      %s126 = sphi 0, %s125
      %s140 = sphi 0, %s126
      %s144 = sphi 0, %s144
      %s146 = sphi 0, %s144
      %s147 = sphi 0, %s146
      %s161 = sphi 0, %s147
      %s165 = sphi 0, %s165
      %s167 = sphi 0, %s165
      %s168 = sphi 0, %s167
      %s182 = sphi 0, %s168
      %s186 = sphi 0, %s186
      %s188 = sphi 0, %s186
      %s189 = sphi 0, %s188
      %s203 = sphi 0, %s189
      %s207 = sphi 0, %s207
      %s209 = sphi 0, %s207
      %s210 = sphi 0, %s209
      %s224 = sphi 0, %s210
      %s228 = sphi 0, %s228
      %s230 = sphi 0, %s228
      %s231 = sphi 0, %s230
      %s245 = sphi 0, %s231
      %s251 = sphi 0, %s253
      %s254 = sphi 0, %s251
      %s255 = sphi 0, %s254
      %s271 = sphi 0, %s255
    $region4: #{tpu_custom_call.1} parent=1 // loop_header_branch
      %29 = sbr.rel (%p27) target = $region8
    $region5: #{tpu_custom_call.1} parent=1 // loop_body
      %s31 = ssub.s32 %s26, 1
      %s32 = ssub.s32 %s26, 2
      %s33 = sadd.s32 %s26, 1
      %s34 = ssub.s32 %s26, %s33
      %p35 = scmp.eq.s32.totalorder %s34, 0
      %s37 = sadd.s32 %s36, 1
      %s38 = scalar_select %p35, %s36, %s37
      %p41 = pneg %p35
      %p42 = scmp.eq.s32.totalorder %s26, 1
      %p43 = por %p41, %p42
      %p44 = scmp.ne.s32.totalorder %s36, %s39
      %p45 = scmp.eq.s32.totalorder %s26, 0
      %p46 = por %p44, %p45
      %p47 = scmp.ne.s32.totalorder %s36, %s39
      %p48 = scmp.eq.s32.totalorder %s31, 1
      %p49 = por %p47, %p48
      %p50 = scmp.ne.s32.totalorder %s39, %s40
      %p51 = scmp.eq.s32.totalorder %s31, 0
      %p52 = por %p50, %p51
      %p53 = scmp.ne.s32.totalorder %s39, %s40
      %p54 = scmp.eq.s32.totalorder %s32, 1
      %p55 = por %p53, %p54
      %p57 = scmp.ne.s32.totalorder %s40, %s56
      %p58 = scmp.eq.s32.totalorder %s32, 0
      %p59 = por %p57, %p58
      %s61 = sadd.s32 %s60, 1
      %p64 = scmp.eq.s32.totalorder %s26, 1
      %p65 = scmp.ne.s32.totalorder %s60, %s62
      %p66 = scmp.eq.s32.totalorder %s26, 0
      %p67 = por %p65, %p66
      %p68 = scmp.ne.s32.totalorder %s60, %s62
      %p69 = scmp.eq.s32.totalorder %s31, 1
      %p70 = por %p68, %p69
      %p71 = scmp.ne.s32.totalorder %s62, %s63
      %p72 = scmp.eq.s32.totalorder %s31, 0
      %p73 = por %p71, %p72
      %p74 = scmp.ne.s32.totalorder %s62, %s63
      %p75 = scmp.eq.s32.totalorder %s32, 1
      %p76 = por %p74, %p75
      %p78 = scmp.ne.s32.totalorder %s63, %s77
      %p79 = scmp.eq.s32.totalorder %s32, 0
      %p80 = por %p78, %p79
      %s82 = sadd.s32 %s81, 1
      %p85 = scmp.eq.s32.totalorder %s26, 1
      %p86 = scmp.ne.s32.totalorder %s81, %s83
      %p87 = scmp.eq.s32.totalorder %s26, 0
      %p88 = por %p86, %p87
      %p89 = scmp.ne.s32.totalorder %s81, %s83
      %p90 = scmp.eq.s32.totalorder %s31, 1
      %p91 = por %p89, %p90
      %p92 = scmp.ne.s32.totalorder %s83, %s84
      %p93 = scmp.eq.s32.totalorder %s31, 0
      %p94 = por %p92, %p93
      %p95 = scmp.ne.s32.totalorder %s83, %s84
      %p96 = scmp.eq.s32.totalorder %s32, 1
      %p97 = por %p95, %p96
      %p99 = scmp.ne.s32.totalorder %s84, %s98
      %p100 = scmp.eq.s32.totalorder %s32, 0
      %p101 = por %p99, %p100
      %s103 = sadd.s32 %s102, 1
      %p106 = scmp.eq.s32.totalorder %s26, 1
      %p107 = scmp.ne.s32.totalorder %s102, %s104
      %p108 = scmp.eq.s32.totalorder %s26, 0
      %p109 = por %p107, %p108
      %p110 = scmp.ne.s32.totalorder %s102, %s104
      %p111 = scmp.eq.s32.totalorder %s31, 1
      %p112 = por %p110, %p111
      %p113 = scmp.ne.s32.totalorder %s104, %s105
      %p114 = scmp.eq.s32.totalorder %s31, 0
      %p115 = por %p113, %p114
      %p116 = scmp.ne.s32.totalorder %s104, %s105
      %p117 = scmp.eq.s32.totalorder %s32, 1
      %p118 = por %p116, %p117
      %p120 = scmp.ne.s32.totalorder %s105, %s119
      %p121 = scmp.eq.s32.totalorder %s32, 0
      %p122 = por %p120, %p121
      %s124 = sadd.s32 %s123, 1
      %p127 = scmp.eq.s32.totalorder %s26, 1
      %p128 = scmp.ne.s32.totalorder %s123, %s125
      %p129 = scmp.eq.s32.totalorder %s26, 0
      %p130 = por %p128, %p129
      %p131 = scmp.ne.s32.totalorder %s123, %s125
      %p132 = scmp.eq.s32.totalorder %s31, 1
      %p133 = por %p131, %p132
      %p134 = scmp.ne.s32.totalorder %s125, %s126
      %p135 = scmp.eq.s32.totalorder %s31, 0
      %p136 = por %p134, %p135
      %p137 = scmp.ne.s32.totalorder %s125, %s126
      %p138 = scmp.eq.s32.totalorder %s32, 1
      %p139 = por %p137, %p138
      %p141 = scmp.ne.s32.totalorder %s126, %s140
      %p142 = scmp.eq.s32.totalorder %s32, 0
      %p143 = por %p141, %p142
      %s145 = sadd.s32 %s144, 1
      %p148 = scmp.eq.s32.totalorder %s26, 1
      %p149 = scmp.ne.s32.totalorder %s144, %s146
      %p150 = scmp.eq.s32.totalorder %s26, 0
      %p151 = por %p149, %p150
      %p152 = scmp.ne.s32.totalorder %s144, %s146
      %p153 = scmp.eq.s32.totalorder %s31, 1
      %p154 = por %p152, %p153
      %p155 = scmp.ne.s32.totalorder %s146, %s147
      %p156 = scmp.eq.s32.totalorder %s31, 0
      %p157 = por %p155, %p156
      %p158 = scmp.ne.s32.totalorder %s146, %s147
      %p159 = scmp.eq.s32.totalorder %s32, 1
      %p160 = por %p158, %p159
      %p162 = scmp.ne.s32.totalorder %s147, %s161
      %p163 = scmp.eq.s32.totalorder %s32, 0
      %p164 = por %p162, %p163
      %s166 = sadd.s32 %s165, 1
      %p169 = scmp.eq.s32.totalorder %s26, 1
      %p170 = scmp.ne.s32.totalorder %s165, %s167
      %p171 = scmp.eq.s32.totalorder %s26, 0
      %p172 = por %p170, %p171
      %p173 = scmp.ne.s32.totalorder %s165, %s167
      %p174 = scmp.eq.s32.totalorder %s31, 1
      %p175 = por %p173, %p174
      %p176 = scmp.ne.s32.totalorder %s167, %s168
      %p177 = scmp.eq.s32.totalorder %s31, 0
      %p178 = por %p176, %p177
      %p179 = scmp.ne.s32.totalorder %s167, %s168
      %p180 = scmp.eq.s32.totalorder %s32, 1
      %p181 = por %p179, %p180
      %p183 = scmp.ne.s32.totalorder %s168, %s182
      %p184 = scmp.eq.s32.totalorder %s32, 0
      %p185 = por %p183, %p184
      %s187 = sadd.s32 %s186, 1
      %p190 = scmp.eq.s32.totalorder %s26, 1
      %p191 = scmp.ne.s32.totalorder %s186, %s188
      %p192 = scmp.eq.s32.totalorder %s26, 0
      %p193 = por %p191, %p192
      %p194 = scmp.ne.s32.totalorder %s186, %s188
      %p195 = scmp.eq.s32.totalorder %s31, 1
      %p196 = por %p194, %p195
      %p197 = scmp.ne.s32.totalorder %s188, %s189
      %p198 = scmp.eq.s32.totalorder %s31, 0
      %p199 = por %p197, %p198
      %p200 = scmp.ne.s32.totalorder %s188, %s189
      %p201 = scmp.eq.s32.totalorder %s32, 1
      %p202 = por %p200, %p201
      %p204 = scmp.ne.s32.totalorder %s189, %s203
      %p205 = scmp.eq.s32.totalorder %s32, 0
      %p206 = por %p204, %p205
      %s208 = sadd.s32 %s207, 1
      %p211 = scmp.eq.s32.totalorder %s26, 1
      %p212 = scmp.ne.s32.totalorder %s207, %s209
      %p213 = scmp.eq.s32.totalorder %s26, 0
      %p214 = por %p212, %p213
      %p215 = scmp.ne.s32.totalorder %s207, %s209
      %p216 = scmp.eq.s32.totalorder %s31, 1
      %p217 = por %p215, %p216
      %p218 = scmp.ne.s32.totalorder %s209, %s210
      %p219 = scmp.eq.s32.totalorder %s31, 0
      %p220 = por %p218, %p219
      %p221 = scmp.ne.s32.totalorder %s209, %s210
      %p222 = scmp.eq.s32.totalorder %s32, 1
      %p223 = por %p221, %p222
      %p225 = scmp.ne.s32.totalorder %s210, %s224
      %p226 = scmp.eq.s32.totalorder %s32, 0
      %p227 = por %p225, %p226
      %s229 = sadd.s32 %s228, 1
      %p232 = scmp.eq.s32.totalorder %s26, 1
      %p233 = scmp.ne.s32.totalorder %s228, %s230
      %p234 = scmp.eq.s32.totalorder %s26, 0
      %p235 = por %p233, %p234
      %p236 = scmp.ne.s32.totalorder %s228, %s230
      %p237 = scmp.eq.s32.totalorder %s31, 1
      %p238 = por %p236, %p237
      %p239 = scmp.ne.s32.totalorder %s230, %s231
      %p240 = scmp.eq.s32.totalorder %s31, 0
      %p241 = por %p239, %p240
      %p242 = scmp.ne.s32.totalorder %s230, %s231
      %p243 = scmp.eq.s32.totalorder %s32, 1
      %p244 = por %p242, %p243
      %p246 = scmp.ne.s32.totalorder %s231, %s245
      %p247 = scmp.eq.s32.totalorder %s32, 0
      %p248 = por %p246, %p247
      %s249 = ssub.s32 %s26, %s33
      %p250 = scmp.eq.s32.totalorder %s249, 0
      %s252 = sadd.s32 %s251, 1
      %s253 = scalar_select %p250, %s251, %s252
      %p256 = pneg %p250
      %p257 = scmp.eq.s32.totalorder %s26, 1
      %p258 = por %p256, %p257
      %p259 = scmp.ne.s32.totalorder %s251, %s254
      %p260 = scmp.eq.s32.totalorder %s26, 0
      %p261 = por %p259, %p260
      %p262 = scmp.ne.s32.totalorder %s251, %s254
      %p263 = scmp.eq.s32.totalorder %s31, 1
      %p264 = por %p262, %p263
      %p265 = scmp.ne.s32.totalorder %s254, %s255
      %p266 = scmp.eq.s32.totalorder %s31, 0
      %p267 = por %p265, %p266
      %p268 = scmp.ne.s32.totalorder %s254, %s255
      %p269 = scmp.eq.s32.totalorder %s32, 1
      %p270 = por %p268, %p269
      %p272 = scmp.ne.s32.totalorder %s255, %s271
      %p273 = scmp.eq.s32.totalorder %s32, 0
      %p274 = por %p272, %p273
      %p275 = scmp.le.s32.totalorder 1, %s26
      %p276 = scmp.lt.s32.totalorder %s26, 3
      %p277 = pnand %p275, %p276
      %p278 = pneg %p277
      // Predicated region
      $region9: #{tpu_custom_call.1} parent=5 // pred_check
        _
      $region10: #{tpu_custom_call.1} parent=5 // pred_check_branch
        %280 = sbr.rel (%p277) target = $region12
      $region11: #{tpu_custom_call.1} parent=5 // pred_region
        %s281 = ssub.s32 %s26, 1
        // Predicated region
        $region13: #{tpu_custom_call.1} parent=11 // pred_check
          %p282 = pneg %p73
        $region14: #{tpu_custom_call.1} parent=11 // pred_check_branch
          %284 = sbr.rel (%p282) target = $region16
        $region15: #{tpu_custom_call.1} parent=11 // pred_region
          %286 = vsyncadd [#allocation6], 0
          %s287 = sshll.u32 %s1, 4
          %s288 = int_to_ptr.hbm [resolvable:$true] %s287
          %s289 = sshll.u32 [#allocation5], 4
          %s290 = int_to_ptr.vmem [resolvable:$true] %s289
          %295 = dma.hbm_to_vmem [thread:$0]  %s288, 14336, %s290, [#allocation6], 128, 128, 8
        $region16: #{tpu_custom_call.1} parent=11 // pred_fallthru
          _
        // Predicated region
        $region17: #{tpu_custom_call.1} parent=11 // pred_check
          %p296 = pneg %p94
        $region18: #{tpu_custom_call.1} parent=11 // pred_check_branch
          %298 = sbr.rel (%p296) target = $region20
        $region19: #{tpu_custom_call.1} parent=11 // pred_region
          %300 = vsyncadd [#allocation6], 0
          %s302 = sshll.u32 %s2, 4
          %s303 = int_to_ptr.hbm [resolvable:$true] %s302
          %s304 = sshll.u32 [#allocation7], 4
          %s305 = int_to_ptr.vmem [resolvable:$true] %s304
          %307 = dma.hbm_to_vmem [thread:$0]  %s303, 32, %s305, [#allocation6]
        $region20: #{tpu_custom_call.1} parent=11 // pred_fallthru
          _
        // Predicated region
        $region21: #{tpu_custom_call.1} parent=11 // pred_check
          %p308 = pneg %p115
        $region22: #{tpu_custom_call.1} parent=11 // pred_check_branch
          %310 = sbr.rel (%p308) target = $region24
        $region23: #{tpu_custom_call.1} parent=11 // pred_region
          %312 = vsyncadd [#allocation9], 0
          %s313 = sshll.u32 %s3, 4
          %s314 = int_to_ptr.hbm [resolvable:$true] %s313
          %s315 = sshll.u32 [#allocation8], 4
          %s316 = int_to_ptr.vmem [resolvable:$true] %s315
          %321 = dma.hbm_to_vmem [thread:$0]  %s314, 7168, %s316, [#allocation9], 64, 64, 4
        $region24: #{tpu_custom_call.1} parent=11 // pred_fallthru
          _
        // Predicated region
        $region25: #{tpu_custom_call.1} parent=11 // pred_check
          %p322 = pneg %p136
        $region26: #{tpu_custom_call.1} parent=11 // pred_check_branch
          %324 = sbr.rel (%p322) target = $region28
        $region27: #{tpu_custom_call.1} parent=11 // pred_region
          _
        $region28: #{tpu_custom_call.1} parent=11 // pred_fallthru
          _
        // Predicated region
        $region29: #{tpu_custom_call.1} parent=11 // pred_check
          %p325 = pneg %p157
        $region30: #{tpu_custom_call.1} parent=11 // pred_check_branch
          %327 = sbr.rel (%p325) target = $region32
        $region31: #{tpu_custom_call.1} parent=11 // pred_region
          %329 = vsyncadd [#allocation9], 0
          %s330 = sshll.u32 %s5, 4
          %s331 = int_to_ptr.hbm [resolvable:$true] %s330
          %s332 = sshll.u32 [#allocation10], 4
          %s333 = int_to_ptr.vmem [resolvable:$true] %s332
          %338 = dma.hbm_to_vmem [thread:$0]  %s331, 7168, %s333, [#allocation9], 64, 64, 4
        $region32: #{tpu_custom_call.1} parent=11 // pred_fallthru
          _
        // Predicated region
        $region33: #{tpu_custom_call.1} parent=11 // pred_check
          %p339 = pneg %p178
        $region34: #{tpu_custom_call.1} parent=11 // pred_check_branch
          %341 = sbr.rel (%p339) target = $region36
        $region35: #{tpu_custom_call.1} parent=11 // pred_region
          %343 = vsyncadd [#allocation12], 0
          %s345 = sshll.u32 %s6, 4
          %s346 = int_to_ptr.hbm [resolvable:$true] %s345
          %s347 = sshll.u32 [#allocation11], 4
          %s348 = int_to_ptr.vmem [resolvable:$true] %s347
          %350 = dma.hbm_to_vmem [thread:$0]  %s346, 16, %s348, [#allocation12]
        $region36: #{tpu_custom_call.1} parent=11 // pred_fallthru
          _
        // Predicated region
        $region37: #{tpu_custom_call.1} parent=11 // pred_check
          %p351 = pneg %p199
        $region38: #{tpu_custom_call.1} parent=11 // pred_check_branch
          %353 = sbr.rel (%p351) target = $region40
        $region39: #{tpu_custom_call.1} parent=11 // pred_region
          %355 = vsyncadd [#allocation12], 0
          %s356 = sshll.u32 %s7, 4
          %s357 = int_to_ptr.hbm [resolvable:$true] %s356
          %s358 = sshll.u32 [#allocation13], 4
          %s359 = int_to_ptr.vmem [resolvable:$true] %s358
          %364 = dma.hbm_to_vmem [thread:$0]  %s357, 7168, %s359, [#allocation12], 448, 448, 28
        $region40: #{tpu_custom_call.1} parent=11 // pred_fallthru
          _
        // Predicated region
        $region41: #{tpu_custom_call.1} parent=11 // pred_check
          %p365 = pneg %p220
        $region42: #{tpu_custom_call.1} parent=11 // pred_check_branch
          %367 = sbr.rel (%p365) target = $region44
        $region43: #{tpu_custom_call.1} parent=11 // pred_region
          %369 = vsyncadd [#allocation15], 0
          %s370 = sshll.u32 %s8, 4
          %s371 = int_to_ptr.hbm [resolvable:$true] %s370
          %s372 = sshll.u32 [#allocation14], 4
          %s373 = int_to_ptr.vmem [resolvable:$true] %s372
          %378 = dma.hbm_to_vmem [thread:$0]  %s371, 7168, %s373, [#allocation15], 448, 448, 28
        $region44: #{tpu_custom_call.1} parent=11 // pred_fallthru
          _
        // Predicated region
        $region45: #{tpu_custom_call.1} parent=11 // pred_check
          %p379 = pneg %p241
        $region46: #{tpu_custom_call.1} parent=11 // pred_check_branch
          %381 = sbr.rel (%p379) target = $region48
        $region47: #{tpu_custom_call.1} parent=11 // pred_region
          _
        $region48: #{tpu_custom_call.1} parent=11 // pred_fallthru
          _
      $region12: #{tpu_custom_call.1} parent=5 // pred_fallthru
        _
      %p382 = scmp.lt.s32.totalorder %s26, 2
      // Predicated region
      $region49: #{tpu_custom_call.1} parent=5 // pred_check
        %p383 = pneg %p382
      $region50: #{tpu_custom_call.1} parent=5 // pred_check_branch
        %385 = sbr.rel (%p383) target = $region52
      $region51: #{tpu_custom_call.1} parent=5 // pred_region
        // Predicated region
        $region53: #{tpu_custom_call.1} parent=51 // pred_check
          %p386 = pneg %p46
        $region54: #{tpu_custom_call.1} parent=51 // pred_check_branch
          %388 = sbr.rel (%p386) target = $region56
        $region55: #{tpu_custom_call.1} parent=51 // pred_region
          %s389 = sand.u32 %s36, 1
          %s390 = scalar_lea.sflag [#allocation3], %s389
          %s391 = sand.u32 %s36, 1
          %s392 = smul.addr %s391, 448
          %s393 = scalar_lea.vmem [#allocation2], %s392
          %s394 = smul.u32 16, %s26
          %396 = vsyncadd %s390, 0
          %s397 = smul.addr %s394, 7
          %s398 = smul.addr %s397, 4
          %s399 = scalar_lea.hbm %s0, %s398
          %s400 = sshll.u32 %s399, 4
          %s401 = int_to_ptr.hbm [resolvable:$true] %s400
          %s402 = sshll.u32 %s393, 4
          %s403 = int_to_ptr.vmem [resolvable:$true] %s402
          %408 = dma.hbm_to_vmem [thread:$0]  %s401, 7168, %s403, %s390, 448, 448, 28
        $region56: #{tpu_custom_call.1} parent=51 // pred_fallthru
          _
      $region52: #{tpu_custom_call.1} parent=5 // pred_fallthru
        _
      %p409 = scmp.le.s32.totalorder 1, %s26
      %p410 = scmp.lt.s32.totalorder %s26, 3
      %p411 = pnand %p409, %p410
      %p412 = pneg %p411
      // Predicated region
      $region57: #{tpu_custom_call.1} parent=5 // pred_check
        _
      $region58: #{tpu_custom_call.1} parent=5 // pred_check_branch
        %414 = sbr.rel (%p411) target = $region60
      $region59: #{tpu_custom_call.1} parent=5 // pred_region
        %s415 = ssub.s32 %s26, 1
        %s416 = sand.u32 %s39, 1
        %s417 = scalar_lea.sflag [#allocation3], %s416
        %s418 = sand.u32 %s39, 1
        %s419 = smul.addr %s418, 448
        %s420 = scalar_lea.vmem [#allocation2], %s419
        // Predicated region
        $region61: #{tpu_custom_call.1} parent=59 // pred_check
          %p421 = pneg %p52
        $region62: #{tpu_custom_call.1} parent=59 // pred_check_branch
          %423 = sbr.rel (%p421) target = $region64
        $region63: #{tpu_custom_call.1} parent=59 // pred_region
          %425 = dma.done %s417, 7168
        $region64: #{tpu_custom_call.1} parent=59 // pred_fallthru
          _
        // Predicated region
        $region65: #{tpu_custom_call.1} parent=59 // pred_check
          %p426 = pneg %p73
        $region66: #{tpu_custom_call.1} parent=59 // pred_check_branch
          %428 = sbr.rel (%p426) target = $region68
        $region67: #{tpu_custom_call.1} parent=59 // pred_region
          %430 = dma.done [#allocation6], 14336
        $region68: #{tpu_custom_call.1} parent=59 // pred_fallthru
          _
        // Predicated region
        $region69: #{tpu_custom_call.1} parent=59 // pred_check
          %p431 = pneg %p94
        $region70: #{tpu_custom_call.1} parent=59 // pred_check_branch
          %433 = sbr.rel (%p431) target = $region72
        $region71: #{tpu_custom_call.1} parent=59 // pred_region
          %435 = dma.done [#allocation6], 32
        $region72: #{tpu_custom_call.1} parent=59 // pred_fallthru
          _
        // Predicated region
        $region73: #{tpu_custom_call.1} parent=59 // pred_check
          %p436 = pneg %p115
        $region74: #{tpu_custom_call.1} parent=59 // pred_check_branch
          %438 = sbr.rel (%p436) target = $region76
        $region75: #{tpu_custom_call.1} parent=59 // pred_region
          %440 = dma.done [#allocation9], 7168
        $region76: #{tpu_custom_call.1} parent=59 // pred_fallthru
          _
        // Predicated region
        $region77: #{tpu_custom_call.1} parent=59 // pred_check
          %p441 = pneg %p157
        $region78: #{tpu_custom_call.1} parent=59 // pred_check_branch
          %443 = sbr.rel (%p441) target = $region80
        $region79: #{tpu_custom_call.1} parent=59 // pred_region
          %445 = dma.done [#allocation9], 7168
        $region80: #{tpu_custom_call.1} parent=59 // pred_fallthru
          _
        // Predicated region
        $region81: #{tpu_custom_call.1} parent=59 // pred_check
          %p446 = pneg %p178
        $region82: #{tpu_custom_call.1} parent=59 // pred_check_branch
          %448 = sbr.rel (%p446) target = $region84
        $region83: #{tpu_custom_call.1} parent=59 // pred_region
          %450 = dma.done [#allocation12], 16
        $region84: #{tpu_custom_call.1} parent=59 // pred_fallthru
          _
        // Predicated region
        $region85: #{tpu_custom_call.1} parent=59 // pred_check
          %p451 = pneg %p199
        $region86: #{tpu_custom_call.1} parent=59 // pred_check_branch
          %453 = sbr.rel (%p451) target = $region88
        $region87: #{tpu_custom_call.1} parent=59 // pred_region
          %455 = dma.done [#allocation12], 7168
        $region88: #{tpu_custom_call.1} parent=59 // pred_fallthru
          _
        // Predicated region
        $region89: #{tpu_custom_call.1} parent=59 // pred_check
          %p456 = pneg %p220
        $region90: #{tpu_custom_call.1} parent=59 // pred_check_branch
          %458 = sbr.rel (%p456) target = $region92
        $region91: #{tpu_custom_call.1} parent=59 // pred_region
          %460 = dma.done [#allocation15], 7168
        $region92: #{tpu_custom_call.1} parent=59 // pred_fallthru
          _
        %s461 = sand.u32 %s39, 1
        %s462 = scalar_lea.sflag [#allocation3], %s461
        %s463 = sand.u32 %s39, 1
        %s464 = smul.addr %s463, 448
        %s465 = scalar_lea.vmem [#allocation2], %s464
        %p466 = pneg %p52
        %p467 = pneg %p49
        %p468 = pneg %p73
        %p469 = pneg %p70
        %p470 = pneg %p94
        %p471 = pneg %p91
        %p472 = pneg %p115
        %p473 = pneg %p112
        %p474 = pneg %p136
        %p475 = pneg %p133
        %p476 = pneg %p157
        %p477 = pneg %p154
        %p478 = pneg %p178
        %p479 = pneg %p175
        %p480 = pneg %p199
        %p481 = pneg %p196
        %p482 = pneg %p220
        %p483 = pneg %p217
        %p484 = pneg %p241
        %p485 = pneg %p238
        %p486 = pneg %p267
        %p487 = pneg %p264
        %s488 = sand.u32 %s254, 1
        %s489 = scalar_lea.sflag [#allocation4], %s488
        %s490 = sand.u32 %s254, 1
        %s491 = smul.addr %s490, 448
        %s492 = scalar_lea.vmem [#allocation16], %s491
        %s493 = smul.u32 16, %s31
        %s494 = smul.u32 16, %s31
        %v495 = vld [vmem:[%s420] sm:$0xff]
        %v496 = vld [vmem:[%s420 + $0x8] sm:$0xff]
        %v497 = vld [vmem:[%s420 + $0x10] sm:$0xff]
        %v498 = vld [vmem:[%s420 + $0x18] sm:$0xf]
        %v499 = vld [vmem:[%s420 + $0x1c] sm:$0xff]
        %v500 = vld [vmem:[%s420 + $0x24] sm:$0xff]
        %v501 = vld [vmem:[%s420 + $0x2c] sm:$0xff]
        %v502 = vld [vmem:[%s420 + $0x34] sm:$0xf]
        %v503 = vld [vmem:[%s420 + $0x38] sm:$0xff]
        %v504 = vld [vmem:[%s420 + $0x40] sm:$0xff]
        %v505 = vld [vmem:[%s420 + $0x48] sm:$0xff]
        %v506 = vld [vmem:[%s420 + $0x50] sm:$0xf]
        %v507 = vld [vmem:[%s420 + $0x54] sm:$0xff]
        %v508 = vld [vmem:[%s420 + $0x5c] sm:$0xff]
        %v509 = vld [vmem:[%s420 + $0x64] sm:$0xff]
        %v510 = vld [vmem:[%s420 + $0x6c] sm:$0xf]
        %v511 = vld [vmem:[%s420 + $0x70] sm:$0xff]
        %v512 = vld [vmem:[%s420 + $0x78] sm:$0xff]
        %v513 = vld [vmem:[%s420 + $0x80] sm:$0xff]
        %v514 = vld [vmem:[%s420 + $0x88] sm:$0xf]
        %v515 = vld [vmem:[%s420 + $0x8c] sm:$0xff]
        %v516 = vld [vmem:[%s420 + $0x94] sm:$0xff]
        %v517 = vld [vmem:[%s420 + $0x9c] sm:$0xff]
        %v518 = vld [vmem:[%s420 + $0xa4] sm:$0xf]
        %v519 = vld [vmem:[%s420 + $0xa8] sm:$0xff]
        %v520 = vld [vmem:[%s420 + $0xb0] sm:$0xff]
        %v521 = vld [vmem:[%s420 + $0xb8] sm:$0xff]
        %v522 = vld [vmem:[%s420 + $0xc0] sm:$0xf]
        %v523 = vld [vmem:[%s420 + $0xc4] sm:$0xff]
        %v524 = vld [vmem:[%s420 + $0xcc] sm:$0xff]
        %v525 = vld [vmem:[%s420 + $0xd4] sm:$0xff]
        %v526 = vld [vmem:[%s420 + $0xdc] sm:$0xf]
        %v527 = vld [vmem:[%s420 + $0xe0] sm:$0xff]
        %v528 = vld [vmem:[%s420 + $0xe8] sm:$0xff]
        %v529 = vld [vmem:[%s420 + $0xf0] sm:$0xff]
        %v530 = vld [vmem:[%s420 + $0xf8] sm:$0xf]
        %v531 = vld [vmem:[%s420 + $0xfc] sm:$0xff]
        %v532 = vld [vmem:[%s420 + $0x104] sm:$0xff]
        %v533 = vld [vmem:[%s420 + $0x10c] sm:$0xff]
        %v534 = vld [vmem:[%s420 + $0x114] sm:$0xf]
        %v535 = vld [vmem:[%s420 + $0x118] sm:$0xff]
        %v536 = vld [vmem:[%s420 + $0x120] sm:$0xff]
        %v537 = vld [vmem:[%s420 + $0x128] sm:$0xff]
        %v538 = vld [vmem:[%s420 + $0x130] sm:$0xf]
        %v539 = vld [vmem:[%s420 + $0x134] sm:$0xff]
        %v540 = vld [vmem:[%s420 + $0x13c] sm:$0xff]
        %v541 = vld [vmem:[%s420 + $0x144] sm:$0xff]
        %v542 = vld [vmem:[%s420 + $0x14c] sm:$0xf]
        %v543 = vld [vmem:[%s420 + $0x150] sm:$0xff]
        %v544 = vld [vmem:[%s420 + $0x158] sm:$0xff]
        %v545 = vld [vmem:[%s420 + $0x160] sm:$0xff]
        %v546 = vld [vmem:[%s420 + $0x168] sm:$0xf]
        %v547 = vld [vmem:[%s420 + $0x16c] sm:$0xff]
        %v548 = vld [vmem:[%s420 + $0x174] sm:$0xff]
        %v549 = vld [vmem:[%s420 + $0x17c] sm:$0xff]
        %v550 = vld [vmem:[%s420 + $0x184] sm:$0xf]
        %v551 = vld [vmem:[%s420 + $0x188] sm:$0xff]
        %v552 = vld [vmem:[%s420 + $0x190] sm:$0xff]
        %v553 = vld [vmem:[%s420 + $0x198] sm:$0xff]
        %v554 = vld [vmem:[%s420 + $0x1a0] sm:$0xf]
        %v555 = vld [vmem:[%s420 + $0x1a4] sm:$0xff]
        %v556 = vld [vmem:[%s420 + $0x1ac] sm:$0xff]
        %v557 = vld [vmem:[%s420 + $0x1b4] sm:$0xff]
        %v558 = vld [vmem:[%s420 + $0x1bc] sm:$0xf]
        %v559 = vld [vmem:[#allocation5] sm:$0xff]
        %v560 = vld [vmem:[#allocation5 + $0x8] sm:$0xff]
        %v561 = vld [vmem:[#allocation5 + $0x10] sm:$0xff]
        %v562 = vld [vmem:[#allocation5 + $0x18] sm:$0xff]
        %v563 = vld [vmem:[#allocation5 + $0x20] sm:$0xff]
        %v564 = vld [vmem:[#allocation5 + $0x28] sm:$0xff]
        %v565 = vld [vmem:[#allocation5 + $0x30] sm:$0xff]
        %v566 = vld [vmem:[#allocation5 + $0x38] sm:$0xff]
        %v567 = vld [vmem:[#allocation5 + $0x40] sm:$0xff]
        %v568 = vld [vmem:[#allocation5 + $0x48] sm:$0xff]
        %v569 = vld [vmem:[#allocation5 + $0x50] sm:$0xff]
        %v570 = vld [vmem:[#allocation5 + $0x58] sm:$0xff]
        %v571 = vld [vmem:[#allocation5 + $0x60] sm:$0xff]
        %v572 = vld [vmem:[#allocation5 + $0x68] sm:$0xff]
        %v573 = vld [vmem:[#allocation5 + $0x70] sm:$0xff]
        %v574 = vld [vmem:[#allocation5 + $0x78] sm:$0xff]
        %v575 = vld [vmem:[#allocation5 + $0x80] sm:$0xff]
        %v576 = vld [vmem:[#allocation5 + $0x88] sm:$0xff]
        %v577 = vld [vmem:[#allocation5 + $0x90] sm:$0xff]
        %v578 = vld [vmem:[#allocation5 + $0x98] sm:$0xff]
        %v579 = vld [vmem:[#allocation5 + $0xa0] sm:$0xff]
        %v580 = vld [vmem:[#allocation5 + $0xa8] sm:$0xff]
        %v581 = vld [vmem:[#allocation5 + $0xb0] sm:$0xff]
        %v582 = vld [vmem:[#allocation5 + $0xb8] sm:$0xff]
        %v583 = vld [vmem:[#allocation5 + $0xc0] sm:$0xff]
        %v584 = vld [vmem:[#allocation5 + $0xc8] sm:$0xff]
        %v585 = vld [vmem:[#allocation5 + $0xd0] sm:$0xff]
        %v586 = vld [vmem:[#allocation5 + $0xd8] sm:$0xff]
        %v587 = vld [vmem:[#allocation5 + $0xe0] sm:$0xff]
        %v588 = vld [vmem:[#allocation5 + $0xe8] sm:$0xff]
        %v589 = vld [vmem:[#allocation5 + $0xf0] sm:$0xff]
        %v590 = vld [vmem:[#allocation5 + $0xf8] sm:$0xff]
        %v591 = vld [vmem:[#allocation5 + $0x100] sm:$0xff]
        %v592 = vld [vmem:[#allocation5 + $0x108] sm:$0xff]
        %v593 = vld [vmem:[#allocation5 + $0x110] sm:$0xff]
        %v594 = vld [vmem:[#allocation5 + $0x118] sm:$0xff]
        %v595 = vld [vmem:[#allocation5 + $0x120] sm:$0xff]
        %v596 = vld [vmem:[#allocation5 + $0x128] sm:$0xff]
        %v597 = vld [vmem:[#allocation5 + $0x130] sm:$0xff]
        %v598 = vld [vmem:[#allocation5 + $0x138] sm:$0xff]
        %v599 = vld [vmem:[#allocation5 + $0x140] sm:$0xff]
        %v600 = vld [vmem:[#allocation5 + $0x148] sm:$0xff]
        %v601 = vld [vmem:[#allocation5 + $0x150] sm:$0xff]
        %v602 = vld [vmem:[#allocation5 + $0x158] sm:$0xff]
        %v603 = vld [vmem:[#allocation5 + $0x160] sm:$0xff]
        %v604 = vld [vmem:[#allocation5 + $0x168] sm:$0xff]
        %v605 = vld [vmem:[#allocation5 + $0x170] sm:$0xff]
        %v606 = vld [vmem:[#allocation5 + $0x178] sm:$0xff]
        %v607 = vld [vmem:[#allocation5 + $0x180] sm:$0xff]
        %v608 = vld [vmem:[#allocation5 + $0x188] sm:$0xff]
        %v609 = vld [vmem:[#allocation5 + $0x190] sm:$0xff]
        %v610 = vld [vmem:[#allocation5 + $0x198] sm:$0xff]
        %v611 = vld [vmem:[#allocation5 + $0x1a0] sm:$0xff]
        %v612 = vld [vmem:[#allocation5 + $0x1a8] sm:$0xff]
        %v613 = vld [vmem:[#allocation5 + $0x1b0] sm:$0xff]
        %v614 = vld [vmem:[#allocation5 + $0x1b8] sm:$0xff]
        %v615 = vld [vmem:[#allocation5 + $0x1c0] sm:$0xff]
        %v616 = vld [vmem:[#allocation5 + $0x1c8] sm:$0xff]
        %v617 = vld [vmem:[#allocation5 + $0x1d0] sm:$0xff]
        %v618 = vld [vmem:[#allocation5 + $0x1d8] sm:$0xff]
        %v619 = vld [vmem:[#allocation5 + $0x1e0] sm:$0xff]
        %v620 = vld [vmem:[#allocation5 + $0x1e8] sm:$0xff]
        %v621 = vld [vmem:[#allocation5 + $0x1f0] sm:$0xff]
        %v622 = vld [vmem:[#allocation5 + $0x1f8] sm:$0xff]
        %v623 = vld [vmem:[#allocation5 + $0x200] sm:$0xff]
        %v624 = vld [vmem:[#allocation5 + $0x208] sm:$0xff]
        %v625 = vld [vmem:[#allocation5 + $0x210] sm:$0xff]
        %v626 = vld [vmem:[#allocation5 + $0x218] sm:$0xff]
        %v627 = vld [vmem:[#allocation5 + $0x220] sm:$0xff]
        %v628 = vld [vmem:[#allocation5 + $0x228] sm:$0xff]
        %v629 = vld [vmem:[#allocation5 + $0x230] sm:$0xff]
        %v630 = vld [vmem:[#allocation5 + $0x238] sm:$0xff]
        %v631 = vld [vmem:[#allocation5 + $0x240] sm:$0xff]
        %v632 = vld [vmem:[#allocation5 + $0x248] sm:$0xff]
        %v633 = vld [vmem:[#allocation5 + $0x250] sm:$0xff]
        %v634 = vld [vmem:[#allocation5 + $0x258] sm:$0xff]
        %v635 = vld [vmem:[#allocation5 + $0x260] sm:$0xff]
        %v636 = vld [vmem:[#allocation5 + $0x268] sm:$0xff]
        %v637 = vld [vmem:[#allocation5 + $0x270] sm:$0xff]
        %v638 = vld [vmem:[#allocation5 + $0x278] sm:$0xff]
        %v639 = vld [vmem:[#allocation5 + $0x280] sm:$0xff]
        %v640 = vld [vmem:[#allocation5 + $0x288] sm:$0xff]
        %v641 = vld [vmem:[#allocation5 + $0x290] sm:$0xff]
        %v642 = vld [vmem:[#allocation5 + $0x298] sm:$0xff]
        %v643 = vld [vmem:[#allocation5 + $0x2a0] sm:$0xff]
        %v644 = vld [vmem:[#allocation5 + $0x2a8] sm:$0xff]
        %v645 = vld [vmem:[#allocation5 + $0x2b0] sm:$0xff]
        %v646 = vld [vmem:[#allocation5 + $0x2b8] sm:$0xff]
        %v647 = vld [vmem:[#allocation5 + $0x2c0] sm:$0xff]
        %v648 = vld [vmem:[#allocation5 + $0x2c8] sm:$0xff]
        %v649 = vld [vmem:[#allocation5 + $0x2d0] sm:$0xff]
        %v650 = vld [vmem:[#allocation5 + $0x2d8] sm:$0xff]
        %v651 = vld [vmem:[#allocation5 + $0x2e0] sm:$0xff]
        %v652 = vld [vmem:[#allocation5 + $0x2e8] sm:$0xff]
        %v653 = vld [vmem:[#allocation5 + $0x2f0] sm:$0xff]
        %v654 = vld [vmem:[#allocation5 + $0x2f8] sm:$0xff]
        %v655 = vld [vmem:[#allocation5 + $0x300] sm:$0xff]
        %v656 = vld [vmem:[#allocation5 + $0x308] sm:$0xff]
        %v657 = vld [vmem:[#allocation5 + $0x310] sm:$0xff]
        %v658 = vld [vmem:[#allocation5 + $0x318] sm:$0xff]
        %v659 = vld [vmem:[#allocation5 + $0x320] sm:$0xff]
        %v660 = vld [vmem:[#allocation5 + $0x328] sm:$0xff]
        %v661 = vld [vmem:[#allocation5 + $0x330] sm:$0xff]
        %v662 = vld [vmem:[#allocation5 + $0x338] sm:$0xff]
        %v663 = vld [vmem:[#allocation5 + $0x340] sm:$0xff]
        %v664 = vld [vmem:[#allocation5 + $0x348] sm:$0xff]
        %v665 = vld [vmem:[#allocation5 + $0x350] sm:$0xff]
        %v666 = vld [vmem:[#allocation5 + $0x358] sm:$0xff]
        %v667 = vld [vmem:[#allocation5 + $0x360] sm:$0xff]
        %v668 = vld [vmem:[#allocation5 + $0x368] sm:$0xff]
        %v669 = vld [vmem:[#allocation5 + $0x370] sm:$0xff]
        %v670 = vld [vmem:[#allocation5 + $0x378] sm:$0xff]
        %v671 = vld [vmem:[#allocation7] sm:$0x3]
        %v673 = vperm.slane %v671, 0
        %v674 = vperm.slane %v671, 1
        %v741 = vunpack.c.l.b16 %v495
        %v742 = vunpack.c.h.b16 %v495
        %v743 = vunpack.c.l.b16 %v496
        %v744 = vunpack.c.h.b16 %v496
        %v745 = vunpack.c.l.b16 %v497
        %v746 = vunpack.c.h.b16 %v497
        %v747 = vunpack.c.l.b16 %v498
        %v748 = vunpack.c.l.b16 %v499
        %v749 = vunpack.c.h.b16 %v499
        %v750 = vunpack.c.l.b16 %v500
        %v751 = vunpack.c.h.b16 %v500
        %v752 = vunpack.c.l.b16 %v501
        %v753 = vunpack.c.h.b16 %v501
        %v754 = vunpack.c.l.b16 %v502
        %v755 = vunpack.c.l.b16 %v503
        %v756 = vunpack.c.h.b16 %v503
        %v757 = vunpack.c.l.b16 %v504
        %v758 = vunpack.c.h.b16 %v504
        %v759 = vunpack.c.l.b16 %v505
        %v760 = vunpack.c.h.b16 %v505
        %v761 = vunpack.c.l.b16 %v506
        %v762 = vunpack.c.l.b16 %v507
        %v763 = vunpack.c.h.b16 %v507
        %v764 = vunpack.c.l.b16 %v508
        %v765 = vunpack.c.h.b16 %v508
        %v766 = vunpack.c.l.b16 %v509
        %v767 = vunpack.c.h.b16 %v509
        %v768 = vunpack.c.l.b16 %v510
        %v769 = vunpack.c.l.b16 %v511
        %v770 = vunpack.c.h.b16 %v511
        %v771 = vunpack.c.l.b16 %v512
        %v772 = vunpack.c.h.b16 %v512
        %v773 = vunpack.c.l.b16 %v513
        %v774 = vunpack.c.h.b16 %v513
        %v775 = vunpack.c.l.b16 %v514
        %v776 = vunpack.c.l.b16 %v515
        %v777 = vunpack.c.h.b16 %v515
        %v778 = vunpack.c.l.b16 %v516
        %v779 = vunpack.c.h.b16 %v516
        %v780 = vunpack.c.l.b16 %v517
        %v781 = vunpack.c.h.b16 %v517
        %v782 = vunpack.c.l.b16 %v518
        %v783 = vunpack.c.l.b16 %v519
        %v784 = vunpack.c.h.b16 %v519
        %v785 = vunpack.c.l.b16 %v520
        %v786 = vunpack.c.h.b16 %v520
        %v787 = vunpack.c.l.b16 %v521
        %v788 = vunpack.c.h.b16 %v521
        %v789 = vunpack.c.l.b16 %v522
        %v790 = vunpack.c.l.b16 %v523
        %v791 = vunpack.c.h.b16 %v523
        %v792 = vunpack.c.l.b16 %v524
        %v793 = vunpack.c.h.b16 %v524
        %v794 = vunpack.c.l.b16 %v525
        %v795 = vunpack.c.h.b16 %v525
        %v796 = vunpack.c.l.b16 %v526
        %v797 = vunpack.c.l.b16 %v527
        %v798 = vunpack.c.h.b16 %v527
        %v799 = vunpack.c.l.b16 %v528
        %v800 = vunpack.c.h.b16 %v528
        %v801 = vunpack.c.l.b16 %v529
        %v802 = vunpack.c.h.b16 %v529
        %v803 = vunpack.c.l.b16 %v530
        %v804 = vunpack.c.l.b16 %v531
        %v805 = vunpack.c.h.b16 %v531
        %v806 = vunpack.c.l.b16 %v532
        %v807 = vunpack.c.h.b16 %v532
        %v808 = vunpack.c.l.b16 %v533
        %v809 = vunpack.c.h.b16 %v533
        %v810 = vunpack.c.l.b16 %v534
        %v811 = vunpack.c.l.b16 %v535
        %v812 = vunpack.c.h.b16 %v535
        %v813 = vunpack.c.l.b16 %v536
        %v814 = vunpack.c.h.b16 %v536
        %v815 = vunpack.c.l.b16 %v537
        %v816 = vunpack.c.h.b16 %v537
        %v817 = vunpack.c.l.b16 %v538
        %v818 = vunpack.c.l.b16 %v539
        %v819 = vunpack.c.h.b16 %v539
        %v820 = vunpack.c.l.b16 %v540
        %v821 = vunpack.c.h.b16 %v540
        %v822 = vunpack.c.l.b16 %v541
        %v823 = vunpack.c.h.b16 %v541
        %v824 = vunpack.c.l.b16 %v542
        %v825 = vunpack.c.l.b16 %v543
        %v826 = vunpack.c.h.b16 %v543
        %v827 = vunpack.c.l.b16 %v544
        %v828 = vunpack.c.h.b16 %v544
        %v829 = vunpack.c.l.b16 %v545
        %v830 = vunpack.c.h.b16 %v545
        %v831 = vunpack.c.l.b16 %v546
        %v832 = vunpack.c.l.b16 %v547
        %v833 = vunpack.c.h.b16 %v547
        %v834 = vunpack.c.l.b16 %v548
        %v835 = vunpack.c.h.b16 %v548
        %v836 = vunpack.c.l.b16 %v549
        %v837 = vunpack.c.h.b16 %v549
        %v838 = vunpack.c.l.b16 %v550
        %v839 = vunpack.c.l.b16 %v551
        %v840 = vunpack.c.h.b16 %v551
        %v841 = vunpack.c.l.b16 %v552
        %v842 = vunpack.c.h.b16 %v552
        %v843 = vunpack.c.l.b16 %v553
        %v844 = vunpack.c.h.b16 %v553
        %v845 = vunpack.c.l.b16 %v554
        %v846 = vunpack.c.l.b16 %v555
        %v847 = vunpack.c.h.b16 %v555
        %v848 = vunpack.c.l.b16 %v556
        %v849 = vunpack.c.h.b16 %v556
        %v850 = vunpack.c.l.b16 %v557
        %v851 = vunpack.c.h.b16 %v557
        %v852 = vunpack.c.l.b16 %v558
        %v853 = vpack.c.b16 %v748, %v741
        %v854 = vpack.c.b16 %v749, %v742
        %v855 = vpack.c.b16 %v750, %v743
        %v856 = vpack.c.b16 %v751, %v744
        %v857 = vpack.c.b16 %v752, %v745
        %v858 = vpack.c.b16 %v753, %v746
        %v859 = vpack.c.b16 %v754, %v747
        %v860 = vpack.c.b16 %v762, %v755
        %v861 = vpack.c.b16 %v763, %v756
        %v862 = vpack.c.b16 %v764, %v757
        %v863 = vpack.c.b16 %v765, %v758
        %v864 = vpack.c.b16 %v766, %v759
        %v865 = vpack.c.b16 %v767, %v760
        %v866 = vpack.c.b16 %v768, %v761
        %v867 = vpack.c.b16 %v776, %v769
        %v868 = vpack.c.b16 %v777, %v770
        %v869 = vpack.c.b16 %v778, %v771
        %v870 = vpack.c.b16 %v779, %v772
        %v871 = vpack.c.b16 %v780, %v773
        %v872 = vpack.c.b16 %v781, %v774
        %v873 = vpack.c.b16 %v782, %v775
        %v874 = vpack.c.b16 %v790, %v783
        %v875 = vpack.c.b16 %v791, %v784
        %v876 = vpack.c.b16 %v792, %v785
        %v877 = vpack.c.b16 %v793, %v786
        %v878 = vpack.c.b16 %v794, %v787
        %v879 = vpack.c.b16 %v795, %v788
        %v880 = vpack.c.b16 %v796, %v789
        %v881 = vpack.c.b16 %v804, %v797
        %v882 = vpack.c.b16 %v805, %v798
        %v883 = vpack.c.b16 %v806, %v799
        %v884 = vpack.c.b16 %v807, %v800
        %v885 = vpack.c.b16 %v808, %v801
        %v886 = vpack.c.b16 %v809, %v802
        %v887 = vpack.c.b16 %v810, %v803
        %v888 = vpack.c.b16 %v818, %v811
        %v889 = vpack.c.b16 %v819, %v812
        %v890 = vpack.c.b16 %v820, %v813
        %v891 = vpack.c.b16 %v821, %v814
        %v892 = vpack.c.b16 %v822, %v815
        %v893 = vpack.c.b16 %v823, %v816
        %v894 = vpack.c.b16 %v824, %v817
        %v895 = vpack.c.b16 %v832, %v825
        %v896 = vpack.c.b16 %v833, %v826
        %v897 = vpack.c.b16 %v834, %v827
        %v898 = vpack.c.b16 %v835, %v828
        %v899 = vpack.c.b16 %v836, %v829
        %v900 = vpack.c.b16 %v837, %v830
        %v901 = vpack.c.b16 %v838, %v831
        %v902 = vpack.c.b16 %v846, %v839
        %v903 = vpack.c.b16 %v847, %v840
        %v904 = vpack.c.b16 %v848, %v841
        %v905 = vpack.c.b16 %v849, %v842
        %v906 = vpack.c.b16 %v850, %v843
        %v907 = vpack.c.b16 %v851, %v844
        %v908 = vpack.c.b16 %v852, %v845
        %v1077 = vunpack.c.l.b16 %v559
        %v1078 = vunpack.c.h.b16 %v559
        %v1079 = vunpack.c.l.b16 %v560
        %v1080 = vunpack.c.h.b16 %v560
        %v1081 = vunpack.c.l.b16 %v561
        %v1082 = vunpack.c.h.b16 %v561
        %v1083 = vunpack.c.l.b16 %v562
        %v1084 = vunpack.c.h.b16 %v562
        %v1085 = vunpack.c.l.b16 %v563
        %v1086 = vunpack.c.h.b16 %v563
        %v1087 = vunpack.c.l.b16 %v564
        %v1088 = vunpack.c.h.b16 %v564
        %v1089 = vunpack.c.l.b16 %v565
        %v1090 = vunpack.c.h.b16 %v565
        %v1091 = vunpack.c.l.b16 %v566
        %v1092 = vunpack.c.h.b16 %v566
        %v1093 = vunpack.c.l.b16 %v567
        %v1094 = vunpack.c.h.b16 %v567
        %v1095 = vunpack.c.l.b16 %v568
        %v1096 = vunpack.c.h.b16 %v568
        %v1097 = vunpack.c.l.b16 %v569
        %v1098 = vunpack.c.h.b16 %v569
        %v1099 = vunpack.c.l.b16 %v570
        %v1100 = vunpack.c.h.b16 %v570
        %v1101 = vunpack.c.l.b16 %v571
        %v1102 = vunpack.c.h.b16 %v571
        %v1103 = vunpack.c.l.b16 %v572
        %v1104 = vunpack.c.h.b16 %v572
        %v1105 = vunpack.c.l.b16 %v573
        %v1106 = vunpack.c.h.b16 %v573
        %v1107 = vunpack.c.l.b16 %v574
        %v1108 = vunpack.c.h.b16 %v574
        %v1109 = vunpack.c.l.b16 %v575
        %v1110 = vunpack.c.h.b16 %v575
        %v1111 = vunpack.c.l.b16 %v576
        %v1112 = vunpack.c.h.b16 %v576
        %v1113 = vunpack.c.l.b16 %v577
        %v1114 = vunpack.c.h.b16 %v577
        %v1115 = vunpack.c.l.b16 %v578
        %v1116 = vunpack.c.h.b16 %v578
        %v1117 = vunpack.c.l.b16 %v579
        %v1118 = vunpack.c.h.b16 %v579
        %v1119 = vunpack.c.l.b16 %v580
        %v1120 = vunpack.c.h.b16 %v580
        %v1121 = vunpack.c.l.b16 %v581
        %v1122 = vunpack.c.h.b16 %v581
        %v1123 = vunpack.c.l.b16 %v582
        %v1124 = vunpack.c.h.b16 %v582
        %v1125 = vunpack.c.l.b16 %v583
        %v1126 = vunpack.c.h.b16 %v583
        %v1127 = vunpack.c.l.b16 %v584
        %v1128 = vunpack.c.h.b16 %v584
        %v1129 = vunpack.c.l.b16 %v585
        %v1130 = vunpack.c.h.b16 %v585
        %v1131 = vunpack.c.l.b16 %v586
        %v1132 = vunpack.c.h.b16 %v586
        %v1133 = vunpack.c.l.b16 %v587
        %v1134 = vunpack.c.h.b16 %v587
        %v1135 = vunpack.c.l.b16 %v588
        %v1136 = vunpack.c.h.b16 %v588
        %v1137 = vunpack.c.l.b16 %v589
        %v1138 = vunpack.c.h.b16 %v589
        %v1139 = vunpack.c.l.b16 %v590
        %v1140 = vunpack.c.h.b16 %v590
        %v1141 = vunpack.c.l.b16 %v591
        %v1142 = vunpack.c.h.b16 %v591
        %v1143 = vunpack.c.l.b16 %v592
        %v1144 = vunpack.c.h.b16 %v592
        %v1145 = vunpack.c.l.b16 %v593
        %v1146 = vunpack.c.h.b16 %v593
        %v1147 = vunpack.c.l.b16 %v594
        %v1148 = vunpack.c.h.b16 %v594
        %v1149 = vunpack.c.l.b16 %v595
        %v1150 = vunpack.c.h.b16 %v595
        %v1151 = vunpack.c.l.b16 %v596
        %v1152 = vunpack.c.h.b16 %v596
        %v1153 = vunpack.c.l.b16 %v597
        %v1154 = vunpack.c.h.b16 %v597
        %v1155 = vunpack.c.l.b16 %v598
        %v1156 = vunpack.c.h.b16 %v598
        %v1157 = vunpack.c.l.b16 %v599
        %v1158 = vunpack.c.h.b16 %v599
        %v1159 = vunpack.c.l.b16 %v600
        %v1160 = vunpack.c.h.b16 %v600
        %v1161 = vunpack.c.l.b16 %v601
        %v1162 = vunpack.c.h.b16 %v601
        %v1163 = vunpack.c.l.b16 %v602
        %v1164 = vunpack.c.h.b16 %v602
        %v1165 = vunpack.c.l.b16 %v603
        %v1166 = vunpack.c.h.b16 %v603
        %v1167 = vunpack.c.l.b16 %v604
        %v1168 = vunpack.c.h.b16 %v604
        %v1169 = vunpack.c.l.b16 %v605
        %v1170 = vunpack.c.h.b16 %v605
        %v1171 = vunpack.c.l.b16 %v606
        %v1172 = vunpack.c.h.b16 %v606
        %v1173 = vunpack.c.l.b16 %v607
        %v1174 = vunpack.c.h.b16 %v607
        %v1175 = vunpack.c.l.b16 %v608
        %v1176 = vunpack.c.h.b16 %v608
        %v1177 = vunpack.c.l.b16 %v609
        %v1178 = vunpack.c.h.b16 %v609
        %v1179 = vunpack.c.l.b16 %v610
        %v1180 = vunpack.c.h.b16 %v610
        %v1181 = vunpack.c.l.b16 %v611
        %v1182 = vunpack.c.h.b16 %v611
        %v1183 = vunpack.c.l.b16 %v612
        %v1184 = vunpack.c.h.b16 %v612
        %v1185 = vunpack.c.l.b16 %v613
        %v1186 = vunpack.c.h.b16 %v613
        %v1187 = vunpack.c.l.b16 %v614
        %v1188 = vunpack.c.h.b16 %v614
        %v1189 = vunpack.c.l.b16 %v615
        %v1190 = vunpack.c.h.b16 %v615
        %v1191 = vunpack.c.l.b16 %v616
        %v1192 = vunpack.c.h.b16 %v616
        %v1193 = vunpack.c.l.b16 %v617
        %v1194 = vunpack.c.h.b16 %v617
        %v1195 = vunpack.c.l.b16 %v618
        %v1196 = vunpack.c.h.b16 %v618
        %v1197 = vunpack.c.l.b16 %v619
        %v1198 = vunpack.c.h.b16 %v619
        %v1199 = vunpack.c.l.b16 %v620
        %v1200 = vunpack.c.h.b16 %v620
        %v1201 = vunpack.c.l.b16 %v621
        %v1202 = vunpack.c.h.b16 %v621
        %v1203 = vunpack.c.l.b16 %v622
        %v1204 = vunpack.c.h.b16 %v622
        %v1205 = vunpack.c.l.b16 %v623
        %v1206 = vunpack.c.h.b16 %v623
        %v1207 = vunpack.c.l.b16 %v624
        %v1208 = vunpack.c.h.b16 %v624
        %v1209 = vunpack.c.l.b16 %v625
        %v1210 = vunpack.c.h.b16 %v625
        %v1211 = vunpack.c.l.b16 %v626
        %v1212 = vunpack.c.h.b16 %v626
        %v1213 = vunpack.c.l.b16 %v627
        %v1214 = vunpack.c.h.b16 %v627
        %v1215 = vunpack.c.l.b16 %v628
        %v1216 = vunpack.c.h.b16 %v628
        %v1217 = vunpack.c.l.b16 %v629
        %v1218 = vunpack.c.h.b16 %v629
        %v1219 = vunpack.c.l.b16 %v630
        %v1220 = vunpack.c.h.b16 %v630
        %v1221 = vunpack.c.l.b16 %v631
        %v1222 = vunpack.c.h.b16 %v631
        %v1223 = vunpack.c.l.b16 %v632
        %v1224 = vunpack.c.h.b16 %v632
        %v1225 = vunpack.c.l.b16 %v633
        %v1226 = vunpack.c.h.b16 %v633
        %v1227 = vunpack.c.l.b16 %v634
        %v1228 = vunpack.c.h.b16 %v634
        %v1229 = vunpack.c.l.b16 %v635
        %v1230 = vunpack.c.h.b16 %v635
        %v1231 = vunpack.c.l.b16 %v636
        %v1232 = vunpack.c.h.b16 %v636
        %v1233 = vunpack.c.l.b16 %v637
        %v1234 = vunpack.c.h.b16 %v637
        %v1235 = vunpack.c.l.b16 %v638
        %v1236 = vunpack.c.h.b16 %v638
        %v1237 = vunpack.c.l.b16 %v639
        %v1238 = vunpack.c.h.b16 %v639
        %v1239 = vunpack.c.l.b16 %v640
        %v1240 = vunpack.c.h.b16 %v640
        %v1241 = vunpack.c.l.b16 %v641
        %v1242 = vunpack.c.h.b16 %v641
        %v1243 = vunpack.c.l.b16 %v642
        %v1244 = vunpack.c.h.b16 %v642
        %v1245 = vunpack.c.l.b16 %v643
        %v1246 = vunpack.c.h.b16 %v643
        %v1247 = vunpack.c.l.b16 %v644
        %v1248 = vunpack.c.h.b16 %v644
        %v1249 = vunpack.c.l.b16 %v645
        %v1250 = vunpack.c.h.b16 %v645
        %v1251 = vunpack.c.l.b16 %v646
        %v1252 = vunpack.c.h.b16 %v646
        %v1253 = vunpack.c.l.b16 %v647
        %v1254 = vunpack.c.h.b16 %v647
        %v1255 = vunpack.c.l.b16 %v648
        %v1256 = vunpack.c.h.b16 %v648
        %v1257 = vunpack.c.l.b16 %v649
        %v1258 = vunpack.c.h.b16 %v649
        %v1259 = vunpack.c.l.b16 %v650
        %v1260 = vunpack.c.h.b16 %v650
        %v1261 = vunpack.c.l.b16 %v651
        %v1262 = vunpack.c.h.b16 %v651
        %v1263 = vunpack.c.l.b16 %v652
        %v1264 = vunpack.c.h.b16 %v652
        %v1265 = vunpack.c.l.b16 %v653
        %v1266 = vunpack.c.h.b16 %v653
        %v1267 = vunpack.c.l.b16 %v654
        %v1268 = vunpack.c.h.b16 %v654
        %v1269 = vunpack.c.l.b16 %v655
        %v1270 = vunpack.c.h.b16 %v655
        %v1271 = vunpack.c.l.b16 %v656
        %v1272 = vunpack.c.h.b16 %v656
        %v1273 = vunpack.c.l.b16 %v657
        %v1274 = vunpack.c.h.b16 %v657
        %v1275 = vunpack.c.l.b16 %v658
        %v1276 = vunpack.c.h.b16 %v658
        %v1277 = vunpack.c.l.b16 %v659
        %v1278 = vunpack.c.h.b16 %v659
        %v1279 = vunpack.c.l.b16 %v660
        %v1280 = vunpack.c.h.b16 %v660
        %v1281 = vunpack.c.l.b16 %v661
        %v1282 = vunpack.c.h.b16 %v661
        %v1283 = vunpack.c.l.b16 %v662
        %v1284 = vunpack.c.h.b16 %v662
        %v1285 = vunpack.c.l.b16 %v663
        %v1286 = vunpack.c.h.b16 %v663
        %v1287 = vunpack.c.l.b16 %v664
        %v1288 = vunpack.c.h.b16 %v664
        %v1289 = vunpack.c.l.b16 %v665
        %v1290 = vunpack.c.h.b16 %v665
        %v1291 = vunpack.c.l.b16 %v666
        %v1292 = vunpack.c.h.b16 %v666
        %v1293 = vunpack.c.l.b16 %v667
        %v1294 = vunpack.c.h.b16 %v667
        %v1295 = vunpack.c.l.b16 %v668
        %v1296 = vunpack.c.h.b16 %v668
        %v1297 = vunpack.c.l.b16 %v669
        %v1298 = vunpack.c.h.b16 %v669
        %v1299 = vunpack.c.l.b16 %v670
        %v1300 = vunpack.c.h.b16 %v670
        %v1301 = vpack.c.b16 %v1079, %v1077
        %v1302 = vpack.c.b16 %v1080, %v1078
        %v1303 = vpack.c.b16 %v1083, %v1081
        %v1304 = vpack.c.b16 %v1084, %v1082
        %v1305 = vpack.c.b16 %v1087, %v1085
        %v1306 = vpack.c.b16 %v1088, %v1086
        %v1307 = vpack.c.b16 %v1091, %v1089
        %v1308 = vpack.c.b16 %v1092, %v1090
        %v1309 = vpack.c.b16 %v1095, %v1093
        %v1310 = vpack.c.b16 %v1096, %v1094
        %v1311 = vpack.c.b16 %v1099, %v1097
        %v1312 = vpack.c.b16 %v1100, %v1098
        %v1313 = vpack.c.b16 %v1103, %v1101
        %v1314 = vpack.c.b16 %v1104, %v1102
        %v1315 = vpack.c.b16 %v1107, %v1105
        %v1316 = vpack.c.b16 %v1108, %v1106
        %v1317 = vpack.c.b16 %v1111, %v1109
        %v1318 = vpack.c.b16 %v1112, %v1110
        %v1319 = vpack.c.b16 %v1115, %v1113
        %v1320 = vpack.c.b16 %v1116, %v1114
        %v1321 = vpack.c.b16 %v1119, %v1117
        %v1322 = vpack.c.b16 %v1120, %v1118
        %v1323 = vpack.c.b16 %v1123, %v1121
        %v1324 = vpack.c.b16 %v1124, %v1122
        %v1325 = vpack.c.b16 %v1127, %v1125
        %v1326 = vpack.c.b16 %v1128, %v1126
        %v1327 = vpack.c.b16 %v1131, %v1129
        %v1328 = vpack.c.b16 %v1132, %v1130
        %v1329 = vpack.c.b16 %v1135, %v1133
        %v1330 = vpack.c.b16 %v1136, %v1134
        %v1331 = vpack.c.b16 %v1139, %v1137
        %v1332 = vpack.c.b16 %v1140, %v1138
        %v1333 = vpack.c.b16 %v1143, %v1141
        %v1334 = vpack.c.b16 %v1144, %v1142
        %v1335 = vpack.c.b16 %v1147, %v1145
        %v1336 = vpack.c.b16 %v1148, %v1146
        %v1337 = vpack.c.b16 %v1151, %v1149
        %v1338 = vpack.c.b16 %v1152, %v1150
        %v1339 = vpack.c.b16 %v1155, %v1153
        %v1340 = vpack.c.b16 %v1156, %v1154
        %v1341 = vpack.c.b16 %v1159, %v1157
        %v1342 = vpack.c.b16 %v1160, %v1158
        %v1343 = vpack.c.b16 %v1163, %v1161
        %v1344 = vpack.c.b16 %v1164, %v1162
        %v1345 = vpack.c.b16 %v1167, %v1165
        %v1346 = vpack.c.b16 %v1168, %v1166
        %v1347 = vpack.c.b16 %v1171, %v1169
        %v1348 = vpack.c.b16 %v1172, %v1170
        %v1349 = vpack.c.b16 %v1175, %v1173
        %v1350 = vpack.c.b16 %v1176, %v1174
        %v1351 = vpack.c.b16 %v1179, %v1177
        %v1352 = vpack.c.b16 %v1180, %v1178
        %v1353 = vpack.c.b16 %v1183, %v1181
        %v1354 = vpack.c.b16 %v1184, %v1182
        %v1355 = vpack.c.b16 %v1187, %v1185
        %v1356 = vpack.c.b16 %v1188, %v1186
        %v1357 = vpack.c.b16 %v1191, %v1189
        %v1358 = vpack.c.b16 %v1192, %v1190
        %v1359 = vpack.c.b16 %v1195, %v1193
        %v1360 = vpack.c.b16 %v1196, %v1194
        %v1361 = vpack.c.b16 %v1199, %v1197
        %v1362 = vpack.c.b16 %v1200, %v1198
        %v1363 = vpack.c.b16 %v1203, %v1201
        %v1364 = vpack.c.b16 %v1204, %v1202
        %v1365 = vpack.c.b16 %v1207, %v1205
        %v1366 = vpack.c.b16 %v1208, %v1206
        %v1367 = vpack.c.b16 %v1211, %v1209
        %v1368 = vpack.c.b16 %v1212, %v1210
        %v1369 = vpack.c.b16 %v1215, %v1213
        %v1370 = vpack.c.b16 %v1216, %v1214
        %v1371 = vpack.c.b16 %v1219, %v1217
        %v1372 = vpack.c.b16 %v1220, %v1218
        %v1373 = vpack.c.b16 %v1223, %v1221
        %v1374 = vpack.c.b16 %v1224, %v1222
        %v1375 = vpack.c.b16 %v1227, %v1225
        %v1376 = vpack.c.b16 %v1228, %v1226
        %v1377 = vpack.c.b16 %v1231, %v1229
        %v1378 = vpack.c.b16 %v1232, %v1230
        %v1379 = vpack.c.b16 %v1235, %v1233
        %v1380 = vpack.c.b16 %v1236, %v1234
        %v1381 = vpack.c.b16 %v1239, %v1237
        %v1382 = vpack.c.b16 %v1240, %v1238
        %v1383 = vpack.c.b16 %v1243, %v1241
        %v1384 = vpack.c.b16 %v1244, %v1242
        %v1385 = vpack.c.b16 %v1247, %v1245
        %v1386 = vpack.c.b16 %v1248, %v1246
        %v1387 = vpack.c.b16 %v1251, %v1249
        %v1388 = vpack.c.b16 %v1252, %v1250
        %v1389 = vpack.c.b16 %v1255, %v1253
        %v1390 = vpack.c.b16 %v1256, %v1254
        %v1391 = vpack.c.b16 %v1259, %v1257
        %v1392 = vpack.c.b16 %v1260, %v1258
        %v1393 = vpack.c.b16 %v1263, %v1261
        %v1394 = vpack.c.b16 %v1264, %v1262
        %v1395 = vpack.c.b16 %v1267, %v1265
        %v1396 = vpack.c.b16 %v1268, %v1266
        %v1397 = vpack.c.b16 %v1271, %v1269
        %v1398 = vpack.c.b16 %v1272, %v1270
        %v1399 = vpack.c.b16 %v1275, %v1273
        %v1400 = vpack.c.b16 %v1276, %v1274
        %v1401 = vpack.c.b16 %v1279, %v1277
        %v1402 = vpack.c.b16 %v1280, %v1278
        %v1403 = vpack.c.b16 %v1283, %v1281
        %v1404 = vpack.c.b16 %v1284, %v1282
        %v1405 = vpack.c.b16 %v1287, %v1285
        %v1406 = vpack.c.b16 %v1288, %v1286
        %v1407 = vpack.c.b16 %v1291, %v1289
        %v1408 = vpack.c.b16 %v1292, %v1290
        %v1409 = vpack.c.b16 %v1295, %v1293
        %v1410 = vpack.c.b16 %v1296, %v1294
        %v1411 = vpack.c.b16 %v1299, %v1297
        %v1412 = vpack.c.b16 %v1300, %v1298
        %1525 = vmatpush.bf16.msra.mxu0 %v1315
        %1526 = vmatpush.bf16.msra.mxu0 %v1313
        %1527 = vmatpush.bf16.msra.mxu0 %v1311
        %1528 = vmatpush.bf16.msra.mxu0 %v1309
        %1529 = vmatpush.bf16.msra.mxu0 %v1307
        %1530 = vmatpush.bf16.msra.mxu0 %v1305
        %1531 = vmatpush.bf16.msra.mxu0 %v1303
        %1532 = vmatpush.bf16.msra.mxu0 %v1301
        %1533 = vmatmul.bf16.gmra.mxu0 %v853
        %v1534 = vpop.f32.mrf.mxu0
        %v1535 = vadd.f32 %v673, %v1534
        %v1536 = vpop.f32.mrf.mxu0
        %v1537 = vadd.f32 %v673, %v1536
        %1538 = vmatmul.bf16.gmra.mxu0 %v860
        %v1539 = vpop.f32.mrf.mxu0
        %v1540 = vadd.f32 %v673, %v1539
        %v1541 = vpop.f32.mrf.mxu0
        %v1542 = vadd.f32 %v673, %v1541
        %1543 = vmatmul.bf16.gmra.mxu0 %v867
        %v1544 = vpop.f32.mrf.mxu0
        %v1545 = vadd.f32 %v673, %v1544
        %v1546 = vpop.f32.mrf.mxu0
        %v1547 = vadd.f32 %v673, %v1546
        %1548 = vmatmul.bf16.gmra.mxu0 %v874
        %v1549 = vpop.f32.mrf.mxu0
        %v1550 = vadd.f32 %v673, %v1549
        %v1551 = vpop.f32.mrf.mxu0
        %v1552 = vadd.f32 %v673, %v1551
        %1553 = vmatmul.bf16.gmra.mxu0 %v881
        %v1554 = vpop.f32.mrf.mxu0
        %v1555 = vadd.f32 %v673, %v1554
        %v1556 = vpop.f32.mrf.mxu0
        %v1557 = vadd.f32 %v673, %v1556
        %1558 = vmatmul.bf16.gmra.mxu0 %v888
        %v1559 = vpop.f32.mrf.mxu0
        %v1560 = vadd.f32 %v673, %v1559
        %v1561 = vpop.f32.mrf.mxu0
        %v1562 = vadd.f32 %v673, %v1561
        %1563 = vmatmul.bf16.gmra.mxu0 %v895
        %v1564 = vpop.f32.mrf.mxu0
        %v1565 = vadd.f32 %v673, %v1564
        %v1566 = vpop.f32.mrf.mxu0
        %v1567 = vadd.f32 %v673, %v1566
        %1568 = vmatmul.bf16.gmra.mxu0 %v902
        %v1569 = vpop.f32.mrf.mxu0
        %v1570 = vadd.f32 %v673, %v1569
        %v1571 = vpop.f32.mrf.mxu0
        %v1572 = vadd.f32 %v673, %v1571
        %1573 = vdwg.mxu0
        %1574 = vmatpush.bf16.msra.mxu0 %v1331
        %1575 = vmatpush.bf16.msra.mxu0 %v1329
        %1576 = vmatpush.bf16.msra.mxu0 %v1327
        %1577 = vmatpush.bf16.msra.mxu0 %v1325
        %1578 = vmatpush.bf16.msra.mxu0 %v1323
        %1579 = vmatpush.bf16.msra.mxu0 %v1321
        %1580 = vmatpush.bf16.msra.mxu0 %v1319
        %1581 = vmatpush.bf16.msra.mxu0 %v1317
        %1582 = vmatmul.bf16.gmra.mxu0 %v854
        %v1583 = vpop.f32.mrf.mxu0
        %v1584 = vadd.f32 %v1535, %v1583
        %v1585 = vpop.f32.mrf.mxu0
        %v1586 = vadd.f32 %v1537, %v1585
        %1587 = vmatmul.bf16.gmra.mxu0 %v861
        %v1588 = vpop.f32.mrf.mxu0
        %v1589 = vadd.f32 %v1540, %v1588
        %v1590 = vpop.f32.mrf.mxu0
        %v1591 = vadd.f32 %v1542, %v1590
        %1592 = vmatmul.bf16.gmra.mxu0 %v868
        %v1593 = vpop.f32.mrf.mxu0
        %v1594 = vadd.f32 %v1545, %v1593
        %v1595 = vpop.f32.mrf.mxu0
        %v1596 = vadd.f32 %v1547, %v1595
        %1597 = vmatmul.bf16.gmra.mxu0 %v875
        %v1598 = vpop.f32.mrf.mxu0
        %v1599 = vadd.f32 %v1550, %v1598
        %v1600 = vpop.f32.mrf.mxu0
        %v1601 = vadd.f32 %v1552, %v1600
        %1602 = vmatmul.bf16.gmra.mxu0 %v882
        %v1603 = vpop.f32.mrf.mxu0
        %v1604 = vadd.f32 %v1555, %v1603
        %v1605 = vpop.f32.mrf.mxu0
        %v1606 = vadd.f32 %v1557, %v1605
        %1607 = vmatmul.bf16.gmra.mxu0 %v889
        %v1608 = vpop.f32.mrf.mxu0
        %v1609 = vadd.f32 %v1560, %v1608
        %v1610 = vpop.f32.mrf.mxu0
        %v1611 = vadd.f32 %v1562, %v1610
        %1612 = vmatmul.bf16.gmra.mxu0 %v896
        %v1613 = vpop.f32.mrf.mxu0
        %v1614 = vadd.f32 %v1565, %v1613
        %v1615 = vpop.f32.mrf.mxu0
        %v1616 = vadd.f32 %v1567, %v1615
        %1617 = vmatmul.bf16.gmra.mxu0 %v903
        %v1618 = vpop.f32.mrf.mxu0
        %v1619 = vadd.f32 %v1570, %v1618
        %v1620 = vpop.f32.mrf.mxu0
        %v1621 = vadd.f32 %v1572, %v1620
        %1622 = vdwg.mxu0
        %1623 = vmatpush.bf16.msra.mxu0 %v1347
        %1624 = vmatpush.bf16.msra.mxu0 %v1345
        %1625 = vmatpush.bf16.msra.mxu0 %v1343
        %1626 = vmatpush.bf16.msra.mxu0 %v1341
        %1627 = vmatpush.bf16.msra.mxu0 %v1339
        %1628 = vmatpush.bf16.msra.mxu0 %v1337
        %1629 = vmatpush.bf16.msra.mxu0 %v1335
        %1630 = vmatpush.bf16.msra.mxu0 %v1333
        %1631 = vmatmul.bf16.gmra.mxu0 %v855
        %v1632 = vpop.f32.mrf.mxu0
        %v1633 = vadd.f32 %v1584, %v1632
        %v1634 = vpop.f32.mrf.mxu0
        %v1635 = vadd.f32 %v1586, %v1634
        %1636 = vmatmul.bf16.gmra.mxu0 %v862
        %v1637 = vpop.f32.mrf.mxu0
        %v1638 = vadd.f32 %v1589, %v1637
        %v1639 = vpop.f32.mrf.mxu0
        %v1640 = vadd.f32 %v1591, %v1639
        %1641 = vmatmul.bf16.gmra.mxu0 %v869
        %v1642 = vpop.f32.mrf.mxu0
        %v1643 = vadd.f32 %v1594, %v1642
        %v1644 = vpop.f32.mrf.mxu0
        %v1645 = vadd.f32 %v1596, %v1644
        %1646 = vmatmul.bf16.gmra.mxu0 %v876
        %v1647 = vpop.f32.mrf.mxu0
        %v1648 = vadd.f32 %v1599, %v1647
        %v1649 = vpop.f32.mrf.mxu0
        %v1650 = vadd.f32 %v1601, %v1649
        %1651 = vmatmul.bf16.gmra.mxu0 %v883
        %v1652 = vpop.f32.mrf.mxu0
        %v1653 = vadd.f32 %v1604, %v1652
        %v1654 = vpop.f32.mrf.mxu0
        %v1655 = vadd.f32 %v1606, %v1654
        %1656 = vmatmul.bf16.gmra.mxu0 %v890
        %v1657 = vpop.f32.mrf.mxu0
        %v1658 = vadd.f32 %v1609, %v1657
        %v1659 = vpop.f32.mrf.mxu0
        %v1660 = vadd.f32 %v1611, %v1659
        %1661 = vmatmul.bf16.gmra.mxu0 %v897
        %v1662 = vpop.f32.mrf.mxu0
        %v1663 = vadd.f32 %v1614, %v1662
        %v1664 = vpop.f32.mrf.mxu0
        %v1665 = vadd.f32 %v1616, %v1664
        %1666 = vmatmul.bf16.gmra.mxu0 %v904
        %v1667 = vpop.f32.mrf.mxu0
        %v1668 = vadd.f32 %v1619, %v1667
        %v1669 = vpop.f32.mrf.mxu0
        %v1670 = vadd.f32 %v1621, %v1669
        %1671 = vdwg.mxu0
        %1672 = vmatpush.bf16.msra.mxu0 %v1363
        %1673 = vmatpush.bf16.msra.mxu0 %v1361
        %1674 = vmatpush.bf16.msra.mxu0 %v1359
        %1675 = vmatpush.bf16.msra.mxu0 %v1357
        %1676 = vmatpush.bf16.msra.mxu0 %v1355
        %1677 = vmatpush.bf16.msra.mxu0 %v1353
        %1678 = vmatpush.bf16.msra.mxu0 %v1351
        %1679 = vmatpush.bf16.msra.mxu0 %v1349
        %1680 = vmatmul.bf16.gmra.mxu0 %v856
        %v1681 = vpop.f32.mrf.mxu0
        %v1682 = vadd.f32 %v1633, %v1681
        %v1683 = vpop.f32.mrf.mxu0
        %v1684 = vadd.f32 %v1635, %v1683
        %1685 = vmatmul.bf16.gmra.mxu0 %v863
        %v1686 = vpop.f32.mrf.mxu0
        %v1687 = vadd.f32 %v1638, %v1686
        %v1688 = vpop.f32.mrf.mxu0
        %v1689 = vadd.f32 %v1640, %v1688
        %1690 = vmatmul.bf16.gmra.mxu0 %v870
        %v1691 = vpop.f32.mrf.mxu0
        %v1692 = vadd.f32 %v1643, %v1691
        %v1693 = vpop.f32.mrf.mxu0
        %v1694 = vadd.f32 %v1645, %v1693
        %1695 = vmatmul.bf16.gmra.mxu0 %v877
        %v1696 = vpop.f32.mrf.mxu0
        %v1697 = vadd.f32 %v1648, %v1696
        %v1698 = vpop.f32.mrf.mxu0
        %v1699 = vadd.f32 %v1650, %v1698
        %1700 = vmatmul.bf16.gmra.mxu0 %v884
        %v1701 = vpop.f32.mrf.mxu0
        %v1702 = vadd.f32 %v1653, %v1701
        %v1703 = vpop.f32.mrf.mxu0
        %v1704 = vadd.f32 %v1655, %v1703
        %1705 = vmatmul.bf16.gmra.mxu0 %v891
        %v1706 = vpop.f32.mrf.mxu0
        %v1707 = vadd.f32 %v1658, %v1706
        %v1708 = vpop.f32.mrf.mxu0
        %v1709 = vadd.f32 %v1660, %v1708
        %1710 = vmatmul.bf16.gmra.mxu0 %v898
        %v1711 = vpop.f32.mrf.mxu0
        %v1712 = vadd.f32 %v1663, %v1711
        %v1713 = vpop.f32.mrf.mxu0
        %v1714 = vadd.f32 %v1665, %v1713
        %1715 = vmatmul.bf16.gmra.mxu0 %v905
        %v1716 = vpop.f32.mrf.mxu0
        %v1717 = vadd.f32 %v1668, %v1716
        %v1718 = vpop.f32.mrf.mxu0
        %v1719 = vadd.f32 %v1670, %v1718
        %1720 = vdwg.mxu0
        %1721 = vmatpush.bf16.msra.mxu0 %v1379
        %1722 = vmatpush.bf16.msra.mxu0 %v1377
        %1723 = vmatpush.bf16.msra.mxu0 %v1375
        %1724 = vmatpush.bf16.msra.mxu0 %v1373
        %1725 = vmatpush.bf16.msra.mxu0 %v1371
        %1726 = vmatpush.bf16.msra.mxu0 %v1369
        %1727 = vmatpush.bf16.msra.mxu0 %v1367
        %1728 = vmatpush.bf16.msra.mxu0 %v1365
        %1729 = vmatmul.bf16.gmra.mxu0 %v857
        %v1730 = vpop.f32.mrf.mxu0
        %v1731 = vadd.f32 %v1682, %v1730
        %v1732 = vpop.f32.mrf.mxu0
        %v1733 = vadd.f32 %v1684, %v1732
        %1734 = vmatmul.bf16.gmra.mxu0 %v864
        %v1735 = vpop.f32.mrf.mxu0
        %v1736 = vadd.f32 %v1687, %v1735
        %v1737 = vpop.f32.mrf.mxu0
        %v1738 = vadd.f32 %v1689, %v1737
        %1739 = vmatmul.bf16.gmra.mxu0 %v871
        %v1740 = vpop.f32.mrf.mxu0
        %v1741 = vadd.f32 %v1692, %v1740
        %v1742 = vpop.f32.mrf.mxu0
        %v1743 = vadd.f32 %v1694, %v1742
        %1744 = vmatmul.bf16.gmra.mxu0 %v878
        %v1745 = vpop.f32.mrf.mxu0
        %v1746 = vadd.f32 %v1697, %v1745
        %v1747 = vpop.f32.mrf.mxu0
        %v1748 = vadd.f32 %v1699, %v1747
        %1749 = vmatmul.bf16.gmra.mxu0 %v885
        %v1750 = vpop.f32.mrf.mxu0
        %v1751 = vadd.f32 %v1702, %v1750
        %v1752 = vpop.f32.mrf.mxu0
        %v1753 = vadd.f32 %v1704, %v1752
        %1754 = vmatmul.bf16.gmra.mxu0 %v892
        %v1755 = vpop.f32.mrf.mxu0
        %v1756 = vadd.f32 %v1707, %v1755
        %v1757 = vpop.f32.mrf.mxu0
        %v1758 = vadd.f32 %v1709, %v1757
        %1759 = vmatmul.bf16.gmra.mxu0 %v899
        %v1760 = vpop.f32.mrf.mxu0
        %v1761 = vadd.f32 %v1712, %v1760
        %v1762 = vpop.f32.mrf.mxu0
        %v1763 = vadd.f32 %v1714, %v1762
        %1764 = vmatmul.bf16.gmra.mxu0 %v906
        %v1765 = vpop.f32.mrf.mxu0
        %v1766 = vadd.f32 %v1717, %v1765
        %v1767 = vpop.f32.mrf.mxu0
        %v1768 = vadd.f32 %v1719, %v1767
        %1769 = vdwg.mxu0
        %1770 = vmatpush.bf16.msra.mxu0 %v1395
        %1771 = vmatpush.bf16.msra.mxu0 %v1393
        %1772 = vmatpush.bf16.msra.mxu0 %v1391
        %1773 = vmatpush.bf16.msra.mxu0 %v1389
        %1774 = vmatpush.bf16.msra.mxu0 %v1387
        %1775 = vmatpush.bf16.msra.mxu0 %v1385
        %1776 = vmatpush.bf16.msra.mxu0 %v1383
        %1777 = vmatpush.bf16.msra.mxu0 %v1381
        %1778 = vmatmul.bf16.gmra.mxu0 %v858
        %v1779 = vpop.f32.mrf.mxu0
        %v1780 = vadd.f32 %v1731, %v1779
        %v1781 = vpop.f32.mrf.mxu0
        %v1782 = vadd.f32 %v1733, %v1781
        %1783 = vmatmul.bf16.gmra.mxu0 %v865
        %v1784 = vpop.f32.mrf.mxu0
        %v1785 = vadd.f32 %v1736, %v1784
        %v1786 = vpop.f32.mrf.mxu0
        %v1787 = vadd.f32 %v1738, %v1786
        %1788 = vmatmul.bf16.gmra.mxu0 %v872
        %v1789 = vpop.f32.mrf.mxu0
        %v1790 = vadd.f32 %v1741, %v1789
        %v1791 = vpop.f32.mrf.mxu0
        %v1792 = vadd.f32 %v1743, %v1791
        %1793 = vmatmul.bf16.gmra.mxu0 %v879
        %v1794 = vpop.f32.mrf.mxu0
        %v1795 = vadd.f32 %v1746, %v1794
        %v1796 = vpop.f32.mrf.mxu0
        %v1797 = vadd.f32 %v1748, %v1796
        %1798 = vmatmul.bf16.gmra.mxu0 %v886
        %v1799 = vpop.f32.mrf.mxu0
        %v1800 = vadd.f32 %v1751, %v1799
        %v1801 = vpop.f32.mrf.mxu0
        %v1802 = vadd.f32 %v1753, %v1801
        %1803 = vmatmul.bf16.gmra.mxu0 %v893
        %v1804 = vpop.f32.mrf.mxu0
        %v1805 = vadd.f32 %v1756, %v1804
        %v1806 = vpop.f32.mrf.mxu0
        %v1807 = vadd.f32 %v1758, %v1806
        %1808 = vmatmul.bf16.gmra.mxu0 %v900
        %v1809 = vpop.f32.mrf.mxu0
        %v1810 = vadd.f32 %v1761, %v1809
        %v1811 = vpop.f32.mrf.mxu0
        %v1812 = vadd.f32 %v1763, %v1811
        %1813 = vmatmul.bf16.gmra.mxu0 %v907
        %v1814 = vpop.f32.mrf.mxu0
        %v1815 = vadd.f32 %v1766, %v1814
        %v1816 = vpop.f32.mrf.mxu0
        %v1817 = vadd.f32 %v1768, %v1816
        %1818 = vdwg.mxu0
        %1819 = vmatpush.bf16.msra.mxu0 %v1411
        %1820 = vmatpush.bf16.msra.mxu0 %v1409
        %1821 = vmatpush.bf16.msra.mxu0 %v1407
        %1822 = vmatpush.bf16.msra.mxu0 %v1405
        %1823 = vmatpush.bf16.msra.mxu0 %v1403
        %1824 = vmatpush.bf16.msra.mxu0 %v1401
        %1825 = vmatpush.bf16.msra.mxu0 %v1399
        %1826 = vmatpush.bf16.msra.mxu0 %v1397
        %1827 = vmatmul.bf16.gmra.mxu0 %v859
        %v1828 = vpop.f32.mrf.mxu0
        %v1829 = vadd.f32 %v1780, %v1828
        %v1830 = vpop.f32.mrf.mxu0
        %v1831 = vadd.f32 %v1782, %v1830
        %1832 = vmatmul.bf16.gmra.mxu0 %v866
        %v1833 = vpop.f32.mrf.mxu0
        %v1834 = vadd.f32 %v1785, %v1833
        %v1835 = vpop.f32.mrf.mxu0
        %v1836 = vadd.f32 %v1787, %v1835
        %1837 = vmatmul.bf16.gmra.mxu0 %v873
        %v1838 = vpop.f32.mrf.mxu0
        %v1839 = vadd.f32 %v1790, %v1838
        %v1840 = vpop.f32.mrf.mxu0
        %v1841 = vadd.f32 %v1792, %v1840
        %1842 = vmatmul.bf16.gmra.mxu0 %v880
        %v1843 = vpop.f32.mrf.mxu0
        %v1844 = vadd.f32 %v1795, %v1843
        %v1845 = vpop.f32.mrf.mxu0
        %v1846 = vadd.f32 %v1797, %v1845
        %1847 = vmatmul.bf16.gmra.mxu0 %v887
        %v1848 = vpop.f32.mrf.mxu0
        %v1849 = vadd.f32 %v1800, %v1848
        %v1850 = vpop.f32.mrf.mxu0
        %v1851 = vadd.f32 %v1802, %v1850
        %1852 = vmatmul.bf16.gmra.mxu0 %v894
        %v1853 = vpop.f32.mrf.mxu0
        %v1854 = vadd.f32 %v1805, %v1853
        %v1855 = vpop.f32.mrf.mxu0
        %v1856 = vadd.f32 %v1807, %v1855
        %1857 = vmatmul.bf16.gmra.mxu0 %v901
        %v1858 = vpop.f32.mrf.mxu0
        %v1859 = vadd.f32 %v1810, %v1858
        %v1860 = vpop.f32.mrf.mxu0
        %v1861 = vadd.f32 %v1812, %v1860
        %1862 = vmatmul.bf16.gmra.mxu0 %v908
        %v1863 = vpop.f32.mrf.mxu0
        %v1864 = vadd.f32 %v1815, %v1863
        %v1865 = vpop.f32.mrf.mxu0
        %v1866 = vadd.f32 %v1817, %v1865
        %1867 = vdwg.mxu0
        %1868 = vmatpush.bf16.msra.mxu0 %v1316
        %1869 = vmatpush.bf16.msra.mxu0 %v1314
        %1870 = vmatpush.bf16.msra.mxu0 %v1312
        %1871 = vmatpush.bf16.msra.mxu0 %v1310
        %1872 = vmatpush.bf16.msra.mxu0 %v1308
        %1873 = vmatpush.bf16.msra.mxu0 %v1306
        %1874 = vmatpush.bf16.msra.mxu0 %v1304
        %1875 = vmatpush.bf16.msra.mxu0 %v1302
        %1876 = vmatmul.bf16.gmra.mxu0 %v853
        %v1877 = vpop.f32.mrf.mxu0
        %v1878 = vadd.f32 %v674, %v1877
        %v1879 = vpop.f32.mrf.mxu0
        %v1880 = vadd.f32 %v674, %v1879
        %1881 = vmatmul.bf16.gmra.mxu0 %v860
        %v1882 = vpop.f32.mrf.mxu0
        %v1883 = vadd.f32 %v674, %v1882
        %v1884 = vpop.f32.mrf.mxu0
        %v1885 = vadd.f32 %v674, %v1884
        %1886 = vmatmul.bf16.gmra.mxu0 %v867
        %v1887 = vpop.f32.mrf.mxu0
        %v1888 = vadd.f32 %v674, %v1887
        %v1889 = vpop.f32.mrf.mxu0
        %v1890 = vadd.f32 %v674, %v1889
        %1891 = vmatmul.bf16.gmra.mxu0 %v874
        %v1892 = vpop.f32.mrf.mxu0
        %v1893 = vadd.f32 %v674, %v1892
        %v1894 = vpop.f32.mrf.mxu0
        %v1895 = vadd.f32 %v674, %v1894
        %1896 = vmatmul.bf16.gmra.mxu0 %v881
        %v1897 = vpop.f32.mrf.mxu0
        %v1898 = vadd.f32 %v674, %v1897
        %v1899 = vpop.f32.mrf.mxu0
        %v1900 = vadd.f32 %v674, %v1899
        %1901 = vmatmul.bf16.gmra.mxu0 %v888
        %v1902 = vpop.f32.mrf.mxu0
        %v1903 = vadd.f32 %v674, %v1902
        %v1904 = vpop.f32.mrf.mxu0
        %v1905 = vadd.f32 %v674, %v1904
        %1906 = vmatmul.bf16.gmra.mxu0 %v895
        %v1907 = vpop.f32.mrf.mxu0
        %v1908 = vadd.f32 %v674, %v1907
        %v1909 = vpop.f32.mrf.mxu0
        %v1910 = vadd.f32 %v674, %v1909
        %1911 = vmatmul.bf16.gmra.mxu0 %v902
        %v1912 = vpop.f32.mrf.mxu0
        %v1913 = vadd.f32 %v674, %v1912
        %v1914 = vpop.f32.mrf.mxu0
        %v1915 = vadd.f32 %v674, %v1914
        %1916 = vdwg.mxu0
        %1917 = vmatpush.bf16.msra.mxu0 %v1332
        %1918 = vmatpush.bf16.msra.mxu0 %v1330
        %1919 = vmatpush.bf16.msra.mxu0 %v1328
        %1920 = vmatpush.bf16.msra.mxu0 %v1326
        %1921 = vmatpush.bf16.msra.mxu0 %v1324
        %1922 = vmatpush.bf16.msra.mxu0 %v1322
        %1923 = vmatpush.bf16.msra.mxu0 %v1320
        %1924 = vmatpush.bf16.msra.mxu0 %v1318
        %1925 = vmatmul.bf16.gmra.mxu0 %v854
        %v1926 = vpop.f32.mrf.mxu0
        %v1927 = vadd.f32 %v1878, %v1926
        %v1928 = vpop.f32.mrf.mxu0
        %v1929 = vadd.f32 %v1880, %v1928
        %1930 = vmatmul.bf16.gmra.mxu0 %v861
        %v1931 = vpop.f32.mrf.mxu0
        %v1932 = vadd.f32 %v1883, %v1931
        %v1933 = vpop.f32.mrf.mxu0
        %v1934 = vadd.f32 %v1885, %v1933
        %1935 = vmatmul.bf16.gmra.mxu0 %v868
        %v1936 = vpop.f32.mrf.mxu0
        %v1937 = vadd.f32 %v1888, %v1936
        %v1938 = vpop.f32.mrf.mxu0
        %v1939 = vadd.f32 %v1890, %v1938
        %1940 = vmatmul.bf16.gmra.mxu0 %v875
        %v1941 = vpop.f32.mrf.mxu0
        %v1942 = vadd.f32 %v1893, %v1941
        %v1943 = vpop.f32.mrf.mxu0
        %v1944 = vadd.f32 %v1895, %v1943
        %1945 = vmatmul.bf16.gmra.mxu0 %v882
        %v1946 = vpop.f32.mrf.mxu0
        %v1947 = vadd.f32 %v1898, %v1946
        %v1948 = vpop.f32.mrf.mxu0
        %v1949 = vadd.f32 %v1900, %v1948
        %1950 = vmatmul.bf16.gmra.mxu0 %v889
        %v1951 = vpop.f32.mrf.mxu0
        %v1952 = vadd.f32 %v1903, %v1951
        %v1953 = vpop.f32.mrf.mxu0
        %v1954 = vadd.f32 %v1905, %v1953
        %1955 = vmatmul.bf16.gmra.mxu0 %v896
        %v1956 = vpop.f32.mrf.mxu0
        %v1957 = vadd.f32 %v1908, %v1956
        %v1958 = vpop.f32.mrf.mxu0
        %v1959 = vadd.f32 %v1910, %v1958
        %1960 = vmatmul.bf16.gmra.mxu0 %v903
        %v1961 = vpop.f32.mrf.mxu0
        %v1962 = vadd.f32 %v1913, %v1961
        %v1963 = vpop.f32.mrf.mxu0
        %v1964 = vadd.f32 %v1915, %v1963
        %1965 = vdwg.mxu0
        %1966 = vmatpush.bf16.msra.mxu0 %v1348
        %1967 = vmatpush.bf16.msra.mxu0 %v1346
        %1968 = vmatpush.bf16.msra.mxu0 %v1344
        %1969 = vmatpush.bf16.msra.mxu0 %v1342
        %1970 = vmatpush.bf16.msra.mxu0 %v1340
        %1971 = vmatpush.bf16.msra.mxu0 %v1338
        %1972 = vmatpush.bf16.msra.mxu0 %v1336
        %1973 = vmatpush.bf16.msra.mxu0 %v1334
        %1974 = vmatmul.bf16.gmra.mxu0 %v855
        %v1975 = vpop.f32.mrf.mxu0
        %v1976 = vadd.f32 %v1927, %v1975
        %v1977 = vpop.f32.mrf.mxu0
        %v1978 = vadd.f32 %v1929, %v1977
        %1979 = vmatmul.bf16.gmra.mxu0 %v862
        %v1980 = vpop.f32.mrf.mxu0
        %v1981 = vadd.f32 %v1932, %v1980
        %v1982 = vpop.f32.mrf.mxu0
        %v1983 = vadd.f32 %v1934, %v1982
        %1984 = vmatmul.bf16.gmra.mxu0 %v869
        %v1985 = vpop.f32.mrf.mxu0
        %v1986 = vadd.f32 %v1937, %v1985
        %v1987 = vpop.f32.mrf.mxu0
        %v1988 = vadd.f32 %v1939, %v1987
        %1989 = vmatmul.bf16.gmra.mxu0 %v876
        %v1990 = vpop.f32.mrf.mxu0
        %v1991 = vadd.f32 %v1942, %v1990
        %v1992 = vpop.f32.mrf.mxu0
        %v1993 = vadd.f32 %v1944, %v1992
        %1994 = vmatmul.bf16.gmra.mxu0 %v883
        %v1995 = vpop.f32.mrf.mxu0
        %v1996 = vadd.f32 %v1947, %v1995
        %v1997 = vpop.f32.mrf.mxu0
        %v1998 = vadd.f32 %v1949, %v1997
        %1999 = vmatmul.bf16.gmra.mxu0 %v890
        %v2000 = vpop.f32.mrf.mxu0
        %v2001 = vadd.f32 %v1952, %v2000
        %v2002 = vpop.f32.mrf.mxu0
        %v2003 = vadd.f32 %v1954, %v2002
        %2004 = vmatmul.bf16.gmra.mxu0 %v897
        %v2005 = vpop.f32.mrf.mxu0
        %v2006 = vadd.f32 %v1957, %v2005
        %v2007 = vpop.f32.mrf.mxu0
        %v2008 = vadd.f32 %v1959, %v2007
        %2009 = vmatmul.bf16.gmra.mxu0 %v904
        %v2010 = vpop.f32.mrf.mxu0
        %v2011 = vadd.f32 %v1962, %v2010
        %v2012 = vpop.f32.mrf.mxu0
        %v2013 = vadd.f32 %v1964, %v2012
        %2014 = vdwg.mxu0
        %2015 = vmatpush.bf16.msra.mxu0 %v1364
        %2016 = vmatpush.bf16.msra.mxu0 %v1362
        %2017 = vmatpush.bf16.msra.mxu0 %v1360
        %2018 = vmatpush.bf16.msra.mxu0 %v1358
        %2019 = vmatpush.bf16.msra.mxu0 %v1356
        %2020 = vmatpush.bf16.msra.mxu0 %v1354
        %2021 = vmatpush.bf16.msra.mxu0 %v1352
        %2022 = vmatpush.bf16.msra.mxu0 %v1350
        %2023 = vmatmul.bf16.gmra.mxu0 %v856
        %v2024 = vpop.f32.mrf.mxu0
        %v2025 = vadd.f32 %v1976, %v2024
        %v2026 = vpop.f32.mrf.mxu0
        %v2027 = vadd.f32 %v1978, %v2026
        %2028 = vmatmul.bf16.gmra.mxu0 %v863
        %v2029 = vpop.f32.mrf.mxu0
        %v2030 = vadd.f32 %v1981, %v2029
        %v2031 = vpop.f32.mrf.mxu0
        %v2032 = vadd.f32 %v1983, %v2031
        %2033 = vmatmul.bf16.gmra.mxu0 %v870
        %v2034 = vpop.f32.mrf.mxu0
        %v2035 = vadd.f32 %v1986, %v2034
        %v2036 = vpop.f32.mrf.mxu0
        %v2037 = vadd.f32 %v1988, %v2036
        %2038 = vmatmul.bf16.gmra.mxu0 %v877
        %v2039 = vpop.f32.mrf.mxu0
        %v2040 = vadd.f32 %v1991, %v2039
        %v2041 = vpop.f32.mrf.mxu0
        %v2042 = vadd.f32 %v1993, %v2041
        %2043 = vmatmul.bf16.gmra.mxu0 %v884
        %v2044 = vpop.f32.mrf.mxu0
        %v2045 = vadd.f32 %v1996, %v2044
        %v2046 = vpop.f32.mrf.mxu0
        %v2047 = vadd.f32 %v1998, %v2046
        %2048 = vmatmul.bf16.gmra.mxu0 %v891
        %v2049 = vpop.f32.mrf.mxu0
        %v2050 = vadd.f32 %v2001, %v2049
        %v2051 = vpop.f32.mrf.mxu0
        %v2052 = vadd.f32 %v2003, %v2051
        %2053 = vmatmul.bf16.gmra.mxu0 %v898
        %v2054 = vpop.f32.mrf.mxu0
        %v2055 = vadd.f32 %v2006, %v2054
        %v2056 = vpop.f32.mrf.mxu0
        %v2057 = vadd.f32 %v2008, %v2056
        %2058 = vmatmul.bf16.gmra.mxu0 %v905
        %v2059 = vpop.f32.mrf.mxu0
        %v2060 = vadd.f32 %v2011, %v2059
        %v2061 = vpop.f32.mrf.mxu0
        %v2062 = vadd.f32 %v2013, %v2061
        %2063 = vdwg.mxu0
        %2064 = vmatpush.bf16.msra.mxu0 %v1380
        %2065 = vmatpush.bf16.msra.mxu0 %v1378
        %2066 = vmatpush.bf16.msra.mxu0 %v1376
        %2067 = vmatpush.bf16.msra.mxu0 %v1374
        %2068 = vmatpush.bf16.msra.mxu0 %v1372
        %2069 = vmatpush.bf16.msra.mxu0 %v1370
        %2070 = vmatpush.bf16.msra.mxu0 %v1368
        %2071 = vmatpush.bf16.msra.mxu0 %v1366
        %2072 = vmatmul.bf16.gmra.mxu0 %v857
        %v2073 = vpop.f32.mrf.mxu0
        %v2074 = vadd.f32 %v2025, %v2073
        %v2075 = vpop.f32.mrf.mxu0
        %v2076 = vadd.f32 %v2027, %v2075
        %2077 = vmatmul.bf16.gmra.mxu0 %v864
        %v2078 = vpop.f32.mrf.mxu0
        %v2079 = vadd.f32 %v2030, %v2078
        %v2080 = vpop.f32.mrf.mxu0
        %v2081 = vadd.f32 %v2032, %v2080
        %2082 = vmatmul.bf16.gmra.mxu0 %v871
        %v2083 = vpop.f32.mrf.mxu0
        %v2084 = vadd.f32 %v2035, %v2083
        %v2085 = vpop.f32.mrf.mxu0
        %v2086 = vadd.f32 %v2037, %v2085
        %2087 = vmatmul.bf16.gmra.mxu0 %v878
        %v2088 = vpop.f32.mrf.mxu0
        %v2089 = vadd.f32 %v2040, %v2088
        %v2090 = vpop.f32.mrf.mxu0
        %v2091 = vadd.f32 %v2042, %v2090
        %2092 = vmatmul.bf16.gmra.mxu0 %v885
        %v2093 = vpop.f32.mrf.mxu0
        %v2094 = vadd.f32 %v2045, %v2093
        %v2095 = vpop.f32.mrf.mxu0
        %v2096 = vadd.f32 %v2047, %v2095
        %2097 = vmatmul.bf16.gmra.mxu0 %v892
        %v2098 = vpop.f32.mrf.mxu0
        %v2099 = vadd.f32 %v2050, %v2098
        %v2100 = vpop.f32.mrf.mxu0
        %v2101 = vadd.f32 %v2052, %v2100
        %2102 = vmatmul.bf16.gmra.mxu0 %v899
        %v2103 = vpop.f32.mrf.mxu0
        %v2104 = vadd.f32 %v2055, %v2103
        %v2105 = vpop.f32.mrf.mxu0
        %v2106 = vadd.f32 %v2057, %v2105
        %2107 = vmatmul.bf16.gmra.mxu0 %v906
        %v2108 = vpop.f32.mrf.mxu0
        %v2109 = vadd.f32 %v2060, %v2108
        %v2110 = vpop.f32.mrf.mxu0
        %v2111 = vadd.f32 %v2062, %v2110
        %2112 = vdwg.mxu0
        %2113 = vmatpush.bf16.msra.mxu0 %v1396
        %2114 = vmatpush.bf16.msra.mxu0 %v1394
        %2115 = vmatpush.bf16.msra.mxu0 %v1392
        %2116 = vmatpush.bf16.msra.mxu0 %v1390
        %2117 = vmatpush.bf16.msra.mxu0 %v1388
        %2118 = vmatpush.bf16.msra.mxu0 %v1386
        %2119 = vmatpush.bf16.msra.mxu0 %v1384
        %2120 = vmatpush.bf16.msra.mxu0 %v1382
        %2121 = vmatmul.bf16.gmra.mxu0 %v858
        %v2122 = vpop.f32.mrf.mxu0
        %v2123 = vadd.f32 %v2074, %v2122
        %v2124 = vpop.f32.mrf.mxu0
        %v2125 = vadd.f32 %v2076, %v2124
        %2126 = vmatmul.bf16.gmra.mxu0 %v865
        %v2127 = vpop.f32.mrf.mxu0
        %v2128 = vadd.f32 %v2079, %v2127
        %v2129 = vpop.f32.mrf.mxu0
        %v2130 = vadd.f32 %v2081, %v2129
        %2131 = vmatmul.bf16.gmra.mxu0 %v872
        %v2132 = vpop.f32.mrf.mxu0
        %v2133 = vadd.f32 %v2084, %v2132
        %v2134 = vpop.f32.mrf.mxu0
        %v2135 = vadd.f32 %v2086, %v2134
        %2136 = vmatmul.bf16.gmra.mxu0 %v879
        %v2137 = vpop.f32.mrf.mxu0
        %v2138 = vadd.f32 %v2089, %v2137
        %v2139 = vpop.f32.mrf.mxu0
        %v2140 = vadd.f32 %v2091, %v2139
        %2141 = vmatmul.bf16.gmra.mxu0 %v886
        %v2142 = vpop.f32.mrf.mxu0
        %v2143 = vadd.f32 %v2094, %v2142
        %v2144 = vpop.f32.mrf.mxu0
        %v2145 = vadd.f32 %v2096, %v2144
        %2146 = vmatmul.bf16.gmra.mxu0 %v893
        %v2147 = vpop.f32.mrf.mxu0
        %v2148 = vadd.f32 %v2099, %v2147
        %v2149 = vpop.f32.mrf.mxu0
        %v2150 = vadd.f32 %v2101, %v2149
        %2151 = vmatmul.bf16.gmra.mxu0 %v900
        %v2152 = vpop.f32.mrf.mxu0
        %v2153 = vadd.f32 %v2104, %v2152
        %v2154 = vpop.f32.mrf.mxu0
        %v2155 = vadd.f32 %v2106, %v2154
        %2156 = vmatmul.bf16.gmra.mxu0 %v907
        %v2157 = vpop.f32.mrf.mxu0
        %v2158 = vadd.f32 %v2109, %v2157
        %v2159 = vpop.f32.mrf.mxu0
        %v2160 = vadd.f32 %v2111, %v2159
        %2161 = vdwg.mxu0
        %2162 = vmatpush.bf16.msra.mxu0 %v1412
        %2163 = vmatpush.bf16.msra.mxu0 %v1410
        %2164 = vmatpush.bf16.msra.mxu0 %v1408
        %2165 = vmatpush.bf16.msra.mxu0 %v1406
        %2166 = vmatpush.bf16.msra.mxu0 %v1404
        %2167 = vmatpush.bf16.msra.mxu0 %v1402
        %2168 = vmatpush.bf16.msra.mxu0 %v1400
        %2169 = vmatpush.bf16.msra.mxu0 %v1398
        %2170 = vmatmul.bf16.gmra.mxu0 %v859
        %v2171 = vpop.f32.mrf.mxu0
        %v2172 = vadd.f32 %v2123, %v2171
        %v2173 = vpop.f32.mrf.mxu0
        %v2174 = vadd.f32 %v2125, %v2173
        %2175 = vmatmul.bf16.gmra.mxu0 %v866
        %v2176 = vpop.f32.mrf.mxu0
        %v2177 = vadd.f32 %v2128, %v2176
        %v2178 = vpop.f32.mrf.mxu0
        %v2179 = vadd.f32 %v2130, %v2178
        %2180 = vmatmul.bf16.gmra.mxu0 %v873
        %v2181 = vpop.f32.mrf.mxu0
        %v2182 = vadd.f32 %v2133, %v2181
        %v2183 = vpop.f32.mrf.mxu0
        %v2184 = vadd.f32 %v2135, %v2183
        %2185 = vmatmul.bf16.gmra.mxu0 %v880
        %v2186 = vpop.f32.mrf.mxu0
        %v2187 = vadd.f32 %v2138, %v2186
        %v2188 = vpop.f32.mrf.mxu0
        %v2189 = vadd.f32 %v2140, %v2188
        %2190 = vmatmul.bf16.gmra.mxu0 %v887
        %v2191 = vpop.f32.mrf.mxu0
        %v2192 = vadd.f32 %v2143, %v2191
        %v2193 = vpop.f32.mrf.mxu0
        %v2194 = vadd.f32 %v2145, %v2193
        %2195 = vmatmul.bf16.gmra.mxu0 %v894
        %v2196 = vpop.f32.mrf.mxu0
        %v2197 = vadd.f32 %v2148, %v2196
        %v2198 = vpop.f32.mrf.mxu0
        %v2199 = vadd.f32 %v2150, %v2198
        %2200 = vmatmul.bf16.gmra.mxu0 %v901
        %v2201 = vpop.f32.mrf.mxu0
        %v2202 = vadd.f32 %v2153, %v2201
        %v2203 = vpop.f32.mrf.mxu0
        %v2204 = vadd.f32 %v2155, %v2203
        %2205 = vmatmul.bf16.gmra.mxu0 %v908
        %v2206 = vpop.f32.mrf.mxu0
        %v2207 = vadd.f32 %v2158, %v2206
        %v2208 = vpop.f32.mrf.mxu0
        %v2209 = vadd.f32 %v2160, %v2208
        %2210 = vdwg.mxu0
        %v2211 = vmax.f32 %v1829, 0.0
        %v2212 = vmax.f32 %v2172, 0.0
        %v2213 = vmax.f32 %v1831, 0.0
        %v2214 = vmax.f32 %v2174, 0.0
        %v2215 = vmax.f32 %v1834, 0.0
        %v2216 = vmax.f32 %v2177, 0.0
        %v2217 = vmax.f32 %v1836, 0.0
        %v2218 = vmax.f32 %v2179, 0.0
        %v2219 = vmax.f32 %v1839, 0.0
        %v2220 = vmax.f32 %v2182, 0.0
        %v2221 = vmax.f32 %v1841, 0.0
        %v2222 = vmax.f32 %v2184, 0.0
        %v2223 = vmax.f32 %v1844, 0.0
        %v2224 = vmax.f32 %v2187, 0.0
        %v2225 = vmax.f32 %v1846, 0.0
        %v2226 = vmax.f32 %v2189, 0.0
        %v2227 = vmax.f32 %v1849, 0.0
        %v2228 = vmax.f32 %v2192, 0.0
        %v2229 = vmax.f32 %v1851, 0.0
        %v2230 = vmax.f32 %v2194, 0.0
        %v2231 = vmax.f32 %v1854, 0.0
        %v2232 = vmax.f32 %v2197, 0.0
        %v2233 = vmax.f32 %v1856, 0.0
        %v2234 = vmax.f32 %v2199, 0.0
        %v2235 = vmax.f32 %v1859, 0.0
        %v2236 = vmax.f32 %v2202, 0.0
        %v2237 = vmax.f32 %v1861, 0.0
        %v2238 = vmax.f32 %v2204, 0.0
        %v2239 = vmax.f32 %v1864, 0.0
        %v2240 = vmax.f32 %v2207, 0.0
        %v2241 = vmax.f32 %v1866, 0.0
        %v2242 = vmax.f32 %v2209, 0.0
        %v2259 = vrot.slane %v2212, 5
        %v2260 = vrot.slane %v2214, 5
        %v2261 = vrot.slane %v2216, 5
        %v2262 = vrot.slane %v2218, 5
        %v2263 = vrot.slane %v2220, 5
        %v2264 = vrot.slane %v2222, 5
        %v2265 = vrot.slane %v2224, 5
        %v2266 = vrot.slane %v2226, 5
        %v2267 = vrot.slane %v2228, 5
        %v2268 = vrot.slane %v2230, 5
        %v2269 = vrot.slane %v2232, 5
        %v2270 = vrot.slane %v2234, 5
        %v2271 = vrot.slane %v2236, 5
        %v2272 = vrot.slane %v2238, 5
        %v2273 = vrot.slane %v2240, 5
        %v2274 = vrot.slane %v2242, 5
        %vm2291 = vcmask 1042432
        %v2292 = vsel %vm2291, 0.0, %v2259
        %v2293 = vsel %vm2291, 0.0, %v2260
        %v2294 = vsel %vm2291, 0.0, %v2261
        %v2295 = vsel %vm2291, 0.0, %v2262
        %v2296 = vsel %vm2291, 0.0, %v2263
        %v2297 = vsel %vm2291, 0.0, %v2264
        %v2298 = vsel %vm2291, 0.0, %v2265
        %v2299 = vsel %vm2291, 0.0, %v2266
        %v2300 = vsel %vm2291, 0.0, %v2267
        %v2301 = vsel %vm2291, 0.0, %v2268
        %v2302 = vsel %vm2291, 0.0, %v2269
        %v2303 = vsel %vm2291, 0.0, %v2270
        %v2304 = vsel %vm2291, 0.0, %v2271
        %v2305 = vsel %vm2291, 0.0, %v2272
        %v2306 = vsel %vm2291, 0.0, %v2273
        %v2307 = vsel %vm2291, 0.0, %v2274
        %v2308 = vsel %vm2291, %v2259, 0.0
        %v2309 = vsel %vm2291, %v2260, 0.0
        %v2310 = vsel %vm2291, %v2261, 0.0
        %v2311 = vsel %vm2291, %v2262, 0.0
        %v2312 = vsel %vm2291, %v2263, 0.0
        %v2313 = vsel %vm2291, %v2264, 0.0
        %v2314 = vsel %vm2291, %v2265, 0.0
        %v2315 = vsel %vm2291, %v2266, 0.0
        %v2316 = vsel %vm2291, %v2267, 0.0
        %v2317 = vsel %vm2291, %v2268, 0.0
        %v2318 = vsel %vm2291, %v2269, 0.0
        %v2319 = vsel %vm2291, %v2270, 0.0
        %v2320 = vsel %vm2291, %v2271, 0.0
        %v2321 = vsel %vm2291, %v2272, 0.0
        %v2322 = vsel %vm2291, %v2273, 0.0
        %v2323 = vsel %vm2291, %v2274, 0.0
        %v2324 = vpack.c.bf16 %v2293, %v2292
        %v2325 = vpack.c.bf16 %v2295, %v2294
        %v2326 = vpack.c.bf16 %v2297, %v2296
        %v2327 = vpack.c.bf16 %v2299, %v2298
        %v2328 = vpack.c.bf16 %v2301, %v2300
        %v2329 = vpack.c.bf16 %v2303, %v2302
        %v2330 = vpack.c.bf16 %v2305, %v2304
        %v2331 = vpack.c.bf16 %v2307, %v2306
        %v2332 = vld [vmem:[#allocation8] sm:$0xf]
        %v2333 = vld [vmem:[#allocation8 + $0x4] sm:$0xf]
        %v2334 = vld [vmem:[#allocation8 + $0x8] sm:$0xf]
        %v2335 = vld [vmem:[#allocation8 + $0xc] sm:$0xf]
        %v2336 = vld [vmem:[#allocation8 + $0x10] sm:$0xf]
        %v2337 = vld [vmem:[#allocation8 + $0x14] sm:$0xf]
        %v2338 = vld [vmem:[#allocation8 + $0x18] sm:$0xf]
        %v2339 = vld [vmem:[#allocation8 + $0x1c] sm:$0xf]
        %v2340 = vld [vmem:[#allocation8 + $0x20] sm:$0xf]
        %v2341 = vld [vmem:[#allocation8 + $0x24] sm:$0xf]
        %v2342 = vld [vmem:[#allocation8 + $0x28] sm:$0xf]
        %v2343 = vld [vmem:[#allocation8 + $0x2c] sm:$0xf]
        %v2344 = vld [vmem:[#allocation8 + $0x30] sm:$0xf]
        %v2345 = vld [vmem:[#allocation8 + $0x34] sm:$0xf]
        %v2346 = vld [vmem:[#allocation8 + $0x38] sm:$0xf]
        %v2347 = vld [vmem:[#allocation8 + $0x3c] sm:$0xf]
        %vm2380 = vcmask 1046528
        %v2381 = vrot.slane %v2292, 1
        %v2382 = vrot.slane %v2308, 1
        %v2383 = vsel %vm2380, %v2381, %v2382
        %v2384 = vrot.slane %v2293, 1
        %v2385 = vrot.slane %v2309, 1
        %v2386 = vsel %vm2380, %v2384, %v2385
        %v2387 = vrot.slane %v2294, 1
        %v2388 = vrot.slane %v2310, 1
        %v2389 = vsel %vm2380, %v2387, %v2388
        %v2390 = vrot.slane %v2295, 1
        %v2391 = vrot.slane %v2311, 1
        %v2392 = vsel %vm2380, %v2390, %v2391
        %v2393 = vrot.slane %v2296, 1
        %v2394 = vrot.slane %v2312, 1
        %v2395 = vsel %vm2380, %v2393, %v2394
        %v2396 = vrot.slane %v2297, 1
        %v2397 = vrot.slane %v2313, 1
        %v2398 = vsel %vm2380, %v2396, %v2397
        %v2399 = vrot.slane %v2298, 1
        %v2400 = vrot.slane %v2314, 1
        %v2401 = vsel %vm2380, %v2399, %v2400
        %v2402 = vrot.slane %v2299, 1
        %v2403 = vrot.slane %v2315, 1
        %v2404 = vsel %vm2380, %v2402, %v2403
        %v2405 = vrot.slane %v2300, 1
        %v2406 = vrot.slane %v2316, 1
        %v2407 = vsel %vm2380, %v2405, %v2406
        %v2408 = vrot.slane %v2301, 1
        %v2409 = vrot.slane %v2317, 1
        %v2410 = vsel %vm2380, %v2408, %v2409
        %v2411 = vrot.slane %v2302, 1
        %v2412 = vrot.slane %v2318, 1
        %v2413 = vsel %vm2380, %v2411, %v2412
        %v2414 = vrot.slane %v2303, 1
        %v2415 = vrot.slane %v2319, 1
        %v2416 = vsel %vm2380, %v2414, %v2415
        %v2417 = vrot.slane %v2304, 1
        %v2418 = vrot.slane %v2320, 1
        %v2419 = vsel %vm2380, %v2417, %v2418
        %v2420 = vrot.slane %v2305, 1
        %v2421 = vrot.slane %v2321, 1
        %v2422 = vsel %vm2380, %v2420, %v2421
        %v2423 = vrot.slane %v2306, 1
        %v2424 = vrot.slane %v2322, 1
        %v2425 = vsel %vm2380, %v2423, %v2424
        %v2426 = vrot.slane %v2307, 1
        %v2427 = vrot.slane %v2323, 1
        %v2428 = vsel %vm2380, %v2426, %v2427
        %v2445 = vpack.c.bf16 %v2386, %v2383
        %v2446 = vpack.c.bf16 %v2392, %v2389
        %v2447 = vpack.c.bf16 %v2398, %v2395
        %v2448 = vpack.c.bf16 %v2404, %v2401
        %v2449 = vpack.c.bf16 %v2410, %v2407
        %v2450 = vpack.c.bf16 %v2416, %v2413
        %v2451 = vpack.c.bf16 %v2422, %v2419
        %v2452 = vpack.c.bf16 %v2428, %v2425
        %s2453 = scalar_lea.vmem [#allocation8], 64
        %v2454 = vld [vmem:[%s2453] sm:$0xf]
        %v2455 = vld [vmem:[%s2453 + $0x4] sm:$0xf]
        %v2456 = vld [vmem:[%s2453 + $0x8] sm:$0xf]
        %v2457 = vld [vmem:[%s2453 + $0xc] sm:$0xf]
        %v2458 = vld [vmem:[%s2453 + $0x10] sm:$0xf]
        %v2459 = vld [vmem:[%s2453 + $0x14] sm:$0xf]
        %v2460 = vld [vmem:[%s2453 + $0x18] sm:$0xf]
        %v2461 = vld [vmem:[%s2453 + $0x1c] sm:$0xf]
        %v2462 = vld [vmem:[%s2453 + $0x20] sm:$0xf]
        %v2463 = vld [vmem:[%s2453 + $0x24] sm:$0xf]
        %v2464 = vld [vmem:[%s2453 + $0x28] sm:$0xf]
        %v2465 = vld [vmem:[%s2453 + $0x2c] sm:$0xf]
        %v2466 = vld [vmem:[%s2453 + $0x30] sm:$0xf]
        %v2467 = vld [vmem:[%s2453 + $0x34] sm:$0xf]
        %v2468 = vld [vmem:[%s2453 + $0x38] sm:$0xf]
        %v2469 = vld [vmem:[%s2453 + $0x3c] sm:$0xf]
        %v2486 = vunpack.c.l.b16 %v2454
        %v2487 = vunpack.c.l.b16 %v2455
        %v2488 = vunpack.c.l.b16 %v2456
        %v2489 = vunpack.c.l.b16 %v2457
        %v2490 = vunpack.c.l.b16 %v2458
        %v2491 = vunpack.c.l.b16 %v2459
        %v2492 = vunpack.c.l.b16 %v2460
        %v2493 = vunpack.c.l.b16 %v2461
        %v2494 = vunpack.c.l.b16 %v2462
        %v2495 = vunpack.c.l.b16 %v2463
        %v2496 = vunpack.c.l.b16 %v2464
        %v2497 = vunpack.c.l.b16 %v2465
        %v2498 = vunpack.c.l.b16 %v2466
        %v2499 = vunpack.c.l.b16 %v2467
        %v2500 = vunpack.c.l.b16 %v2468
        %v2501 = vunpack.c.l.b16 %v2469
        %v2502 = vpack.c.b16 %v2487, %v2486
        %v2503 = vpack.c.b16 %v2489, %v2488
        %v2504 = vpack.c.b16 %v2491, %v2490
        %v2505 = vpack.c.b16 %v2493, %v2492
        %v2506 = vpack.c.b16 %v2495, %v2494
        %v2507 = vpack.c.b16 %v2497, %v2496
        %v2508 = vpack.c.b16 %v2499, %v2498
        %v2509 = vpack.c.b16 %v2501, %v2500
        %2518 = vmatpush.bf16.msra.mxu0 %v2509
        %2519 = vmatpush.bf16.msra.mxu0 %v2508
        %2520 = vmatpush.bf16.msra.mxu0 %v2507
        %2521 = vmatpush.bf16.msra.mxu0 %v2506
        %2522 = vmatpush.bf16.msra.mxu0 %v2505
        %2523 = vmatpush.bf16.msra.mxu0 %v2504
        %2524 = vmatpush.bf16.msra.mxu0 %v2503
        %2525 = vmatpush.bf16.msra.mxu0 %v2502
        %2526 = vmatmul.bf16.gmra.mxu0 %v2445
        %v2527 = vpop.f32.mrf.mxu0
        %v2528 = vadd.f32 0.0, %v2527
        %v2529 = vpop.f32.mrf.mxu0
        %v2530 = vadd.f32 0.0, %v2529
        %2531 = vmatmul.bf16.gmra.mxu0 %v2446
        %v2532 = vpop.f32.mrf.mxu0
        %v2533 = vadd.f32 0.0, %v2532
        %v2534 = vpop.f32.mrf.mxu0
        %v2535 = vadd.f32 0.0, %v2534
        %2536 = vmatmul.bf16.gmra.mxu0 %v2447
        %v2537 = vpop.f32.mrf.mxu0
        %v2538 = vadd.f32 0.0, %v2537
        %v2539 = vpop.f32.mrf.mxu0
        %v2540 = vadd.f32 0.0, %v2539
        %2541 = vmatmul.bf16.gmra.mxu0 %v2448
        %v2542 = vpop.f32.mrf.mxu0
        %v2543 = vadd.f32 0.0, %v2542
        %v2544 = vpop.f32.mrf.mxu0
        %v2545 = vadd.f32 0.0, %v2544
        %2546 = vmatmul.bf16.gmra.mxu0 %v2449
        %v2547 = vpop.f32.mrf.mxu0
        %v2548 = vadd.f32 0.0, %v2547
        %v2549 = vpop.f32.mrf.mxu0
        %v2550 = vadd.f32 0.0, %v2549
        %2551 = vmatmul.bf16.gmra.mxu0 %v2450
        %v2552 = vpop.f32.mrf.mxu0
        %v2553 = vadd.f32 0.0, %v2552
        %v2554 = vpop.f32.mrf.mxu0
        %v2555 = vadd.f32 0.0, %v2554
        %2556 = vmatmul.bf16.gmra.mxu0 %v2451
        %v2557 = vpop.f32.mrf.mxu0
        %v2558 = vadd.f32 0.0, %v2557
        %v2559 = vpop.f32.mrf.mxu0
        %v2560 = vadd.f32 0.0, %v2559
        %2561 = vmatmul.bf16.gmra.mxu0 %v2452
        %v2562 = vpop.f32.mrf.mxu0
        %v2563 = vadd.f32 0.0, %v2562
        %v2564 = vpop.f32.mrf.mxu0
        %v2565 = vadd.f32 0.0, %v2564
        %2566 = vdwg.mxu0
        %v2583 = vunpack.c.l.b16 %v2332
        %v2584 = vunpack.c.l.b16 %v2333
        %v2585 = vunpack.c.l.b16 %v2334
        %v2586 = vunpack.c.l.b16 %v2335
        %v2587 = vunpack.c.l.b16 %v2336
        %v2588 = vunpack.c.l.b16 %v2337
        %v2589 = vunpack.c.l.b16 %v2338
        %v2590 = vunpack.c.l.b16 %v2339
        %v2591 = vunpack.c.l.b16 %v2340
        %v2592 = vunpack.c.l.b16 %v2341
        %v2593 = vunpack.c.l.b16 %v2342
        %v2594 = vunpack.c.l.b16 %v2343
        %v2595 = vunpack.c.l.b16 %v2344
        %v2596 = vunpack.c.l.b16 %v2345
        %v2597 = vunpack.c.l.b16 %v2346
        %v2598 = vunpack.c.l.b16 %v2347
        %v2599 = vpack.c.b16 %v2584, %v2583
        %v2600 = vpack.c.b16 %v2586, %v2585
        %v2601 = vpack.c.b16 %v2588, %v2587
        %v2602 = vpack.c.b16 %v2590, %v2589
        %v2603 = vpack.c.b16 %v2592, %v2591
        %v2604 = vpack.c.b16 %v2594, %v2593
        %v2605 = vpack.c.b16 %v2596, %v2595
        %v2606 = vpack.c.b16 %v2598, %v2597
        %2615 = vmatpush.bf16.msra.mxu0 %v2606
        %2616 = vmatpush.bf16.msra.mxu0 %v2605
        %2617 = vmatpush.bf16.msra.mxu0 %v2604
        %2618 = vmatpush.bf16.msra.mxu0 %v2603
        %2619 = vmatpush.bf16.msra.mxu0 %v2602
        %2620 = vmatpush.bf16.msra.mxu0 %v2601
        %2621 = vmatpush.bf16.msra.mxu0 %v2600
        %2622 = vmatpush.bf16.msra.mxu0 %v2599
        %2623 = vmatmul.bf16.gmra.mxu0 %v2324
        %v2624 = vpop.f32.mrf.mxu0
        %v2625 = vadd.f32 %v2528, %v2624
        %v2626 = vpop.f32.mrf.mxu0
        %v2627 = vadd.f32 %v2530, %v2626
        %2628 = vmatmul.bf16.gmra.mxu0 %v2325
        %v2629 = vpop.f32.mrf.mxu0
        %v2630 = vadd.f32 %v2533, %v2629
        %v2631 = vpop.f32.mrf.mxu0
        %v2632 = vadd.f32 %v2535, %v2631
        %2633 = vmatmul.bf16.gmra.mxu0 %v2326
        %v2634 = vpop.f32.mrf.mxu0
        %v2635 = vadd.f32 %v2538, %v2634
        %v2636 = vpop.f32.mrf.mxu0
        %v2637 = vadd.f32 %v2540, %v2636
        %2638 = vmatmul.bf16.gmra.mxu0 %v2327
        %v2639 = vpop.f32.mrf.mxu0
        %v2640 = vadd.f32 %v2543, %v2639
        %v2641 = vpop.f32.mrf.mxu0
        %v2642 = vadd.f32 %v2545, %v2641
        %2643 = vmatmul.bf16.gmra.mxu0 %v2328
        %v2644 = vpop.f32.mrf.mxu0
        %v2645 = vadd.f32 %v2548, %v2644
        %v2646 = vpop.f32.mrf.mxu0
        %v2647 = vadd.f32 %v2550, %v2646
        %2648 = vmatmul.bf16.gmra.mxu0 %v2329
        %v2649 = vpop.f32.mrf.mxu0
        %v2650 = vadd.f32 %v2553, %v2649
        %v2651 = vpop.f32.mrf.mxu0
        %v2652 = vadd.f32 %v2555, %v2651
        %2653 = vmatmul.bf16.gmra.mxu0 %v2330
        %v2654 = vpop.f32.mrf.mxu0
        %v2655 = vadd.f32 %v2558, %v2654
        %v2656 = vpop.f32.mrf.mxu0
        %v2657 = vadd.f32 %v2560, %v2656
        %2658 = vmatmul.bf16.gmra.mxu0 %v2331
        %v2659 = vpop.f32.mrf.mxu0
        %v2660 = vadd.f32 %v2563, %v2659
        %v2661 = vpop.f32.mrf.mxu0
        %v2662 = vadd.f32 %v2565, %v2661
        %2663 = vdwg.mxu0
        %vm2664 = vcmask 1045504
        %v2665 = vrot.slane %v2292, 2
        %v2666 = vrot.slane %v2308, 2
        %v2667 = vsel %vm2664, %v2665, %v2666
        %v2668 = vrot.slane %v2293, 2
        %v2669 = vrot.slane %v2309, 2
        %v2670 = vsel %vm2664, %v2668, %v2669
        %v2671 = vrot.slane %v2294, 2
        %v2672 = vrot.slane %v2310, 2
        %v2673 = vsel %vm2664, %v2671, %v2672
        %v2674 = vrot.slane %v2295, 2
        %v2675 = vrot.slane %v2311, 2
        %v2676 = vsel %vm2664, %v2674, %v2675
        %v2677 = vrot.slane %v2296, 2
        %v2678 = vrot.slane %v2312, 2
        %v2679 = vsel %vm2664, %v2677, %v2678
        %v2680 = vrot.slane %v2297, 2
        %v2681 = vrot.slane %v2313, 2
        %v2682 = vsel %vm2664, %v2680, %v2681
        %v2683 = vrot.slane %v2298, 2
        %v2684 = vrot.slane %v2314, 2
        %v2685 = vsel %vm2664, %v2683, %v2684
        %v2686 = vrot.slane %v2299, 2
        %v2687 = vrot.slane %v2315, 2
        %v2688 = vsel %vm2664, %v2686, %v2687
        %v2689 = vrot.slane %v2300, 2
        %v2690 = vrot.slane %v2316, 2
        %v2691 = vsel %vm2664, %v2689, %v2690
        %v2692 = vrot.slane %v2301, 2
        %v2693 = vrot.slane %v2317, 2
        %v2694 = vsel %vm2664, %v2692, %v2693
        %v2695 = vrot.slane %v2302, 2
        %v2696 = vrot.slane %v2318, 2
        %v2697 = vsel %vm2664, %v2695, %v2696
        %v2698 = vrot.slane %v2303, 2
        %v2699 = vrot.slane %v2319, 2
        %v2700 = vsel %vm2664, %v2698, %v2699
        %v2701 = vrot.slane %v2304, 2
        %v2702 = vrot.slane %v2320, 2
        %v2703 = vsel %vm2664, %v2701, %v2702
        %v2704 = vrot.slane %v2305, 2
        %v2705 = vrot.slane %v2321, 2
        %v2706 = vsel %vm2664, %v2704, %v2705
        %v2707 = vrot.slane %v2306, 2
        %v2708 = vrot.slane %v2322, 2
        %v2709 = vsel %vm2664, %v2707, %v2708
        %v2710 = vrot.slane %v2307, 2
        %v2711 = vrot.slane %v2323, 2
        %v2712 = vsel %vm2664, %v2710, %v2711
        %v2729 = vpack.c.bf16 %v2670, %v2667
        %v2730 = vpack.c.bf16 %v2676, %v2673
        %v2731 = vpack.c.bf16 %v2682, %v2679
        %v2732 = vpack.c.bf16 %v2688, %v2685
        %v2733 = vpack.c.bf16 %v2694, %v2691
        %v2734 = vpack.c.bf16 %v2700, %v2697
        %v2735 = vpack.c.bf16 %v2706, %v2703
        %v2736 = vpack.c.bf16 %v2712, %v2709
        %s2737 = scalar_lea.vmem [#allocation8], 128
        %v2738 = vld [vmem:[%s2737] sm:$0xf]
        %v2739 = vld [vmem:[%s2737 + $0x4] sm:$0xf]
        %v2740 = vld [vmem:[%s2737 + $0x8] sm:$0xf]
        %v2741 = vld [vmem:[%s2737 + $0xc] sm:$0xf]
        %v2742 = vld [vmem:[%s2737 + $0x10] sm:$0xf]
        %v2743 = vld [vmem:[%s2737 + $0x14] sm:$0xf]
        %v2744 = vld [vmem:[%s2737 + $0x18] sm:$0xf]
        %v2745 = vld [vmem:[%s2737 + $0x1c] sm:$0xf]
        %v2746 = vld [vmem:[%s2737 + $0x20] sm:$0xf]
        %v2747 = vld [vmem:[%s2737 + $0x24] sm:$0xf]
        %v2748 = vld [vmem:[%s2737 + $0x28] sm:$0xf]
        %v2749 = vld [vmem:[%s2737 + $0x2c] sm:$0xf]
        %v2750 = vld [vmem:[%s2737 + $0x30] sm:$0xf]
        %v2751 = vld [vmem:[%s2737 + $0x34] sm:$0xf]
        %v2752 = vld [vmem:[%s2737 + $0x38] sm:$0xf]
        %v2753 = vld [vmem:[%s2737 + $0x3c] sm:$0xf]
        %v2770 = vunpack.c.l.b16 %v2738
        %v2771 = vunpack.c.l.b16 %v2739
        %v2772 = vunpack.c.l.b16 %v2740
        %v2773 = vunpack.c.l.b16 %v2741
        %v2774 = vunpack.c.l.b16 %v2742
        %v2775 = vunpack.c.l.b16 %v2743
        %v2776 = vunpack.c.l.b16 %v2744
        %v2777 = vunpack.c.l.b16 %v2745
        %v2778 = vunpack.c.l.b16 %v2746
        %v2779 = vunpack.c.l.b16 %v2747
        %v2780 = vunpack.c.l.b16 %v2748
        %v2781 = vunpack.c.l.b16 %v2749
        %v2782 = vunpack.c.l.b16 %v2750
        %v2783 = vunpack.c.l.b16 %v2751
        %v2784 = vunpack.c.l.b16 %v2752
        %v2785 = vunpack.c.l.b16 %v2753
        %v2786 = vpack.c.b16 %v2771, %v2770
        %v2787 = vpack.c.b16 %v2773, %v2772
        %v2788 = vpack.c.b16 %v2775, %v2774
        %v2789 = vpack.c.b16 %v2777, %v2776
        %v2790 = vpack.c.b16 %v2779, %v2778
        %v2791 = vpack.c.b16 %v2781, %v2780
        %v2792 = vpack.c.b16 %v2783, %v2782
        %v2793 = vpack.c.b16 %v2785, %v2784
        %2802 = vmatpush.bf16.msra.mxu0 %v2793
        %2803 = vmatpush.bf16.msra.mxu0 %v2792
        %2804 = vmatpush.bf16.msra.mxu0 %v2791
        %2805 = vmatpush.bf16.msra.mxu0 %v2790
        %2806 = vmatpush.bf16.msra.mxu0 %v2789
        %2807 = vmatpush.bf16.msra.mxu0 %v2788
        %2808 = vmatpush.bf16.msra.mxu0 %v2787
        %2809 = vmatpush.bf16.msra.mxu0 %v2786
        %2810 = vmatmul.bf16.gmra.mxu0 %v2729
        %v2811 = vpop.f32.mrf.mxu0
        %v2812 = vadd.f32 0.0, %v2811
        %v2813 = vpop.f32.mrf.mxu0
        %v2814 = vadd.f32 0.0, %v2813
        %2815 = vmatmul.bf16.gmra.mxu0 %v2730
        %v2816 = vpop.f32.mrf.mxu0
        %v2817 = vadd.f32 0.0, %v2816
        %v2818 = vpop.f32.mrf.mxu0
        %v2819 = vadd.f32 0.0, %v2818
        %2820 = vmatmul.bf16.gmra.mxu0 %v2731
        %v2821 = vpop.f32.mrf.mxu0
        %v2822 = vadd.f32 0.0, %v2821
        %v2823 = vpop.f32.mrf.mxu0
        %v2824 = vadd.f32 0.0, %v2823
        %2825 = vmatmul.bf16.gmra.mxu0 %v2732
        %v2826 = vpop.f32.mrf.mxu0
        %v2827 = vadd.f32 0.0, %v2826
        %v2828 = vpop.f32.mrf.mxu0
        %v2829 = vadd.f32 0.0, %v2828
        %2830 = vmatmul.bf16.gmra.mxu0 %v2733
        %v2831 = vpop.f32.mrf.mxu0
        %v2832 = vadd.f32 0.0, %v2831
        %v2833 = vpop.f32.mrf.mxu0
        %v2834 = vadd.f32 0.0, %v2833
        %2835 = vmatmul.bf16.gmra.mxu0 %v2734
        %v2836 = vpop.f32.mrf.mxu0
        %v2837 = vadd.f32 0.0, %v2836
        %v2838 = vpop.f32.mrf.mxu0
        %v2839 = vadd.f32 0.0, %v2838
        %2840 = vmatmul.bf16.gmra.mxu0 %v2735
        %v2841 = vpop.f32.mrf.mxu0
        %v2842 = vadd.f32 0.0, %v2841
        %v2843 = vpop.f32.mrf.mxu0
        %v2844 = vadd.f32 0.0, %v2843
        %2845 = vmatmul.bf16.gmra.mxu0 %v2736
        %v2846 = vpop.f32.mrf.mxu0
        %v2847 = vadd.f32 0.0, %v2846
        %v2848 = vpop.f32.mrf.mxu0
        %v2849 = vadd.f32 0.0, %v2848
        %2850 = vdwg.mxu0
        %v2851 = vadd.f32 %v2625, %v2812
        %v2852 = vadd.f32 %v2627, %v2814
        %v2853 = vadd.f32 %v2630, %v2817
        %v2854 = vadd.f32 %v2632, %v2819
        %v2855 = vadd.f32 %v2635, %v2822
        %v2856 = vadd.f32 %v2637, %v2824
        %v2857 = vadd.f32 %v2640, %v2827
        %v2858 = vadd.f32 %v2642, %v2829
        %v2859 = vadd.f32 %v2645, %v2832
        %v2860 = vadd.f32 %v2647, %v2834
        %v2861 = vadd.f32 %v2650, %v2837
        %v2862 = vadd.f32 %v2652, %v2839
        %v2863 = vadd.f32 %v2655, %v2842
        %v2864 = vadd.f32 %v2657, %v2844
        %v2865 = vadd.f32 %v2660, %v2847
        %v2866 = vadd.f32 %v2662, %v2849
        %vm2867 = vcmask 1044480
        %v2868 = vrot.slane %v2292, 3
        %v2869 = vrot.slane %v2308, 3
        %v2870 = vsel %vm2867, %v2868, %v2869
        %v2871 = vrot.slane %v2293, 3
        %v2872 = vrot.slane %v2309, 3
        %v2873 = vsel %vm2867, %v2871, %v2872
        %v2874 = vrot.slane %v2294, 3
        %v2875 = vrot.slane %v2310, 3
        %v2876 = vsel %vm2867, %v2874, %v2875
        %v2877 = vrot.slane %v2295, 3
        %v2878 = vrot.slane %v2311, 3
        %v2879 = vsel %vm2867, %v2877, %v2878
        %v2880 = vrot.slane %v2296, 3
        %v2881 = vrot.slane %v2312, 3
        %v2882 = vsel %vm2867, %v2880, %v2881
        %v2883 = vrot.slane %v2297, 3
        %v2884 = vrot.slane %v2313, 3
        %v2885 = vsel %vm2867, %v2883, %v2884
        %v2886 = vrot.slane %v2298, 3
        %v2887 = vrot.slane %v2314, 3
        %v2888 = vsel %vm2867, %v2886, %v2887
        %v2889 = vrot.slane %v2299, 3
        %v2890 = vrot.slane %v2315, 3
        %v2891 = vsel %vm2867, %v2889, %v2890
        %v2892 = vrot.slane %v2300, 3
        %v2893 = vrot.slane %v2316, 3
        %v2894 = vsel %vm2867, %v2892, %v2893
        %v2895 = vrot.slane %v2301, 3
        %v2896 = vrot.slane %v2317, 3
        %v2897 = vsel %vm2867, %v2895, %v2896
        %v2898 = vrot.slane %v2302, 3
        %v2899 = vrot.slane %v2318, 3
        %v2900 = vsel %vm2867, %v2898, %v2899
        %v2901 = vrot.slane %v2303, 3
        %v2902 = vrot.slane %v2319, 3
        %v2903 = vsel %vm2867, %v2901, %v2902
        %v2904 = vrot.slane %v2304, 3
        %v2905 = vrot.slane %v2320, 3
        %v2906 = vsel %vm2867, %v2904, %v2905
        %v2907 = vrot.slane %v2305, 3
        %v2908 = vrot.slane %v2321, 3
        %v2909 = vsel %vm2867, %v2907, %v2908
        %v2910 = vrot.slane %v2306, 3
        %v2911 = vrot.slane %v2322, 3
        %v2912 = vsel %vm2867, %v2910, %v2911
        %v2913 = vrot.slane %v2307, 3
        %v2914 = vrot.slane %v2323, 3
        %v2915 = vsel %vm2867, %v2913, %v2914
        %v2932 = vpack.c.bf16 %v2873, %v2870
        %v2933 = vpack.c.bf16 %v2879, %v2876
        %v2934 = vpack.c.bf16 %v2885, %v2882
        %v2935 = vpack.c.bf16 %v2891, %v2888
        %v2936 = vpack.c.bf16 %v2897, %v2894
        %v2937 = vpack.c.bf16 %v2903, %v2900
        %v2938 = vpack.c.bf16 %v2909, %v2906
        %v2939 = vpack.c.bf16 %v2915, %v2912
        %s2940 = scalar_lea.vmem [#allocation8], 192
        %v2941 = vld [vmem:[%s2940] sm:$0xf]
        %v2942 = vld [vmem:[%s2940 + $0x4] sm:$0xf]
        %v2943 = vld [vmem:[%s2940 + $0x8] sm:$0xf]
        %v2944 = vld [vmem:[%s2940 + $0xc] sm:$0xf]
        %v2945 = vld [vmem:[%s2940 + $0x10] sm:$0xf]
        %v2946 = vld [vmem:[%s2940 + $0x14] sm:$0xf]
        %v2947 = vld [vmem:[%s2940 + $0x18] sm:$0xf]
        %v2948 = vld [vmem:[%s2940 + $0x1c] sm:$0xf]
        %v2949 = vld [vmem:[%s2940 + $0x20] sm:$0xf]
        %v2950 = vld [vmem:[%s2940 + $0x24] sm:$0xf]
        %v2951 = vld [vmem:[%s2940 + $0x28] sm:$0xf]
        %v2952 = vld [vmem:[%s2940 + $0x2c] sm:$0xf]
        %v2953 = vld [vmem:[%s2940 + $0x30] sm:$0xf]
        %v2954 = vld [vmem:[%s2940 + $0x34] sm:$0xf]
        %v2955 = vld [vmem:[%s2940 + $0x38] sm:$0xf]
        %v2956 = vld [vmem:[%s2940 + $0x3c] sm:$0xf]
        %v2973 = vunpack.c.l.b16 %v2941
        %v2974 = vunpack.c.l.b16 %v2942
        %v2975 = vunpack.c.l.b16 %v2943
        %v2976 = vunpack.c.l.b16 %v2944
        %v2977 = vunpack.c.l.b16 %v2945
        %v2978 = vunpack.c.l.b16 %v2946
        %v2979 = vunpack.c.l.b16 %v2947
        %v2980 = vunpack.c.l.b16 %v2948
        %v2981 = vunpack.c.l.b16 %v2949
        %v2982 = vunpack.c.l.b16 %v2950
        %v2983 = vunpack.c.l.b16 %v2951
        %v2984 = vunpack.c.l.b16 %v2952
        %v2985 = vunpack.c.l.b16 %v2953
        %v2986 = vunpack.c.l.b16 %v2954
        %v2987 = vunpack.c.l.b16 %v2955
        %v2988 = vunpack.c.l.b16 %v2956
        %v2989 = vpack.c.b16 %v2974, %v2973
        %v2990 = vpack.c.b16 %v2976, %v2975
        %v2991 = vpack.c.b16 %v2978, %v2977
        %v2992 = vpack.c.b16 %v2980, %v2979
        %v2993 = vpack.c.b16 %v2982, %v2981
        %v2994 = vpack.c.b16 %v2984, %v2983
        %v2995 = vpack.c.b16 %v2986, %v2985
        %v2996 = vpack.c.b16 %v2988, %v2987
        %3005 = vmatpush.bf16.msra.mxu0 %v2996
        %3006 = vmatpush.bf16.msra.mxu0 %v2995
        %3007 = vmatpush.bf16.msra.mxu0 %v2994
        %3008 = vmatpush.bf16.msra.mxu0 %v2993
        %3009 = vmatpush.bf16.msra.mxu0 %v2992
        %3010 = vmatpush.bf16.msra.mxu0 %v2991
        %3011 = vmatpush.bf16.msra.mxu0 %v2990
        %3012 = vmatpush.bf16.msra.mxu0 %v2989
        %3013 = vmatmul.bf16.gmra.mxu0 %v2932
        %v3014 = vpop.f32.mrf.mxu0
        %v3015 = vadd.f32 0.0, %v3014
        %v3016 = vpop.f32.mrf.mxu0
        %v3017 = vadd.f32 0.0, %v3016
        %3018 = vmatmul.bf16.gmra.mxu0 %v2933
        %v3019 = vpop.f32.mrf.mxu0
        %v3020 = vadd.f32 0.0, %v3019
        %v3021 = vpop.f32.mrf.mxu0
        %v3022 = vadd.f32 0.0, %v3021
        %3023 = vmatmul.bf16.gmra.mxu0 %v2934
        %v3024 = vpop.f32.mrf.mxu0
        %v3025 = vadd.f32 0.0, %v3024
        %v3026 = vpop.f32.mrf.mxu0
        %v3027 = vadd.f32 0.0, %v3026
        %3028 = vmatmul.bf16.gmra.mxu0 %v2935
        %v3029 = vpop.f32.mrf.mxu0
        %v3030 = vadd.f32 0.0, %v3029
        %v3031 = vpop.f32.mrf.mxu0
        %v3032 = vadd.f32 0.0, %v3031
        %3033 = vmatmul.bf16.gmra.mxu0 %v2936
        %v3034 = vpop.f32.mrf.mxu0
        %v3035 = vadd.f32 0.0, %v3034
        %v3036 = vpop.f32.mrf.mxu0
        %v3037 = vadd.f32 0.0, %v3036
        %3038 = vmatmul.bf16.gmra.mxu0 %v2937
        %v3039 = vpop.f32.mrf.mxu0
        %v3040 = vadd.f32 0.0, %v3039
        %v3041 = vpop.f32.mrf.mxu0
        %v3042 = vadd.f32 0.0, %v3041
        %3043 = vmatmul.bf16.gmra.mxu0 %v2938
        %v3044 = vpop.f32.mrf.mxu0
        %v3045 = vadd.f32 0.0, %v3044
        %v3046 = vpop.f32.mrf.mxu0
        %v3047 = vadd.f32 0.0, %v3046
        %3048 = vmatmul.bf16.gmra.mxu0 %v2939
        %v3049 = vpop.f32.mrf.mxu0
        %v3050 = vadd.f32 0.0, %v3049
        %v3051 = vpop.f32.mrf.mxu0
        %v3052 = vadd.f32 0.0, %v3051
        %3053 = vdwg.mxu0
        %v3054 = vadd.f32 %v2851, %v3015
        %v3055 = vadd.f32 %v2852, %v3017
        %v3056 = vadd.f32 %v2853, %v3020
        %v3057 = vadd.f32 %v2854, %v3022
        %v3058 = vadd.f32 %v2855, %v3025
        %v3059 = vadd.f32 %v2856, %v3027
        %v3060 = vadd.f32 %v2857, %v3030
        %v3061 = vadd.f32 %v2858, %v3032
        %v3062 = vadd.f32 %v2859, %v3035
        %v3063 = vadd.f32 %v2860, %v3037
        %v3064 = vadd.f32 %v2861, %v3040
        %v3065 = vadd.f32 %v2862, %v3042
        %v3066 = vadd.f32 %v2863, %v3045
        %v3067 = vadd.f32 %v2864, %v3047
        %v3068 = vadd.f32 %v2865, %v3050
        %v3069 = vadd.f32 %v2866, %v3052
        %vm3070 = vcmask 1043456
        %v3071 = vrot.slane %v2292, 4
        %v3072 = vrot.slane %v2308, 4
        %v3073 = vsel %vm3070, %v3071, %v3072
        %v3074 = vrot.slane %v2293, 4
        %v3075 = vrot.slane %v2309, 4
        %v3076 = vsel %vm3070, %v3074, %v3075
        %v3077 = vrot.slane %v2294, 4
        %v3078 = vrot.slane %v2310, 4
        %v3079 = vsel %vm3070, %v3077, %v3078
        %v3080 = vrot.slane %v2295, 4
        %v3081 = vrot.slane %v2311, 4
        %v3082 = vsel %vm3070, %v3080, %v3081
        %v3083 = vrot.slane %v2296, 4
        %v3084 = vrot.slane %v2312, 4
        %v3085 = vsel %vm3070, %v3083, %v3084
        %v3086 = vrot.slane %v2297, 4
        %v3087 = vrot.slane %v2313, 4
        %v3088 = vsel %vm3070, %v3086, %v3087
        %v3089 = vrot.slane %v2298, 4
        %v3090 = vrot.slane %v2314, 4
        %v3091 = vsel %vm3070, %v3089, %v3090
        %v3092 = vrot.slane %v2299, 4
        %v3093 = vrot.slane %v2315, 4
        %v3094 = vsel %vm3070, %v3092, %v3093
        %v3095 = vrot.slane %v2300, 4
        %v3096 = vrot.slane %v2316, 4
        %v3097 = vsel %vm3070, %v3095, %v3096
        %v3098 = vrot.slane %v2301, 4
        %v3099 = vrot.slane %v2317, 4
        %v3100 = vsel %vm3070, %v3098, %v3099
        %v3101 = vrot.slane %v2302, 4
        %v3102 = vrot.slane %v2318, 4
        %v3103 = vsel %vm3070, %v3101, %v3102
        %v3104 = vrot.slane %v2303, 4
        %v3105 = vrot.slane %v2319, 4
        %v3106 = vsel %vm3070, %v3104, %v3105
        %v3107 = vrot.slane %v2304, 4
        %v3108 = vrot.slane %v2320, 4
        %v3109 = vsel %vm3070, %v3107, %v3108
        %v3110 = vrot.slane %v2305, 4
        %v3111 = vrot.slane %v2321, 4
        %v3112 = vsel %vm3070, %v3110, %v3111
        %v3113 = vrot.slane %v2306, 4
        %v3114 = vrot.slane %v2322, 4
        %v3115 = vsel %vm3070, %v3113, %v3114
        %v3116 = vrot.slane %v2307, 4
        %v3117 = vrot.slane %v2323, 4
        %v3118 = vsel %vm3070, %v3116, %v3117
        %v3135 = vpack.c.bf16 %v3076, %v3073
        %v3136 = vpack.c.bf16 %v3082, %v3079
        %v3137 = vpack.c.bf16 %v3088, %v3085
        %v3138 = vpack.c.bf16 %v3094, %v3091
        %v3139 = vpack.c.bf16 %v3100, %v3097
        %v3140 = vpack.c.bf16 %v3106, %v3103
        %v3141 = vpack.c.bf16 %v3112, %v3109
        %v3142 = vpack.c.bf16 %v3118, %v3115
        %s3143 = scalar_lea.vmem [#allocation8], 256
        %v3144 = vld [vmem:[%s3143] sm:$0xf]
        %v3145 = vld [vmem:[%s3143 + $0x4] sm:$0xf]
        %v3146 = vld [vmem:[%s3143 + $0x8] sm:$0xf]
        %v3147 = vld [vmem:[%s3143 + $0xc] sm:$0xf]
        %v3148 = vld [vmem:[%s3143 + $0x10] sm:$0xf]
        %v3149 = vld [vmem:[%s3143 + $0x14] sm:$0xf]
        %v3150 = vld [vmem:[%s3143 + $0x18] sm:$0xf]
        %v3151 = vld [vmem:[%s3143 + $0x1c] sm:$0xf]
        %v3152 = vld [vmem:[%s3143 + $0x20] sm:$0xf]
        %v3153 = vld [vmem:[%s3143 + $0x24] sm:$0xf]
        %v3154 = vld [vmem:[%s3143 + $0x28] sm:$0xf]
        %v3155 = vld [vmem:[%s3143 + $0x2c] sm:$0xf]
        %v3156 = vld [vmem:[%s3143 + $0x30] sm:$0xf]
        %v3157 = vld [vmem:[%s3143 + $0x34] sm:$0xf]
        %v3158 = vld [vmem:[%s3143 + $0x38] sm:$0xf]
        %v3159 = vld [vmem:[%s3143 + $0x3c] sm:$0xf]
        %v3176 = vunpack.c.l.b16 %v3144
        %v3177 = vunpack.c.l.b16 %v3145
        %v3178 = vunpack.c.l.b16 %v3146
        %v3179 = vunpack.c.l.b16 %v3147
        %v3180 = vunpack.c.l.b16 %v3148
        %v3181 = vunpack.c.l.b16 %v3149
        %v3182 = vunpack.c.l.b16 %v3150
        %v3183 = vunpack.c.l.b16 %v3151
        %v3184 = vunpack.c.l.b16 %v3152
        %v3185 = vunpack.c.l.b16 %v3153
        %v3186 = vunpack.c.l.b16 %v3154
        %v3187 = vunpack.c.l.b16 %v3155
        %v3188 = vunpack.c.l.b16 %v3156
        %v3189 = vunpack.c.l.b16 %v3157
        %v3190 = vunpack.c.l.b16 %v3158
        %v3191 = vunpack.c.l.b16 %v3159
        %v3192 = vpack.c.b16 %v3177, %v3176
        %v3193 = vpack.c.b16 %v3179, %v3178
        %v3194 = vpack.c.b16 %v3181, %v3180
        %v3195 = vpack.c.b16 %v3183, %v3182
        %v3196 = vpack.c.b16 %v3185, %v3184
        %v3197 = vpack.c.b16 %v3187, %v3186
        %v3198 = vpack.c.b16 %v3189, %v3188
        %v3199 = vpack.c.b16 %v3191, %v3190
        %3208 = vmatpush.bf16.msra.mxu0 %v3199
        %3209 = vmatpush.bf16.msra.mxu0 %v3198
        %3210 = vmatpush.bf16.msra.mxu0 %v3197
        %3211 = vmatpush.bf16.msra.mxu0 %v3196
        %3212 = vmatpush.bf16.msra.mxu0 %v3195
        %3213 = vmatpush.bf16.msra.mxu0 %v3194
        %3214 = vmatpush.bf16.msra.mxu0 %v3193
        %3215 = vmatpush.bf16.msra.mxu0 %v3192
        %3216 = vmatmul.bf16.gmra.mxu0 %v3135
        %v3217 = vpop.f32.mrf.mxu0
        %v3218 = vadd.f32 0.0, %v3217
        %v3219 = vpop.f32.mrf.mxu0
        %v3220 = vadd.f32 0.0, %v3219
        %3221 = vmatmul.bf16.gmra.mxu0 %v3136
        %v3222 = vpop.f32.mrf.mxu0
        %v3223 = vadd.f32 0.0, %v3222
        %v3224 = vpop.f32.mrf.mxu0
        %v3225 = vadd.f32 0.0, %v3224
        %3226 = vmatmul.bf16.gmra.mxu0 %v3137
        %v3227 = vpop.f32.mrf.mxu0
        %v3228 = vadd.f32 0.0, %v3227
        %v3229 = vpop.f32.mrf.mxu0
        %v3230 = vadd.f32 0.0, %v3229
        %3231 = vmatmul.bf16.gmra.mxu0 %v3138
        %v3232 = vpop.f32.mrf.mxu0
        %v3233 = vadd.f32 0.0, %v3232
        %v3234 = vpop.f32.mrf.mxu0
        %v3235 = vadd.f32 0.0, %v3234
        %3236 = vmatmul.bf16.gmra.mxu0 %v3139
        %v3237 = vpop.f32.mrf.mxu0
        %v3238 = vadd.f32 0.0, %v3237
        %v3239 = vpop.f32.mrf.mxu0
        %v3240 = vadd.f32 0.0, %v3239
        %3241 = vmatmul.bf16.gmra.mxu0 %v3140
        %v3242 = vpop.f32.mrf.mxu0
        %v3243 = vadd.f32 0.0, %v3242
        %v3244 = vpop.f32.mrf.mxu0
        %v3245 = vadd.f32 0.0, %v3244
        %3246 = vmatmul.bf16.gmra.mxu0 %v3141
        %v3247 = vpop.f32.mrf.mxu0
        %v3248 = vadd.f32 0.0, %v3247
        %v3249 = vpop.f32.mrf.mxu0
        %v3250 = vadd.f32 0.0, %v3249
        %3251 = vmatmul.bf16.gmra.mxu0 %v3142
        %v3252 = vpop.f32.mrf.mxu0
        %v3253 = vadd.f32 0.0, %v3252
        %v3254 = vpop.f32.mrf.mxu0
        %v3255 = vadd.f32 0.0, %v3254
        %3256 = vdwg.mxu0
        %v3257 = vadd.f32 %v3054, %v3218
        %v3258 = vadd.f32 %v3055, %v3220
        %v3259 = vadd.f32 %v3056, %v3223
        %v3260 = vadd.f32 %v3057, %v3225
        %v3261 = vadd.f32 %v3058, %v3228
        %v3262 = vadd.f32 %v3059, %v3230
        %v3263 = vadd.f32 %v3060, %v3233
        %v3264 = vadd.f32 %v3061, %v3235
        %v3265 = vadd.f32 %v3062, %v3238
        %v3266 = vadd.f32 %v3063, %v3240
        %v3267 = vadd.f32 %v3064, %v3243
        %v3268 = vadd.f32 %v3065, %v3245
        %v3269 = vadd.f32 %v3066, %v3248
        %v3270 = vadd.f32 %v3067, %v3250
        %v3271 = vadd.f32 %v3068, %v3253
        %v3272 = vadd.f32 %v3069, %v3255
        %v3273 = vrot.slane %v2292, 5
        %v3274 = vrot.slane %v2308, 5
        %v3275 = vsel %vm2291, %v3273, %v3274
        %v3276 = vrot.slane %v2293, 5
        %v3277 = vrot.slane %v2309, 5
        %v3278 = vsel %vm2291, %v3276, %v3277
        %v3279 = vrot.slane %v2294, 5
        %v3280 = vrot.slane %v2310, 5
        %v3281 = vsel %vm2291, %v3279, %v3280
        %v3282 = vrot.slane %v2295, 5
        %v3283 = vrot.slane %v2311, 5
        %v3284 = vsel %vm2291, %v3282, %v3283
        %v3285 = vrot.slane %v2296, 5
        %v3286 = vrot.slane %v2312, 5
        %v3287 = vsel %vm2291, %v3285, %v3286
        %v3288 = vrot.slane %v2297, 5
        %v3289 = vrot.slane %v2313, 5
        %v3290 = vsel %vm2291, %v3288, %v3289
        %v3291 = vrot.slane %v2298, 5
        %v3292 = vrot.slane %v2314, 5
        %v3293 = vsel %vm2291, %v3291, %v3292
        %v3294 = vrot.slane %v2299, 5
        %v3295 = vrot.slane %v2315, 5
        %v3296 = vsel %vm2291, %v3294, %v3295
        %v3297 = vrot.slane %v2300, 5
        %v3298 = vrot.slane %v2316, 5
        %v3299 = vsel %vm2291, %v3297, %v3298
        %v3300 = vrot.slane %v2301, 5
        %v3301 = vrot.slane %v2317, 5
        %v3302 = vsel %vm2291, %v3300, %v3301
        %v3303 = vrot.slane %v2302, 5
        %v3304 = vrot.slane %v2318, 5
        %v3305 = vsel %vm2291, %v3303, %v3304
        %v3306 = vrot.slane %v2303, 5
        %v3307 = vrot.slane %v2319, 5
        %v3308 = vsel %vm2291, %v3306, %v3307
        %v3309 = vrot.slane %v2304, 5
        %v3310 = vrot.slane %v2320, 5
        %v3311 = vsel %vm2291, %v3309, %v3310
        %v3312 = vrot.slane %v2305, 5
        %v3313 = vrot.slane %v2321, 5
        %v3314 = vsel %vm2291, %v3312, %v3313
        %v3315 = vrot.slane %v2306, 5
        %v3316 = vrot.slane %v2322, 5
        %v3317 = vsel %vm2291, %v3315, %v3316
        %v3318 = vrot.slane %v2307, 5
        %v3319 = vrot.slane %v2323, 5
        %v3320 = vsel %vm2291, %v3318, %v3319
        %v3337 = vpack.c.bf16 %v3278, %v3275
        %v3338 = vpack.c.bf16 %v3284, %v3281
        %v3339 = vpack.c.bf16 %v3290, %v3287
        %v3340 = vpack.c.bf16 %v3296, %v3293
        %v3341 = vpack.c.bf16 %v3302, %v3299
        %v3342 = vpack.c.bf16 %v3308, %v3305
        %v3343 = vpack.c.bf16 %v3314, %v3311
        %v3344 = vpack.c.bf16 %v3320, %v3317
        %s3345 = scalar_lea.vmem [#allocation8], 320
        %v3346 = vld [vmem:[%s3345] sm:$0xf]
        %v3347 = vld [vmem:[%s3345 + $0x4] sm:$0xf]
        %v3348 = vld [vmem:[%s3345 + $0x8] sm:$0xf]
        %v3349 = vld [vmem:[%s3345 + $0xc] sm:$0xf]
        %v3350 = vld [vmem:[%s3345 + $0x10] sm:$0xf]
        %v3351 = vld [vmem:[%s3345 + $0x14] sm:$0xf]
        %v3352 = vld [vmem:[%s3345 + $0x18] sm:$0xf]
        %v3353 = vld [vmem:[%s3345 + $0x1c] sm:$0xf]
        %v3354 = vld [vmem:[%s3345 + $0x20] sm:$0xf]
        %v3355 = vld [vmem:[%s3345 + $0x24] sm:$0xf]
        %v3356 = vld [vmem:[%s3345 + $0x28] sm:$0xf]
        %v3357 = vld [vmem:[%s3345 + $0x2c] sm:$0xf]
        %v3358 = vld [vmem:[%s3345 + $0x30] sm:$0xf]
        %v3359 = vld [vmem:[%s3345 + $0x34] sm:$0xf]
        %v3360 = vld [vmem:[%s3345 + $0x38] sm:$0xf]
        %v3361 = vld [vmem:[%s3345 + $0x3c] sm:$0xf]
        %v3378 = vunpack.c.l.b16 %v3346
        %v3379 = vunpack.c.l.b16 %v3347
        %v3380 = vunpack.c.l.b16 %v3348
        %v3381 = vunpack.c.l.b16 %v3349
        %v3382 = vunpack.c.l.b16 %v3350
        %v3383 = vunpack.c.l.b16 %v3351
        %v3384 = vunpack.c.l.b16 %v3352
        %v3385 = vunpack.c.l.b16 %v3353
        %v3386 = vunpack.c.l.b16 %v3354
        %v3387 = vunpack.c.l.b16 %v3355
        %v3388 = vunpack.c.l.b16 %v3356
        %v3389 = vunpack.c.l.b16 %v3357
        %v3390 = vunpack.c.l.b16 %v3358
        %v3391 = vunpack.c.l.b16 %v3359
        %v3392 = vunpack.c.l.b16 %v3360
        %v3393 = vunpack.c.l.b16 %v3361
        %v3394 = vpack.c.b16 %v3379, %v3378
        %v3395 = vpack.c.b16 %v3381, %v3380
        %v3396 = vpack.c.b16 %v3383, %v3382
        %v3397 = vpack.c.b16 %v3385, %v3384
        %v3398 = vpack.c.b16 %v3387, %v3386
        %v3399 = vpack.c.b16 %v3389, %v3388
        %v3400 = vpack.c.b16 %v3391, %v3390
        %v3401 = vpack.c.b16 %v3393, %v3392
        %3410 = vmatpush.bf16.msra.mxu0 %v3401
        %3411 = vmatpush.bf16.msra.mxu0 %v3400
        %3412 = vmatpush.bf16.msra.mxu0 %v3399
        %3413 = vmatpush.bf16.msra.mxu0 %v3398
        %3414 = vmatpush.bf16.msra.mxu0 %v3397
        %3415 = vmatpush.bf16.msra.mxu0 %v3396
        %3416 = vmatpush.bf16.msra.mxu0 %v3395
        %3417 = vmatpush.bf16.msra.mxu0 %v3394
        %3418 = vmatmul.bf16.gmra.mxu0 %v3337
        %v3419 = vpop.f32.mrf.mxu0
        %v3420 = vadd.f32 0.0, %v3419
        %v3421 = vpop.f32.mrf.mxu0
        %v3422 = vadd.f32 0.0, %v3421
        %3423 = vmatmul.bf16.gmra.mxu0 %v3338
        %v3424 = vpop.f32.mrf.mxu0
        %v3425 = vadd.f32 0.0, %v3424
        %v3426 = vpop.f32.mrf.mxu0
        %v3427 = vadd.f32 0.0, %v3426
        %3428 = vmatmul.bf16.gmra.mxu0 %v3339
        %v3429 = vpop.f32.mrf.mxu0
        %v3430 = vadd.f32 0.0, %v3429
        %v3431 = vpop.f32.mrf.mxu0
        %v3432 = vadd.f32 0.0, %v3431
        %3433 = vmatmul.bf16.gmra.mxu0 %v3340
        %v3434 = vpop.f32.mrf.mxu0
        %v3435 = vadd.f32 0.0, %v3434
        %v3436 = vpop.f32.mrf.mxu0
        %v3437 = vadd.f32 0.0, %v3436
        %3438 = vmatmul.bf16.gmra.mxu0 %v3341
        %v3439 = vpop.f32.mrf.mxu0
        %v3440 = vadd.f32 0.0, %v3439
        %v3441 = vpop.f32.mrf.mxu0
        %v3442 = vadd.f32 0.0, %v3441
        %3443 = vmatmul.bf16.gmra.mxu0 %v3342
        %v3444 = vpop.f32.mrf.mxu0
        %v3445 = vadd.f32 0.0, %v3444
        %v3446 = vpop.f32.mrf.mxu0
        %v3447 = vadd.f32 0.0, %v3446
        %3448 = vmatmul.bf16.gmra.mxu0 %v3343
        %v3449 = vpop.f32.mrf.mxu0
        %v3450 = vadd.f32 0.0, %v3449
        %v3451 = vpop.f32.mrf.mxu0
        %v3452 = vadd.f32 0.0, %v3451
        %3453 = vmatmul.bf16.gmra.mxu0 %v3344
        %v3454 = vpop.f32.mrf.mxu0
        %v3455 = vadd.f32 0.0, %v3454
        %v3456 = vpop.f32.mrf.mxu0
        %v3457 = vadd.f32 0.0, %v3456
        %3458 = vdwg.mxu0
        %v3459 = vadd.f32 %v3257, %v3420
        %v3460 = vadd.f32 %v3258, %v3422
        %v3461 = vadd.f32 %v3259, %v3425
        %v3462 = vadd.f32 %v3260, %v3427
        %v3463 = vadd.f32 %v3261, %v3430
        %v3464 = vadd.f32 %v3262, %v3432
        %v3465 = vadd.f32 %v3263, %v3435
        %v3466 = vadd.f32 %v3264, %v3437
        %v3467 = vadd.f32 %v3265, %v3440
        %v3468 = vadd.f32 %v3266, %v3442
        %v3469 = vadd.f32 %v3267, %v3445
        %v3470 = vadd.f32 %v3268, %v3447
        %v3471 = vadd.f32 %v3269, %v3450
        %v3472 = vadd.f32 %v3270, %v3452
        %v3473 = vadd.f32 %v3271, %v3455
        %v3474 = vadd.f32 %v3272, %v3457
        %vm3475 = vcmask 1041408
        %v3476 = vrot.slane %v2292, 6
        %v3477 = vrot.slane %v2308, 6
        %v3478 = vsel %vm3475, %v3476, %v3477
        %v3479 = vrot.slane %v2293, 6
        %v3480 = vrot.slane %v2309, 6
        %v3481 = vsel %vm3475, %v3479, %v3480
        %v3482 = vrot.slane %v2294, 6
        %v3483 = vrot.slane %v2310, 6
        %v3484 = vsel %vm3475, %v3482, %v3483
        %v3485 = vrot.slane %v2295, 6
        %v3486 = vrot.slane %v2311, 6
        %v3487 = vsel %vm3475, %v3485, %v3486
        %v3488 = vrot.slane %v2296, 6
        %v3489 = vrot.slane %v2312, 6
        %v3490 = vsel %vm3475, %v3488, %v3489
        %v3491 = vrot.slane %v2297, 6
        %v3492 = vrot.slane %v2313, 6
        %v3493 = vsel %vm3475, %v3491, %v3492
        %v3494 = vrot.slane %v2298, 6
        %v3495 = vrot.slane %v2314, 6
        %v3496 = vsel %vm3475, %v3494, %v3495
        %v3497 = vrot.slane %v2299, 6
        %v3498 = vrot.slane %v2315, 6
        %v3499 = vsel %vm3475, %v3497, %v3498
        %v3500 = vrot.slane %v2300, 6
        %v3501 = vrot.slane %v2316, 6
        %v3502 = vsel %vm3475, %v3500, %v3501
        %v3503 = vrot.slane %v2301, 6
        %v3504 = vrot.slane %v2317, 6
        %v3505 = vsel %vm3475, %v3503, %v3504
        %v3506 = vrot.slane %v2302, 6
        %v3507 = vrot.slane %v2318, 6
        %v3508 = vsel %vm3475, %v3506, %v3507
        %v3509 = vrot.slane %v2303, 6
        %v3510 = vrot.slane %v2319, 6
        %v3511 = vsel %vm3475, %v3509, %v3510
        %v3512 = vrot.slane %v2304, 6
        %v3513 = vrot.slane %v2320, 6
        %v3514 = vsel %vm3475, %v3512, %v3513
        %v3515 = vrot.slane %v2305, 6
        %v3516 = vrot.slane %v2321, 6
        %v3517 = vsel %vm3475, %v3515, %v3516
        %v3518 = vrot.slane %v2306, 6
        %v3519 = vrot.slane %v2322, 6
        %v3520 = vsel %vm3475, %v3518, %v3519
        %v3521 = vrot.slane %v2307, 6
        %v3522 = vrot.slane %v2323, 6
        %v3523 = vsel %vm3475, %v3521, %v3522
        %v3540 = vpack.c.bf16 %v3481, %v3478
        %v3541 = vpack.c.bf16 %v3487, %v3484
        %v3542 = vpack.c.bf16 %v3493, %v3490
        %v3543 = vpack.c.bf16 %v3499, %v3496
        %v3544 = vpack.c.bf16 %v3505, %v3502
        %v3545 = vpack.c.bf16 %v3511, %v3508
        %v3546 = vpack.c.bf16 %v3517, %v3514
        %v3547 = vpack.c.bf16 %v3523, %v3520
        %s3548 = scalar_lea.vmem [#allocation8], 384
        %v3549 = vld [vmem:[%s3548] sm:$0xf]
        %v3550 = vld [vmem:[%s3548 + $0x4] sm:$0xf]
        %v3551 = vld [vmem:[%s3548 + $0x8] sm:$0xf]
        %v3552 = vld [vmem:[%s3548 + $0xc] sm:$0xf]
        %v3553 = vld [vmem:[%s3548 + $0x10] sm:$0xf]
        %v3554 = vld [vmem:[%s3548 + $0x14] sm:$0xf]
        %v3555 = vld [vmem:[%s3548 + $0x18] sm:$0xf]
        %v3556 = vld [vmem:[%s3548 + $0x1c] sm:$0xf]
        %v3557 = vld [vmem:[%s3548 + $0x20] sm:$0xf]
        %v3558 = vld [vmem:[%s3548 + $0x24] sm:$0xf]
        %v3559 = vld [vmem:[%s3548 + $0x28] sm:$0xf]
        %v3560 = vld [vmem:[%s3548 + $0x2c] sm:$0xf]
        %v3561 = vld [vmem:[%s3548 + $0x30] sm:$0xf]
        %v3562 = vld [vmem:[%s3548 + $0x34] sm:$0xf]
        %v3563 = vld [vmem:[%s3548 + $0x38] sm:$0xf]
        %v3564 = vld [vmem:[%s3548 + $0x3c] sm:$0xf]
        %v3581 = vunpack.c.l.b16 %v3549
        %v3582 = vunpack.c.l.b16 %v3550
        %v3583 = vunpack.c.l.b16 %v3551
        %v3584 = vunpack.c.l.b16 %v3552
        %v3585 = vunpack.c.l.b16 %v3553
        %v3586 = vunpack.c.l.b16 %v3554
        %v3587 = vunpack.c.l.b16 %v3555
        %v3588 = vunpack.c.l.b16 %v3556
        %v3589 = vunpack.c.l.b16 %v3557
        %v3590 = vunpack.c.l.b16 %v3558
        %v3591 = vunpack.c.l.b16 %v3559
        %v3592 = vunpack.c.l.b16 %v3560
        %v3593 = vunpack.c.l.b16 %v3561
        %v3594 = vunpack.c.l.b16 %v3562
        %v3595 = vunpack.c.l.b16 %v3563
        %v3596 = vunpack.c.l.b16 %v3564
        %v3597 = vpack.c.b16 %v3582, %v3581
        %v3598 = vpack.c.b16 %v3584, %v3583
        %v3599 = vpack.c.b16 %v3586, %v3585
        %v3600 = vpack.c.b16 %v3588, %v3587
        %v3601 = vpack.c.b16 %v3590, %v3589
        %v3602 = vpack.c.b16 %v3592, %v3591
        %v3603 = vpack.c.b16 %v3594, %v3593
        %v3604 = vpack.c.b16 %v3596, %v3595
        %3613 = vmatpush.bf16.msra.mxu0 %v3604
        %3614 = vmatpush.bf16.msra.mxu0 %v3603
        %3615 = vmatpush.bf16.msra.mxu0 %v3602
        %3616 = vmatpush.bf16.msra.mxu0 %v3601
        %3617 = vmatpush.bf16.msra.mxu0 %v3600
        %3618 = vmatpush.bf16.msra.mxu0 %v3599
        %3619 = vmatpush.bf16.msra.mxu0 %v3598
        %3620 = vmatpush.bf16.msra.mxu0 %v3597
        %3621 = vmatmul.bf16.gmra.mxu0 %v3540
        %v3622 = vpop.f32.mrf.mxu0
        %v3623 = vadd.f32 0.0, %v3622
        %v3624 = vpop.f32.mrf.mxu0
        %v3625 = vadd.f32 0.0, %v3624
        %3626 = vmatmul.bf16.gmra.mxu0 %v3541
        %v3627 = vpop.f32.mrf.mxu0
        %v3628 = vadd.f32 0.0, %v3627
        %v3629 = vpop.f32.mrf.mxu0
        %v3630 = vadd.f32 0.0, %v3629
        %3631 = vmatmul.bf16.gmra.mxu0 %v3542
        %v3632 = vpop.f32.mrf.mxu0
        %v3633 = vadd.f32 0.0, %v3632
        %v3634 = vpop.f32.mrf.mxu0
        %v3635 = vadd.f32 0.0, %v3634
        %3636 = vmatmul.bf16.gmra.mxu0 %v3543
        %v3637 = vpop.f32.mrf.mxu0
        %v3638 = vadd.f32 0.0, %v3637
        %v3639 = vpop.f32.mrf.mxu0
        %v3640 = vadd.f32 0.0, %v3639
        %3641 = vmatmul.bf16.gmra.mxu0 %v3544
        %v3642 = vpop.f32.mrf.mxu0
        %v3643 = vadd.f32 0.0, %v3642
        %v3644 = vpop.f32.mrf.mxu0
        %v3645 = vadd.f32 0.0, %v3644
        %3646 = vmatmul.bf16.gmra.mxu0 %v3545
        %v3647 = vpop.f32.mrf.mxu0
        %v3648 = vadd.f32 0.0, %v3647
        %v3649 = vpop.f32.mrf.mxu0
        %v3650 = vadd.f32 0.0, %v3649
        %3651 = vmatmul.bf16.gmra.mxu0 %v3546
        %v3652 = vpop.f32.mrf.mxu0
        %v3653 = vadd.f32 0.0, %v3652
        %v3654 = vpop.f32.mrf.mxu0
        %v3655 = vadd.f32 0.0, %v3654
        %3656 = vmatmul.bf16.gmra.mxu0 %v3547
        %v3657 = vpop.f32.mrf.mxu0
        %v3658 = vadd.f32 0.0, %v3657
        %v3659 = vpop.f32.mrf.mxu0
        %v3660 = vadd.f32 0.0, %v3659
        %3661 = vdwg.mxu0
        %v3662 = vadd.f32 %v3459, %v3623
        %v3663 = vadd.f32 %v3460, %v3625
        %v3664 = vadd.f32 %v3461, %v3628
        %v3665 = vadd.f32 %v3462, %v3630
        %v3666 = vadd.f32 %v3463, %v3633
        %v3667 = vadd.f32 %v3464, %v3635
        %v3668 = vadd.f32 %v3465, %v3638
        %v3669 = vadd.f32 %v3466, %v3640
        %v3670 = vadd.f32 %v3467, %v3643
        %v3671 = vadd.f32 %v3468, %v3645
        %v3672 = vadd.f32 %v3469, %v3648
        %v3673 = vadd.f32 %v3470, %v3650
        %v3674 = vadd.f32 %v3471, %v3653
        %v3675 = vadd.f32 %v3472, %v3655
        %v3676 = vadd.f32 %v3473, %v3658
        %v3677 = vadd.f32 %v3474, %v3660
        %v3678 = vld [vmem:[%s4] sm:$0x1]
        %v3680 = vperm.slane %v3678, 0
        %v3682 = vadd.f32 %v3662, %v3680
        %v3683 = vadd.f32 %v3663, %v3680
        %v3684 = vadd.f32 %v3664, %v3680
        %v3685 = vadd.f32 %v3665, %v3680
        %v3686 = vadd.f32 %v3666, %v3680
        %v3687 = vadd.f32 %v3667, %v3680
        %v3688 = vadd.f32 %v3668, %v3680
        %v3689 = vadd.f32 %v3669, %v3680
        %v3690 = vadd.f32 %v3670, %v3680
        %v3691 = vadd.f32 %v3671, %v3680
        %v3692 = vadd.f32 %v3672, %v3680
        %v3693 = vadd.f32 %v3673, %v3680
        %v3694 = vadd.f32 %v3674, %v3680
        %v3695 = vadd.f32 %v3675, %v3680
        %v3696 = vadd.f32 %v3676, %v3680
        %v3697 = vadd.f32 %v3677, %v3680
        %v3698 = vmax.f32 %v3682, 0.0
        %v3699 = vmax.f32 %v3683, 0.0
        %v3700 = vmax.f32 %v3684, 0.0
        %v3701 = vmax.f32 %v3685, 0.0
        %v3702 = vmax.f32 %v3686, 0.0
        %v3703 = vmax.f32 %v3687, 0.0
        %v3704 = vmax.f32 %v3688, 0.0
        %v3705 = vmax.f32 %v3689, 0.0
        %v3706 = vmax.f32 %v3690, 0.0
        %v3707 = vmax.f32 %v3691, 0.0
        %v3708 = vmax.f32 %v3692, 0.0
        %v3709 = vmax.f32 %v3693, 0.0
        %v3710 = vmax.f32 %v3694, 0.0
        %v3711 = vmax.f32 %v3695, 0.0
        %v3712 = vmax.f32 %v3696, 0.0
        %v3713 = vmax.f32 %v3697, 0.0
        %v3714 = vpack.c.bf16 0.0, 0.0
        %v3715 = vpack.c.bf16 %v3698, 0.0
        %v3716 = vpack.c.bf16 %v3700, %v3699
        %v3717 = vpack.c.bf16 %v3702, %v3701
        %v3718 = vpack.c.bf16 %v3706, 0.0
        %v3719 = vpack.c.bf16 %v3708, %v3707
        %v3720 = vpack.c.bf16 %v3710, %v3709
        %v3721 = vld [vmem:[#allocation10] sm:$0xf]
        %v3722 = vld [vmem:[#allocation10 + $0x4] sm:$0xf]
        %v3723 = vld [vmem:[#allocation10 + $0x8] sm:$0xf]
        %v3724 = vld [vmem:[#allocation10 + $0xc] sm:$0xf]
        %v3725 = vld [vmem:[#allocation10 + $0x10] sm:$0xf]
        %v3726 = vld [vmem:[#allocation10 + $0x14] sm:$0xf]
        %v3727 = vld [vmem:[#allocation10 + $0x18] sm:$0xf]
        %v3728 = vld [vmem:[#allocation10 + $0x1c] sm:$0xf]
        %v3729 = vld [vmem:[#allocation10 + $0x20] sm:$0xf]
        %v3730 = vld [vmem:[#allocation10 + $0x24] sm:$0xf]
        %v3731 = vld [vmem:[#allocation10 + $0x28] sm:$0xf]
        %v3732 = vld [vmem:[#allocation10 + $0x2c] sm:$0xf]
        %v3733 = vld [vmem:[#allocation10 + $0x30] sm:$0xf]
        %v3734 = vld [vmem:[#allocation10 + $0x34] sm:$0xf]
        %v3735 = vld [vmem:[#allocation10 + $0x38] sm:$0xf]
        %v3736 = vld [vmem:[#allocation10 + $0x3c] sm:$0xf]
        %v3737 = vpack.c.bf16 %v3699, %v3698
        %v3738 = vpack.c.bf16 %v3701, %v3700
        %v3739 = vpack.c.bf16 %v3703, %v3702
        %v3740 = vpack.c.bf16 %v3707, %v3706
        %v3741 = vpack.c.bf16 %v3709, %v3708
        %v3742 = vpack.c.bf16 %v3711, %v3710
        %s3743 = scalar_lea.vmem [#allocation10], 64
        %v3744 = vld [vmem:[%s3743] sm:$0xf]
        %v3745 = vld [vmem:[%s3743 + $0x4] sm:$0xf]
        %v3746 = vld [vmem:[%s3743 + $0x8] sm:$0xf]
        %v3747 = vld [vmem:[%s3743 + $0xc] sm:$0xf]
        %v3748 = vld [vmem:[%s3743 + $0x10] sm:$0xf]
        %v3749 = vld [vmem:[%s3743 + $0x14] sm:$0xf]
        %v3750 = vld [vmem:[%s3743 + $0x18] sm:$0xf]
        %v3751 = vld [vmem:[%s3743 + $0x1c] sm:$0xf]
        %v3752 = vld [vmem:[%s3743 + $0x20] sm:$0xf]
        %v3753 = vld [vmem:[%s3743 + $0x24] sm:$0xf]
        %v3754 = vld [vmem:[%s3743 + $0x28] sm:$0xf]
        %v3755 = vld [vmem:[%s3743 + $0x2c] sm:$0xf]
        %v3756 = vld [vmem:[%s3743 + $0x30] sm:$0xf]
        %v3757 = vld [vmem:[%s3743 + $0x34] sm:$0xf]
        %v3758 = vld [vmem:[%s3743 + $0x38] sm:$0xf]
        %v3759 = vld [vmem:[%s3743 + $0x3c] sm:$0xf]
        %v3776 = vunpack.c.l.b16 %v3744
        %v3777 = vunpack.c.l.b16 %v3745
        %v3778 = vunpack.c.l.b16 %v3746
        %v3779 = vunpack.c.l.b16 %v3747
        %v3780 = vunpack.c.l.b16 %v3748
        %v3781 = vunpack.c.l.b16 %v3749
        %v3782 = vunpack.c.l.b16 %v3750
        %v3783 = vunpack.c.l.b16 %v3751
        %v3784 = vunpack.c.l.b16 %v3752
        %v3785 = vunpack.c.l.b16 %v3753
        %v3786 = vunpack.c.l.b16 %v3754
        %v3787 = vunpack.c.l.b16 %v3755
        %v3788 = vunpack.c.l.b16 %v3756
        %v3789 = vunpack.c.l.b16 %v3757
        %v3790 = vunpack.c.l.b16 %v3758
        %v3791 = vunpack.c.l.b16 %v3759
        %v3792 = vpack.c.b16 %v3777, %v3776
        %v3793 = vpack.c.b16 %v3779, %v3778
        %v3794 = vpack.c.b16 %v3781, %v3780
        %v3795 = vpack.c.b16 %v3783, %v3782
        %v3796 = vpack.c.b16 %v3785, %v3784
        %v3797 = vpack.c.b16 %v3787, %v3786
        %v3798 = vpack.c.b16 %v3789, %v3788
        %v3799 = vpack.c.b16 %v3791, %v3790
        %3808 = vmatpush.bf16.msra.mxu0 %v3799
        %3809 = vmatpush.bf16.msra.mxu0 %v3798
        %3810 = vmatpush.bf16.msra.mxu0 %v3797
        %3811 = vmatpush.bf16.msra.mxu0 %v3796
        %3812 = vmatpush.bf16.msra.mxu0 %v3795
        %3813 = vmatpush.bf16.msra.mxu0 %v3794
        %3814 = vmatpush.bf16.msra.mxu0 %v3793
        %3815 = vmatpush.bf16.msra.mxu0 %v3792
        %3816 = vmatmul.bf16.gmra.mxu0 %v3714
        %v3817 = vpop.f32.mrf.mxu0
        %v3818 = vadd.f32 0.0, %v3817
        %v3819 = vpop.f32.mrf.mxu0
        %v3820 = vadd.f32 0.0, %v3819
        %3821 = vmatmul.bf16.gmra.mxu0 %v3737
        %v3822 = vpop.f32.mrf.mxu0
        %v3823 = vadd.f32 0.0, %v3822
        %v3824 = vpop.f32.mrf.mxu0
        %v3825 = vadd.f32 0.0, %v3824
        %3826 = vmatmul.bf16.gmra.mxu0 %v3738
        %v3827 = vpop.f32.mrf.mxu0
        %v3828 = vadd.f32 0.0, %v3827
        %v3829 = vpop.f32.mrf.mxu0
        %v3830 = vadd.f32 0.0, %v3829
        %3831 = vmatmul.bf16.gmra.mxu0 %v3739
        %v3832 = vpop.f32.mrf.mxu0
        %v3833 = vadd.f32 0.0, %v3832
        %v3834 = vpop.f32.mrf.mxu0
        %v3835 = vadd.f32 0.0, %v3834
        %3836 = vmatmul.bf16.gmra.mxu0 %v3714
        %v3837 = vpop.f32.mrf.mxu0
        %v3838 = vadd.f32 0.0, %v3837
        %v3839 = vpop.f32.mrf.mxu0
        %v3840 = vadd.f32 0.0, %v3839
        %3841 = vmatmul.bf16.gmra.mxu0 %v3740
        %v3842 = vpop.f32.mrf.mxu0
        %v3843 = vadd.f32 0.0, %v3842
        %v3844 = vpop.f32.mrf.mxu0
        %v3845 = vadd.f32 0.0, %v3844
        %3846 = vmatmul.bf16.gmra.mxu0 %v3741
        %v3847 = vpop.f32.mrf.mxu0
        %v3848 = vadd.f32 0.0, %v3847
        %v3849 = vpop.f32.mrf.mxu0
        %v3850 = vadd.f32 0.0, %v3849
        %3851 = vmatmul.bf16.gmra.mxu0 %v3742
        %v3852 = vpop.f32.mrf.mxu0
        %v3853 = vadd.f32 0.0, %v3852
        %v3854 = vpop.f32.mrf.mxu0
        %v3855 = vadd.f32 0.0, %v3854
        %3856 = vdwg.mxu0
        %v3873 = vunpack.c.l.b16 %v3721
        %v3874 = vunpack.c.l.b16 %v3722
        %v3875 = vunpack.c.l.b16 %v3723
        %v3876 = vunpack.c.l.b16 %v3724
        %v3877 = vunpack.c.l.b16 %v3725
        %v3878 = vunpack.c.l.b16 %v3726
        %v3879 = vunpack.c.l.b16 %v3727
        %v3880 = vunpack.c.l.b16 %v3728
        %v3881 = vunpack.c.l.b16 %v3729
        %v3882 = vunpack.c.l.b16 %v3730
        %v3883 = vunpack.c.l.b16 %v3731
        %v3884 = vunpack.c.l.b16 %v3732
        %v3885 = vunpack.c.l.b16 %v3733
        %v3886 = vunpack.c.l.b16 %v3734
        %v3887 = vunpack.c.l.b16 %v3735
        %v3888 = vunpack.c.l.b16 %v3736
        %v3889 = vpack.c.b16 %v3874, %v3873
        %v3890 = vpack.c.b16 %v3876, %v3875
        %v3891 = vpack.c.b16 %v3878, %v3877
        %v3892 = vpack.c.b16 %v3880, %v3879
        %v3893 = vpack.c.b16 %v3882, %v3881
        %v3894 = vpack.c.b16 %v3884, %v3883
        %v3895 = vpack.c.b16 %v3886, %v3885
        %v3896 = vpack.c.b16 %v3888, %v3887
        %3905 = vmatpush.bf16.msra.mxu0 %v3896
        %3906 = vmatpush.bf16.msra.mxu0 %v3895
        %3907 = vmatpush.bf16.msra.mxu0 %v3894
        %3908 = vmatpush.bf16.msra.mxu0 %v3893
        %3909 = vmatpush.bf16.msra.mxu0 %v3892
        %3910 = vmatpush.bf16.msra.mxu0 %v3891
        %3911 = vmatpush.bf16.msra.mxu0 %v3890
        %3912 = vmatpush.bf16.msra.mxu0 %v3889
        %3913 = vmatmul.bf16.gmra.mxu0 %v3714
        %v3914 = vpop.f32.mrf.mxu0
        %v3915 = vadd.f32 %v3818, %v3914
        %v3916 = vpop.f32.mrf.mxu0
        %v3917 = vadd.f32 %v3820, %v3916
        %3918 = vmatmul.bf16.gmra.mxu0 %v3715
        %v3919 = vpop.f32.mrf.mxu0
        %v3920 = vadd.f32 %v3823, %v3919
        %v3921 = vpop.f32.mrf.mxu0
        %v3922 = vadd.f32 %v3825, %v3921
        %3923 = vmatmul.bf16.gmra.mxu0 %v3716
        %v3924 = vpop.f32.mrf.mxu0
        %v3925 = vadd.f32 %v3828, %v3924
        %v3926 = vpop.f32.mrf.mxu0
        %v3927 = vadd.f32 %v3830, %v3926
        %3928 = vmatmul.bf16.gmra.mxu0 %v3717
        %v3929 = vpop.f32.mrf.mxu0
        %v3930 = vadd.f32 %v3833, %v3929
        %v3931 = vpop.f32.mrf.mxu0
        %v3932 = vadd.f32 %v3835, %v3931
        %3933 = vmatmul.bf16.gmra.mxu0 %v3714
        %v3934 = vpop.f32.mrf.mxu0
        %v3935 = vadd.f32 %v3838, %v3934
        %v3936 = vpop.f32.mrf.mxu0
        %v3937 = vadd.f32 %v3840, %v3936
        %3938 = vmatmul.bf16.gmra.mxu0 %v3718
        %v3939 = vpop.f32.mrf.mxu0
        %v3940 = vadd.f32 %v3843, %v3939
        %v3941 = vpop.f32.mrf.mxu0
        %v3942 = vadd.f32 %v3845, %v3941
        %3943 = vmatmul.bf16.gmra.mxu0 %v3719
        %v3944 = vpop.f32.mrf.mxu0
        %v3945 = vadd.f32 %v3848, %v3944
        %v3946 = vpop.f32.mrf.mxu0
        %v3947 = vadd.f32 %v3850, %v3946
        %3948 = vmatmul.bf16.gmra.mxu0 %v3720
        %v3949 = vpop.f32.mrf.mxu0
        %v3950 = vadd.f32 %v3853, %v3949
        %v3951 = vpop.f32.mrf.mxu0
        %v3952 = vadd.f32 %v3855, %v3951
        %3953 = vdwg.mxu0
        %v3954 = vpack.c.bf16 %v3704, %v3703
        %v3955 = vpack.c.bf16 %v3712, %v3711
        %s3956 = scalar_lea.vmem [#allocation10], 128
        %v3957 = vld [vmem:[%s3956] sm:$0xf]
        %v3958 = vld [vmem:[%s3956 + $0x4] sm:$0xf]
        %v3959 = vld [vmem:[%s3956 + $0x8] sm:$0xf]
        %v3960 = vld [vmem:[%s3956 + $0xc] sm:$0xf]
        %v3961 = vld [vmem:[%s3956 + $0x10] sm:$0xf]
        %v3962 = vld [vmem:[%s3956 + $0x14] sm:$0xf]
        %v3963 = vld [vmem:[%s3956 + $0x18] sm:$0xf]
        %v3964 = vld [vmem:[%s3956 + $0x1c] sm:$0xf]
        %v3965 = vld [vmem:[%s3956 + $0x20] sm:$0xf]
        %v3966 = vld [vmem:[%s3956 + $0x24] sm:$0xf]
        %v3967 = vld [vmem:[%s3956 + $0x28] sm:$0xf]
        %v3968 = vld [vmem:[%s3956 + $0x2c] sm:$0xf]
        %v3969 = vld [vmem:[%s3956 + $0x30] sm:$0xf]
        %v3970 = vld [vmem:[%s3956 + $0x34] sm:$0xf]
        %v3971 = vld [vmem:[%s3956 + $0x38] sm:$0xf]
        %v3972 = vld [vmem:[%s3956 + $0x3c] sm:$0xf]
        %v3989 = vunpack.c.l.b16 %v3957
        %v3990 = vunpack.c.l.b16 %v3958
        %v3991 = vunpack.c.l.b16 %v3959
        %v3992 = vunpack.c.l.b16 %v3960
        %v3993 = vunpack.c.l.b16 %v3961
        %v3994 = vunpack.c.l.b16 %v3962
        %v3995 = vunpack.c.l.b16 %v3963
        %v3996 = vunpack.c.l.b16 %v3964
        %v3997 = vunpack.c.l.b16 %v3965
        %v3998 = vunpack.c.l.b16 %v3966
        %v3999 = vunpack.c.l.b16 %v3967
        %v4000 = vunpack.c.l.b16 %v3968
        %v4001 = vunpack.c.l.b16 %v3969
        %v4002 = vunpack.c.l.b16 %v3970
        %v4003 = vunpack.c.l.b16 %v3971
        %v4004 = vunpack.c.l.b16 %v3972
        %v4005 = vpack.c.b16 %v3990, %v3989
        %v4006 = vpack.c.b16 %v3992, %v3991
        %v4007 = vpack.c.b16 %v3994, %v3993
        %v4008 = vpack.c.b16 %v3996, %v3995
        %v4009 = vpack.c.b16 %v3998, %v3997
        %v4010 = vpack.c.b16 %v4000, %v3999
        %v4011 = vpack.c.b16 %v4002, %v4001
        %v4012 = vpack.c.b16 %v4004, %v4003
        %4021 = vmatpush.bf16.msra.mxu0 %v4012
        %4022 = vmatpush.bf16.msra.mxu0 %v4011
        %4023 = vmatpush.bf16.msra.mxu0 %v4010
        %4024 = vmatpush.bf16.msra.mxu0 %v4009
        %4025 = vmatpush.bf16.msra.mxu0 %v4008
        %4026 = vmatpush.bf16.msra.mxu0 %v4007
        %4027 = vmatpush.bf16.msra.mxu0 %v4006
        %4028 = vmatpush.bf16.msra.mxu0 %v4005
        %4029 = vmatmul.bf16.gmra.mxu0 %v3715
        %v4030 = vpop.f32.mrf.mxu0
        %v4031 = vadd.f32 0.0, %v4030
        %v4032 = vpop.f32.mrf.mxu0
        %v4033 = vadd.f32 0.0, %v4032
        %4034 = vmatmul.bf16.gmra.mxu0 %v3716
        %v4035 = vpop.f32.mrf.mxu0
        %v4036 = vadd.f32 0.0, %v4035
        %v4037 = vpop.f32.mrf.mxu0
        %v4038 = vadd.f32 0.0, %v4037
        %4039 = vmatmul.bf16.gmra.mxu0 %v3717
        %v4040 = vpop.f32.mrf.mxu0
        %v4041 = vadd.f32 0.0, %v4040
        %v4042 = vpop.f32.mrf.mxu0
        %v4043 = vadd.f32 0.0, %v4042
        %4044 = vmatmul.bf16.gmra.mxu0 %v3954
        %v4045 = vpop.f32.mrf.mxu0
        %v4046 = vadd.f32 0.0, %v4045
        %v4047 = vpop.f32.mrf.mxu0
        %v4048 = vadd.f32 0.0, %v4047
        %4049 = vmatmul.bf16.gmra.mxu0 %v3718
        %v4050 = vpop.f32.mrf.mxu0
        %v4051 = vadd.f32 0.0, %v4050
        %v4052 = vpop.f32.mrf.mxu0
        %v4053 = vadd.f32 0.0, %v4052
        %4054 = vmatmul.bf16.gmra.mxu0 %v3719
        %v4055 = vpop.f32.mrf.mxu0
        %v4056 = vadd.f32 0.0, %v4055
        %v4057 = vpop.f32.mrf.mxu0
        %v4058 = vadd.f32 0.0, %v4057
        %4059 = vmatmul.bf16.gmra.mxu0 %v3720
        %v4060 = vpop.f32.mrf.mxu0
        %v4061 = vadd.f32 0.0, %v4060
        %v4062 = vpop.f32.mrf.mxu0
        %v4063 = vadd.f32 0.0, %v4062
        %4064 = vmatmul.bf16.gmra.mxu0 %v3955
        %v4065 = vpop.f32.mrf.mxu0
        %v4066 = vadd.f32 0.0, %v4065
        %v4067 = vpop.f32.mrf.mxu0
        %v4068 = vadd.f32 0.0, %v4067
        %4069 = vdwg.mxu0
        %v4070 = vadd.f32 %v3915, %v4031
        %v4071 = vadd.f32 %v3917, %v4033
        %v4072 = vadd.f32 %v3920, %v4036
        %v4073 = vadd.f32 %v3922, %v4038
        %v4074 = vadd.f32 %v3925, %v4041
        %v4075 = vadd.f32 %v3927, %v4043
        %v4076 = vadd.f32 %v3930, %v4046
        %v4077 = vadd.f32 %v3932, %v4048
        %v4078 = vadd.f32 %v3935, %v4051
        %v4079 = vadd.f32 %v3937, %v4053
        %v4080 = vadd.f32 %v3940, %v4056
        %v4081 = vadd.f32 %v3942, %v4058
        %v4082 = vadd.f32 %v3945, %v4061
        %v4083 = vadd.f32 %v3947, %v4063
        %v4084 = vadd.f32 %v3950, %v4066
        %v4085 = vadd.f32 %v3952, %v4068
        %v4086 = vpack.c.bf16 %v3705, %v3704
        %v4087 = vpack.c.bf16 %v3713, %v3712
        %s4088 = scalar_lea.vmem [#allocation10], 192
        %v4089 = vld [vmem:[%s4088] sm:$0xf]
        %v4090 = vld [vmem:[%s4088 + $0x4] sm:$0xf]
        %v4091 = vld [vmem:[%s4088 + $0x8] sm:$0xf]
        %v4092 = vld [vmem:[%s4088 + $0xc] sm:$0xf]
        %v4093 = vld [vmem:[%s4088 + $0x10] sm:$0xf]
        %v4094 = vld [vmem:[%s4088 + $0x14] sm:$0xf]
        %v4095 = vld [vmem:[%s4088 + $0x18] sm:$0xf]
        %v4096 = vld [vmem:[%s4088 + $0x1c] sm:$0xf]
        %v4097 = vld [vmem:[%s4088 + $0x20] sm:$0xf]
        %v4098 = vld [vmem:[%s4088 + $0x24] sm:$0xf]
        %v4099 = vld [vmem:[%s4088 + $0x28] sm:$0xf]
        %v4100 = vld [vmem:[%s4088 + $0x2c] sm:$0xf]
        %v4101 = vld [vmem:[%s4088 + $0x30] sm:$0xf]
        %v4102 = vld [vmem:[%s4088 + $0x34] sm:$0xf]
        %v4103 = vld [vmem:[%s4088 + $0x38] sm:$0xf]
        %v4104 = vld [vmem:[%s4088 + $0x3c] sm:$0xf]
        %v4121 = vunpack.c.l.b16 %v4089
        %v4122 = vunpack.c.l.b16 %v4090
        %v4123 = vunpack.c.l.b16 %v4091
        %v4124 = vunpack.c.l.b16 %v4092
        %v4125 = vunpack.c.l.b16 %v4093
        %v4126 = vunpack.c.l.b16 %v4094
        %v4127 = vunpack.c.l.b16 %v4095
        %v4128 = vunpack.c.l.b16 %v4096
        %v4129 = vunpack.c.l.b16 %v4097
        %v4130 = vunpack.c.l.b16 %v4098
        %v4131 = vunpack.c.l.b16 %v4099
        %v4132 = vunpack.c.l.b16 %v4100
        %v4133 = vunpack.c.l.b16 %v4101
        %v4134 = vunpack.c.l.b16 %v4102
        %v4135 = vunpack.c.l.b16 %v4103
        %v4136 = vunpack.c.l.b16 %v4104
        %v4137 = vpack.c.b16 %v4122, %v4121
        %v4138 = vpack.c.b16 %v4124, %v4123
        %v4139 = vpack.c.b16 %v4126, %v4125
        %v4140 = vpack.c.b16 %v4128, %v4127
        %v4141 = vpack.c.b16 %v4130, %v4129
        %v4142 = vpack.c.b16 %v4132, %v4131
        %v4143 = vpack.c.b16 %v4134, %v4133
        %v4144 = vpack.c.b16 %v4136, %v4135
        %4153 = vmatpush.bf16.msra.mxu0 %v4144
        %4154 = vmatpush.bf16.msra.mxu0 %v4143
        %4155 = vmatpush.bf16.msra.mxu0 %v4142
        %4156 = vmatpush.bf16.msra.mxu0 %v4141
        %4157 = vmatpush.bf16.msra.mxu0 %v4140
        %4158 = vmatpush.bf16.msra.mxu0 %v4139
        %4159 = vmatpush.bf16.msra.mxu0 %v4138
        %4160 = vmatpush.bf16.msra.mxu0 %v4137
        %4161 = vmatmul.bf16.gmra.mxu0 %v3737
        %v4162 = vpop.f32.mrf.mxu0
        %v4163 = vadd.f32 0.0, %v4162
        %v4164 = vpop.f32.mrf.mxu0
        %v4165 = vadd.f32 0.0, %v4164
        %4166 = vmatmul.bf16.gmra.mxu0 %v3738
        %v4167 = vpop.f32.mrf.mxu0
        %v4168 = vadd.f32 0.0, %v4167
        %v4169 = vpop.f32.mrf.mxu0
        %v4170 = vadd.f32 0.0, %v4169
        %4171 = vmatmul.bf16.gmra.mxu0 %v3739
        %v4172 = vpop.f32.mrf.mxu0
        %v4173 = vadd.f32 0.0, %v4172
        %v4174 = vpop.f32.mrf.mxu0
        %v4175 = vadd.f32 0.0, %v4174
        %4176 = vmatmul.bf16.gmra.mxu0 %v4086
        %v4177 = vpop.f32.mrf.mxu0
        %v4178 = vadd.f32 0.0, %v4177
        %v4179 = vpop.f32.mrf.mxu0
        %v4180 = vadd.f32 0.0, %v4179
        %4181 = vmatmul.bf16.gmra.mxu0 %v3740
        %v4182 = vpop.f32.mrf.mxu0
        %v4183 = vadd.f32 0.0, %v4182
        %v4184 = vpop.f32.mrf.mxu0
        %v4185 = vadd.f32 0.0, %v4184
        %4186 = vmatmul.bf16.gmra.mxu0 %v3741
        %v4187 = vpop.f32.mrf.mxu0
        %v4188 = vadd.f32 0.0, %v4187
        %v4189 = vpop.f32.mrf.mxu0
        %v4190 = vadd.f32 0.0, %v4189
        %4191 = vmatmul.bf16.gmra.mxu0 %v3742
        %v4192 = vpop.f32.mrf.mxu0
        %v4193 = vadd.f32 0.0, %v4192
        %v4194 = vpop.f32.mrf.mxu0
        %v4195 = vadd.f32 0.0, %v4194
        %4196 = vmatmul.bf16.gmra.mxu0 %v4087
        %v4197 = vpop.f32.mrf.mxu0
        %v4198 = vadd.f32 0.0, %v4197
        %v4199 = vpop.f32.mrf.mxu0
        %v4200 = vadd.f32 0.0, %v4199
        %4201 = vdwg.mxu0
        %v4202 = vadd.f32 %v4070, %v4163
        %v4203 = vadd.f32 %v4071, %v4165
        %v4204 = vadd.f32 %v4072, %v4168
        %v4205 = vadd.f32 %v4073, %v4170
        %v4206 = vadd.f32 %v4074, %v4173
        %v4207 = vadd.f32 %v4075, %v4175
        %v4208 = vadd.f32 %v4076, %v4178
        %v4209 = vadd.f32 %v4077, %v4180
        %v4210 = vadd.f32 %v4078, %v4183
        %v4211 = vadd.f32 %v4079, %v4185
        %v4212 = vadd.f32 %v4080, %v4188
        %v4213 = vadd.f32 %v4081, %v4190
        %v4214 = vadd.f32 %v4082, %v4193
        %v4215 = vadd.f32 %v4083, %v4195
        %v4216 = vadd.f32 %v4084, %v4198
        %v4217 = vadd.f32 %v4085, %v4200
        %v4218 = vpack.c.bf16 0.0, %v3705
        %v4219 = vpack.c.bf16 0.0, %v3713
        %s4220 = scalar_lea.vmem [#allocation10], 256
        %v4221 = vld [vmem:[%s4220] sm:$0xf]
        %v4222 = vld [vmem:[%s4220 + $0x4] sm:$0xf]
        %v4223 = vld [vmem:[%s4220 + $0x8] sm:$0xf]
        %v4224 = vld [vmem:[%s4220 + $0xc] sm:$0xf]
        %v4225 = vld [vmem:[%s4220 + $0x10] sm:$0xf]
        %v4226 = vld [vmem:[%s4220 + $0x14] sm:$0xf]
        %v4227 = vld [vmem:[%s4220 + $0x18] sm:$0xf]
        %v4228 = vld [vmem:[%s4220 + $0x1c] sm:$0xf]
        %v4229 = vld [vmem:[%s4220 + $0x20] sm:$0xf]
        %v4230 = vld [vmem:[%s4220 + $0x24] sm:$0xf]
        %v4231 = vld [vmem:[%s4220 + $0x28] sm:$0xf]
        %v4232 = vld [vmem:[%s4220 + $0x2c] sm:$0xf]
        %v4233 = vld [vmem:[%s4220 + $0x30] sm:$0xf]
        %v4234 = vld [vmem:[%s4220 + $0x34] sm:$0xf]
        %v4235 = vld [vmem:[%s4220 + $0x38] sm:$0xf]
        %v4236 = vld [vmem:[%s4220 + $0x3c] sm:$0xf]
        %v4253 = vunpack.c.l.b16 %v4221
        %v4254 = vunpack.c.l.b16 %v4222
        %v4255 = vunpack.c.l.b16 %v4223
        %v4256 = vunpack.c.l.b16 %v4224
        %v4257 = vunpack.c.l.b16 %v4225
        %v4258 = vunpack.c.l.b16 %v4226
        %v4259 = vunpack.c.l.b16 %v4227
        %v4260 = vunpack.c.l.b16 %v4228
        %v4261 = vunpack.c.l.b16 %v4229
        %v4262 = vunpack.c.l.b16 %v4230
        %v4263 = vunpack.c.l.b16 %v4231
        %v4264 = vunpack.c.l.b16 %v4232
        %v4265 = vunpack.c.l.b16 %v4233
        %v4266 = vunpack.c.l.b16 %v4234
        %v4267 = vunpack.c.l.b16 %v4235
        %v4268 = vunpack.c.l.b16 %v4236
        %v4269 = vpack.c.b16 %v4254, %v4253
        %v4270 = vpack.c.b16 %v4256, %v4255
        %v4271 = vpack.c.b16 %v4258, %v4257
        %v4272 = vpack.c.b16 %v4260, %v4259
        %v4273 = vpack.c.b16 %v4262, %v4261
        %v4274 = vpack.c.b16 %v4264, %v4263
        %v4275 = vpack.c.b16 %v4266, %v4265
        %v4276 = vpack.c.b16 %v4268, %v4267
        %4285 = vmatpush.bf16.msra.mxu0 %v4276
        %4286 = vmatpush.bf16.msra.mxu0 %v4275
        %4287 = vmatpush.bf16.msra.mxu0 %v4274
        %4288 = vmatpush.bf16.msra.mxu0 %v4273
        %4289 = vmatpush.bf16.msra.mxu0 %v4272
        %4290 = vmatpush.bf16.msra.mxu0 %v4271
        %4291 = vmatpush.bf16.msra.mxu0 %v4270
        %4292 = vmatpush.bf16.msra.mxu0 %v4269
        %4293 = vmatmul.bf16.gmra.mxu0 %v3716
        %v4294 = vpop.f32.mrf.mxu0
        %v4295 = vadd.f32 0.0, %v4294
        %v4296 = vpop.f32.mrf.mxu0
        %v4297 = vadd.f32 0.0, %v4296
        %4298 = vmatmul.bf16.gmra.mxu0 %v3717
        %v4299 = vpop.f32.mrf.mxu0
        %v4300 = vadd.f32 0.0, %v4299
        %v4301 = vpop.f32.mrf.mxu0
        %v4302 = vadd.f32 0.0, %v4301
        %4303 = vmatmul.bf16.gmra.mxu0 %v3954
        %v4304 = vpop.f32.mrf.mxu0
        %v4305 = vadd.f32 0.0, %v4304
        %v4306 = vpop.f32.mrf.mxu0
        %v4307 = vadd.f32 0.0, %v4306
        %4308 = vmatmul.bf16.gmra.mxu0 %v4218
        %v4309 = vpop.f32.mrf.mxu0
        %v4310 = vadd.f32 0.0, %v4309
        %v4311 = vpop.f32.mrf.mxu0
        %v4312 = vadd.f32 0.0, %v4311
        %4313 = vmatmul.bf16.gmra.mxu0 %v3719
        %v4314 = vpop.f32.mrf.mxu0
        %v4315 = vadd.f32 0.0, %v4314
        %v4316 = vpop.f32.mrf.mxu0
        %v4317 = vadd.f32 0.0, %v4316
        %4318 = vmatmul.bf16.gmra.mxu0 %v3720
        %v4319 = vpop.f32.mrf.mxu0
        %v4320 = vadd.f32 0.0, %v4319
        %v4321 = vpop.f32.mrf.mxu0
        %v4322 = vadd.f32 0.0, %v4321
        %4323 = vmatmul.bf16.gmra.mxu0 %v3955
        %v4324 = vpop.f32.mrf.mxu0
        %v4325 = vadd.f32 0.0, %v4324
        %v4326 = vpop.f32.mrf.mxu0
        %v4327 = vadd.f32 0.0, %v4326
        %4328 = vmatmul.bf16.gmra.mxu0 %v4219
        %v4329 = vpop.f32.mrf.mxu0
        %v4330 = vadd.f32 0.0, %v4329
        %v4331 = vpop.f32.mrf.mxu0
        %v4332 = vadd.f32 0.0, %v4331
        %4333 = vdwg.mxu0
        %v4334 = vadd.f32 %v4202, %v4295
        %v4335 = vadd.f32 %v4203, %v4297
        %v4336 = vadd.f32 %v4204, %v4300
        %v4337 = vadd.f32 %v4205, %v4302
        %v4338 = vadd.f32 %v4206, %v4305
        %v4339 = vadd.f32 %v4207, %v4307
        %v4340 = vadd.f32 %v4208, %v4310
        %v4341 = vadd.f32 %v4209, %v4312
        %v4342 = vadd.f32 %v4210, %v4315
        %v4343 = vadd.f32 %v4211, %v4317
        %v4344 = vadd.f32 %v4212, %v4320
        %v4345 = vadd.f32 %v4213, %v4322
        %v4346 = vadd.f32 %v4214, %v4325
        %v4347 = vadd.f32 %v4215, %v4327
        %v4348 = vadd.f32 %v4216, %v4330
        %v4349 = vadd.f32 %v4217, %v4332
        %s4350 = scalar_lea.vmem [#allocation10], 320
        %v4351 = vld [vmem:[%s4350] sm:$0xf]
        %v4352 = vld [vmem:[%s4350 + $0x4] sm:$0xf]
        %v4353 = vld [vmem:[%s4350 + $0x8] sm:$0xf]
        %v4354 = vld [vmem:[%s4350 + $0xc] sm:$0xf]
        %v4355 = vld [vmem:[%s4350 + $0x10] sm:$0xf]
        %v4356 = vld [vmem:[%s4350 + $0x14] sm:$0xf]
        %v4357 = vld [vmem:[%s4350 + $0x18] sm:$0xf]
        %v4358 = vld [vmem:[%s4350 + $0x1c] sm:$0xf]
        %v4359 = vld [vmem:[%s4350 + $0x20] sm:$0xf]
        %v4360 = vld [vmem:[%s4350 + $0x24] sm:$0xf]
        %v4361 = vld [vmem:[%s4350 + $0x28] sm:$0xf]
        %v4362 = vld [vmem:[%s4350 + $0x2c] sm:$0xf]
        %v4363 = vld [vmem:[%s4350 + $0x30] sm:$0xf]
        %v4364 = vld [vmem:[%s4350 + $0x34] sm:$0xf]
        %v4365 = vld [vmem:[%s4350 + $0x38] sm:$0xf]
        %v4366 = vld [vmem:[%s4350 + $0x3c] sm:$0xf]
        %v4383 = vunpack.c.l.b16 %v4351
        %v4384 = vunpack.c.l.b16 %v4352
        %v4385 = vunpack.c.l.b16 %v4353
        %v4386 = vunpack.c.l.b16 %v4354
        %v4387 = vunpack.c.l.b16 %v4355
        %v4388 = vunpack.c.l.b16 %v4356
        %v4389 = vunpack.c.l.b16 %v4357
        %v4390 = vunpack.c.l.b16 %v4358
        %v4391 = vunpack.c.l.b16 %v4359
        %v4392 = vunpack.c.l.b16 %v4360
        %v4393 = vunpack.c.l.b16 %v4361
        %v4394 = vunpack.c.l.b16 %v4362
        %v4395 = vunpack.c.l.b16 %v4363
        %v4396 = vunpack.c.l.b16 %v4364
        %v4397 = vunpack.c.l.b16 %v4365
        %v4398 = vunpack.c.l.b16 %v4366
        %v4399 = vpack.c.b16 %v4384, %v4383
        %v4400 = vpack.c.b16 %v4386, %v4385
        %v4401 = vpack.c.b16 %v4388, %v4387
        %v4402 = vpack.c.b16 %v4390, %v4389
        %v4403 = vpack.c.b16 %v4392, %v4391
        %v4404 = vpack.c.b16 %v4394, %v4393
        %v4405 = vpack.c.b16 %v4396, %v4395
        %v4406 = vpack.c.b16 %v4398, %v4397
        %4415 = vmatpush.bf16.msra.mxu0 %v4406
        %4416 = vmatpush.bf16.msra.mxu0 %v4405
        %4417 = vmatpush.bf16.msra.mxu0 %v4404
        %4418 = vmatpush.bf16.msra.mxu0 %v4403
        %4419 = vmatpush.bf16.msra.mxu0 %v4402
        %4420 = vmatpush.bf16.msra.mxu0 %v4401
        %4421 = vmatpush.bf16.msra.mxu0 %v4400
        %4422 = vmatpush.bf16.msra.mxu0 %v4399
        %4423 = vmatmul.bf16.gmra.mxu0 %v3738
        %v4424 = vpop.f32.mrf.mxu0
        %v4425 = vadd.f32 0.0, %v4424
        %v4426 = vpop.f32.mrf.mxu0
        %v4427 = vadd.f32 0.0, %v4426
        %4428 = vmatmul.bf16.gmra.mxu0 %v3739
        %v4429 = vpop.f32.mrf.mxu0
        %v4430 = vadd.f32 0.0, %v4429
        %v4431 = vpop.f32.mrf.mxu0
        %v4432 = vadd.f32 0.0, %v4431
        %4433 = vmatmul.bf16.gmra.mxu0 %v4086
        %v4434 = vpop.f32.mrf.mxu0
        %v4435 = vadd.f32 0.0, %v4434
        %v4436 = vpop.f32.mrf.mxu0
        %v4437 = vadd.f32 0.0, %v4436
        %4438 = vmatmul.bf16.gmra.mxu0 %v3714
        %v4439 = vpop.f32.mrf.mxu0
        %v4440 = vadd.f32 0.0, %v4439
        %v4441 = vpop.f32.mrf.mxu0
        %v4442 = vadd.f32 0.0, %v4441
        %4443 = vmatmul.bf16.gmra.mxu0 %v3741
        %v4444 = vpop.f32.mrf.mxu0
        %v4445 = vadd.f32 0.0, %v4444
        %v4446 = vpop.f32.mrf.mxu0
        %v4447 = vadd.f32 0.0, %v4446
        %4448 = vmatmul.bf16.gmra.mxu0 %v3742
        %v4449 = vpop.f32.mrf.mxu0
        %v4450 = vadd.f32 0.0, %v4449
        %v4451 = vpop.f32.mrf.mxu0
        %v4452 = vadd.f32 0.0, %v4451
        %4453 = vmatmul.bf16.gmra.mxu0 %v4087
        %v4454 = vpop.f32.mrf.mxu0
        %v4455 = vadd.f32 0.0, %v4454
        %v4456 = vpop.f32.mrf.mxu0
        %v4457 = vadd.f32 0.0, %v4456
        %4458 = vmatmul.bf16.gmra.mxu0 %v3714
        %v4459 = vpop.f32.mrf.mxu0
        %v4460 = vadd.f32 0.0, %v4459
        %v4461 = vpop.f32.mrf.mxu0
        %v4462 = vadd.f32 0.0, %v4461
        %4463 = vdwg.mxu0
        %v4464 = vadd.f32 %v4334, %v4425
        %v4465 = vadd.f32 %v4335, %v4427
        %v4466 = vadd.f32 %v4336, %v4430
        %v4467 = vadd.f32 %v4337, %v4432
        %v4468 = vadd.f32 %v4338, %v4435
        %v4469 = vadd.f32 %v4339, %v4437
        %v4470 = vadd.f32 %v4340, %v4440
        %v4471 = vadd.f32 %v4341, %v4442
        %v4472 = vadd.f32 %v4342, %v4445
        %v4473 = vadd.f32 %v4343, %v4447
        %v4474 = vadd.f32 %v4344, %v4450
        %v4475 = vadd.f32 %v4345, %v4452
        %v4476 = vadd.f32 %v4346, %v4455
        %v4477 = vadd.f32 %v4347, %v4457
        %v4478 = vadd.f32 %v4348, %v4460
        %v4479 = vadd.f32 %v4349, %v4462
        %s4480 = scalar_lea.vmem [#allocation10], 384
        %v4481 = vld [vmem:[%s4480] sm:$0xf]
        %v4482 = vld [vmem:[%s4480 + $0x4] sm:$0xf]
        %v4483 = vld [vmem:[%s4480 + $0x8] sm:$0xf]
        %v4484 = vld [vmem:[%s4480 + $0xc] sm:$0xf]
        %v4485 = vld [vmem:[%s4480 + $0x10] sm:$0xf]
        %v4486 = vld [vmem:[%s4480 + $0x14] sm:$0xf]
        %v4487 = vld [vmem:[%s4480 + $0x18] sm:$0xf]
        %v4488 = vld [vmem:[%s4480 + $0x1c] sm:$0xf]
        %v4489 = vld [vmem:[%s4480 + $0x20] sm:$0xf]
        %v4490 = vld [vmem:[%s4480 + $0x24] sm:$0xf]
        %v4491 = vld [vmem:[%s4480 + $0x28] sm:$0xf]
        %v4492 = vld [vmem:[%s4480 + $0x2c] sm:$0xf]
        %v4493 = vld [vmem:[%s4480 + $0x30] sm:$0xf]
        %v4494 = vld [vmem:[%s4480 + $0x34] sm:$0xf]
        %v4495 = vld [vmem:[%s4480 + $0x38] sm:$0xf]
        %v4496 = vld [vmem:[%s4480 + $0x3c] sm:$0xf]
        %v4513 = vunpack.c.l.b16 %v4481
        %v4514 = vunpack.c.l.b16 %v4482
        %v4515 = vunpack.c.l.b16 %v4483
        %v4516 = vunpack.c.l.b16 %v4484
        %v4517 = vunpack.c.l.b16 %v4485
        %v4518 = vunpack.c.l.b16 %v4486
        %v4519 = vunpack.c.l.b16 %v4487
        %v4520 = vunpack.c.l.b16 %v4488
        %v4521 = vunpack.c.l.b16 %v4489
        %v4522 = vunpack.c.l.b16 %v4490
        %v4523 = vunpack.c.l.b16 %v4491
        %v4524 = vunpack.c.l.b16 %v4492
        %v4525 = vunpack.c.l.b16 %v4493
        %v4526 = vunpack.c.l.b16 %v4494
        %v4527 = vunpack.c.l.b16 %v4495
        %v4528 = vunpack.c.l.b16 %v4496
        %v4529 = vpack.c.b16 %v4514, %v4513
        %v4530 = vpack.c.b16 %v4516, %v4515
        %v4531 = vpack.c.b16 %v4518, %v4517
        %v4532 = vpack.c.b16 %v4520, %v4519
        %v4533 = vpack.c.b16 %v4522, %v4521
        %v4534 = vpack.c.b16 %v4524, %v4523
        %v4535 = vpack.c.b16 %v4526, %v4525
        %v4536 = vpack.c.b16 %v4528, %v4527
        %4545 = vmatpush.bf16.msra.mxu0 %v4536
        %4546 = vmatpush.bf16.msra.mxu0 %v4535
        %4547 = vmatpush.bf16.msra.mxu0 %v4534
        %4548 = vmatpush.bf16.msra.mxu0 %v4533
        %4549 = vmatpush.bf16.msra.mxu0 %v4532
        %4550 = vmatpush.bf16.msra.mxu0 %v4531
        %4551 = vmatpush.bf16.msra.mxu0 %v4530
        %4552 = vmatpush.bf16.msra.mxu0 %v4529
        %4553 = vmatmul.bf16.gmra.mxu0 %v3717
        %v4554 = vpop.f32.mrf.mxu0
        %v4555 = vadd.f32 0.0, %v4554
        %v4556 = vpop.f32.mrf.mxu0
        %v4557 = vadd.f32 0.0, %v4556
        %4558 = vmatmul.bf16.gmra.mxu0 %v3954
        %v4559 = vpop.f32.mrf.mxu0
        %v4560 = vadd.f32 0.0, %v4559
        %v4561 = vpop.f32.mrf.mxu0
        %v4562 = vadd.f32 0.0, %v4561
        %4563 = vmatmul.bf16.gmra.mxu0 %v4218
        %v4564 = vpop.f32.mrf.mxu0
        %v4565 = vadd.f32 0.0, %v4564
        %v4566 = vpop.f32.mrf.mxu0
        %v4567 = vadd.f32 0.0, %v4566
        %4568 = vmatmul.bf16.gmra.mxu0 %v3714
        %v4569 = vpop.f32.mrf.mxu0
        %v4570 = vadd.f32 0.0, %v4569
        %v4571 = vpop.f32.mrf.mxu0
        %v4572 = vadd.f32 0.0, %v4571
        %4573 = vmatmul.bf16.gmra.mxu0 %v3720
        %v4574 = vpop.f32.mrf.mxu0
        %v4575 = vadd.f32 0.0, %v4574
        %v4576 = vpop.f32.mrf.mxu0
        %v4577 = vadd.f32 0.0, %v4576
        %4578 = vmatmul.bf16.gmra.mxu0 %v3955
        %v4579 = vpop.f32.mrf.mxu0
        %v4580 = vadd.f32 0.0, %v4579
        %v4581 = vpop.f32.mrf.mxu0
        %v4582 = vadd.f32 0.0, %v4581
        %4583 = vmatmul.bf16.gmra.mxu0 %v4219
        %v4584 = vpop.f32.mrf.mxu0
        %v4585 = vadd.f32 0.0, %v4584
        %v4586 = vpop.f32.mrf.mxu0
        %v4587 = vadd.f32 0.0, %v4586
        %4588 = vmatmul.bf16.gmra.mxu0 %v3714
        %v4589 = vpop.f32.mrf.mxu0
        %v4590 = vadd.f32 0.0, %v4589
        %v4591 = vpop.f32.mrf.mxu0
        %v4592 = vadd.f32 0.0, %v4591
        %4593 = vdwg.mxu0
        %v4594 = vadd.f32 %v4464, %v4555
        %v4595 = vadd.f32 %v4465, %v4557
        %v4596 = vadd.f32 %v4466, %v4560
        %v4597 = vadd.f32 %v4467, %v4562
        %v4598 = vadd.f32 %v4468, %v4565
        %v4599 = vadd.f32 %v4469, %v4567
        %v4600 = vadd.f32 %v4470, %v4570
        %v4601 = vadd.f32 %v4471, %v4572
        %v4602 = vadd.f32 %v4472, %v4575
        %v4603 = vadd.f32 %v4473, %v4577
        %v4604 = vadd.f32 %v4474, %v4580
        %v4605 = vadd.f32 %v4475, %v4582
        %v4606 = vadd.f32 %v4476, %v4585
        %v4607 = vadd.f32 %v4477, %v4587
        %v4608 = vadd.f32 %v4478, %v4590
        %v4609 = vadd.f32 %v4479, %v4592
        %v4610 = vld [vmem:[#allocation11] sm:$0x1]
        %v4612 = vperm.slane %v4610, 0
        %v4614 = vadd.f32 %v4594, %v4612
        %v4615 = vadd.f32 %v4595, %v4612
        %v4616 = vadd.f32 %v4596, %v4612
        %v4617 = vadd.f32 %v4597, %v4612
        %v4618 = vadd.f32 %v4598, %v4612
        %v4619 = vadd.f32 %v4599, %v4612
        %v4620 = vadd.f32 %v4600, %v4612
        %v4621 = vadd.f32 %v4601, %v4612
        %v4622 = vadd.f32 %v4602, %v4612
        %v4623 = vadd.f32 %v4603, %v4612
        %v4624 = vadd.f32 %v4604, %v4612
        %v4625 = vadd.f32 %v4605, %v4612
        %v4626 = vadd.f32 %v4606, %v4612
        %v4627 = vadd.f32 %v4607, %v4612
        %v4628 = vadd.f32 %v4608, %v4612
        %v4629 = vadd.f32 %v4609, %v4612
        %v4630 = vmax.f32 %v4614, 0.0
        %v4631 = vmax.f32 %v4615, 0.0
        %v4632 = vmax.f32 %v4616, 0.0
        %v4633 = vmax.f32 %v4617, 0.0
        %v4634 = vmax.f32 %v4618, 0.0
        %v4635 = vmax.f32 %v4619, 0.0
        %v4636 = vmax.f32 %v4620, 0.0
        %v4637 = vmax.f32 %v4621, 0.0
        %v4638 = vmax.f32 %v4622, 0.0
        %v4639 = vmax.f32 %v4623, 0.0
        %v4640 = vmax.f32 %v4624, 0.0
        %v4641 = vmax.f32 %v4625, 0.0
        %v4642 = vmax.f32 %v4626, 0.0
        %v4643 = vmax.f32 %v4627, 0.0
        %v4644 = vmax.f32 %v4628, 0.0
        %v4645 = vmax.f32 %v4629, 0.0
        %v4646 = vpack.c.bf16 %v2213, %v2211
        %v4647 = vpack.c.bf16 %v2217, %v2215
        %v4648 = vpack.c.bf16 %v2221, %v2219
        %v4649 = vpack.c.bf16 %v2225, %v2223
        %v4650 = vpack.c.bf16 %v2229, %v2227
        %v4651 = vpack.c.bf16 %v2233, %v2231
        %v4652 = vpack.c.bf16 %v2237, %v2235
        %v4653 = vpack.c.bf16 %v2241, %v2239
        %v4654 = vld [vmem:[#allocation13] sm:$0xff]
        %v4655 = vld [vmem:[#allocation13 + $0x8] sm:$0xff]
        %v4656 = vld [vmem:[#allocation13 + $0x10] sm:$0xff]
        %v4657 = vld [vmem:[#allocation13 + $0x18] sm:$0xf]
        %v4658 = vld [vmem:[#allocation13 + $0x1c] sm:$0xff]
        %v4659 = vld [vmem:[#allocation13 + $0x24] sm:$0xff]
        %v4660 = vld [vmem:[#allocation13 + $0x2c] sm:$0xff]
        %v4661 = vld [vmem:[#allocation13 + $0x34] sm:$0xf]
        %v4662 = vld [vmem:[#allocation13 + $0x38] sm:$0xff]
        %v4663 = vld [vmem:[#allocation13 + $0x40] sm:$0xff]
        %v4664 = vld [vmem:[#allocation13 + $0x48] sm:$0xff]
        %v4665 = vld [vmem:[#allocation13 + $0x50] sm:$0xf]
        %v4666 = vld [vmem:[#allocation13 + $0x54] sm:$0xff]
        %v4667 = vld [vmem:[#allocation13 + $0x5c] sm:$0xff]
        %v4668 = vld [vmem:[#allocation13 + $0x64] sm:$0xff]
        %v4669 = vld [vmem:[#allocation13 + $0x6c] sm:$0xf]
        %v4670 = vld [vmem:[#allocation13 + $0x70] sm:$0xff]
        %v4671 = vld [vmem:[#allocation13 + $0x78] sm:$0xff]
        %v4672 = vld [vmem:[#allocation13 + $0x80] sm:$0xff]
        %v4673 = vld [vmem:[#allocation13 + $0x88] sm:$0xf]
        %v4674 = vld [vmem:[#allocation13 + $0x8c] sm:$0xff]
        %v4675 = vld [vmem:[#allocation13 + $0x94] sm:$0xff]
        %v4676 = vld [vmem:[#allocation13 + $0x9c] sm:$0xff]
        %v4677 = vld [vmem:[#allocation13 + $0xa4] sm:$0xf]
        %v4678 = vld [vmem:[#allocation13 + $0xa8] sm:$0xff]
        %v4679 = vld [vmem:[#allocation13 + $0xb0] sm:$0xff]
        %v4680 = vld [vmem:[#allocation13 + $0xb8] sm:$0xff]
        %v4681 = vld [vmem:[#allocation13 + $0xc0] sm:$0xf]
        %v4682 = vld [vmem:[#allocation13 + $0xc4] sm:$0xff]
        %v4683 = vld [vmem:[#allocation13 + $0xcc] sm:$0xff]
        %v4684 = vld [vmem:[#allocation13 + $0xd4] sm:$0xff]
        %v4685 = vld [vmem:[#allocation13 + $0xdc] sm:$0xf]
        %v4686 = vld [vmem:[#allocation13 + $0xe0] sm:$0xff]
        %v4687 = vld [vmem:[#allocation13 + $0xe8] sm:$0xff]
        %v4688 = vld [vmem:[#allocation13 + $0xf0] sm:$0xff]
        %v4689 = vld [vmem:[#allocation13 + $0xf8] sm:$0xf]
        %v4690 = vld [vmem:[#allocation13 + $0xfc] sm:$0xff]
        %v4691 = vld [vmem:[#allocation13 + $0x104] sm:$0xff]
        %v4692 = vld [vmem:[#allocation13 + $0x10c] sm:$0xff]
        %v4693 = vld [vmem:[#allocation13 + $0x114] sm:$0xf]
        %v4694 = vld [vmem:[#allocation13 + $0x118] sm:$0xff]
        %v4695 = vld [vmem:[#allocation13 + $0x120] sm:$0xff]
        %v4696 = vld [vmem:[#allocation13 + $0x128] sm:$0xff]
        %v4697 = vld [vmem:[#allocation13 + $0x130] sm:$0xf]
        %v4698 = vld [vmem:[#allocation13 + $0x134] sm:$0xff]
        %v4699 = vld [vmem:[#allocation13 + $0x13c] sm:$0xff]
        %v4700 = vld [vmem:[#allocation13 + $0x144] sm:$0xff]
        %v4701 = vld [vmem:[#allocation13 + $0x14c] sm:$0xf]
        %v4702 = vld [vmem:[#allocation13 + $0x150] sm:$0xff]
        %v4703 = vld [vmem:[#allocation13 + $0x158] sm:$0xff]
        %v4704 = vld [vmem:[#allocation13 + $0x160] sm:$0xff]
        %v4705 = vld [vmem:[#allocation13 + $0x168] sm:$0xf]
        %v4706 = vld [vmem:[#allocation13 + $0x16c] sm:$0xff]
        %v4707 = vld [vmem:[#allocation13 + $0x174] sm:$0xff]
        %v4708 = vld [vmem:[#allocation13 + $0x17c] sm:$0xff]
        %v4709 = vld [vmem:[#allocation13 + $0x184] sm:$0xf]
        %v4710 = vld [vmem:[#allocation13 + $0x188] sm:$0xff]
        %v4711 = vld [vmem:[#allocation13 + $0x190] sm:$0xff]
        %v4712 = vld [vmem:[#allocation13 + $0x198] sm:$0xff]
        %v4713 = vld [vmem:[#allocation13 + $0x1a0] sm:$0xf]
        %v4714 = vld [vmem:[#allocation13 + $0x1a4] sm:$0xff]
        %v4715 = vld [vmem:[#allocation13 + $0x1ac] sm:$0xff]
        %v4716 = vld [vmem:[#allocation13 + $0x1b4] sm:$0xff]
        %v4717 = vld [vmem:[#allocation13 + $0x1bc] sm:$0xf]
        %v4718 = vpack.c.bf16 %v4631, %v4630
        %v4719 = vpack.c.bf16 %v4633, %v4632
        %v4720 = vpack.c.bf16 %v4635, %v4634
        %v4721 = vpack.c.bf16 %v4637, %v4636
        %v4722 = vpack.c.bf16 %v4639, %v4638
        %v4723 = vpack.c.bf16 %v4641, %v4640
        %v4724 = vpack.c.bf16 %v4643, %v4642
        %v4725 = vpack.c.bf16 %v4645, %v4644
        %v4726 = vld [vmem:[#allocation14] sm:$0xff]
        %v4727 = vld [vmem:[#allocation14 + $0x8] sm:$0xff]
        %v4728 = vld [vmem:[#allocation14 + $0x10] sm:$0xff]
        %v4729 = vld [vmem:[#allocation14 + $0x18] sm:$0xf]
        %v4730 = vld [vmem:[#allocation14 + $0x1c] sm:$0xff]
        %v4731 = vld [vmem:[#allocation14 + $0x24] sm:$0xff]
        %v4732 = vld [vmem:[#allocation14 + $0x2c] sm:$0xff]
        %v4733 = vld [vmem:[#allocation14 + $0x34] sm:$0xf]
        %v4734 = vld [vmem:[#allocation14 + $0x38] sm:$0xff]
        %v4735 = vld [vmem:[#allocation14 + $0x40] sm:$0xff]
        %v4736 = vld [vmem:[#allocation14 + $0x48] sm:$0xff]
        %v4737 = vld [vmem:[#allocation14 + $0x50] sm:$0xf]
        %v4738 = vld [vmem:[#allocation14 + $0x54] sm:$0xff]
        %v4739 = vld [vmem:[#allocation14 + $0x5c] sm:$0xff]
        %v4740 = vld [vmem:[#allocation14 + $0x64] sm:$0xff]
        %v4741 = vld [vmem:[#allocation14 + $0x6c] sm:$0xf]
        %v4742 = vld [vmem:[#allocation14 + $0x70] sm:$0xff]
        %v4743 = vld [vmem:[#allocation14 + $0x78] sm:$0xff]
        %v4744 = vld [vmem:[#allocation14 + $0x80] sm:$0xff]
        %v4745 = vld [vmem:[#allocation14 + $0x88] sm:$0xf]
        %v4746 = vld [vmem:[#allocation14 + $0x8c] sm:$0xff]
        %v4747 = vld [vmem:[#allocation14 + $0x94] sm:$0xff]
        %v4748 = vld [vmem:[#allocation14 + $0x9c] sm:$0xff]
        %v4749 = vld [vmem:[#allocation14 + $0xa4] sm:$0xf]
        %v4750 = vld [vmem:[#allocation14 + $0xa8] sm:$0xff]
        %v4751 = vld [vmem:[#allocation14 + $0xb0] sm:$0xff]
        %v4752 = vld [vmem:[#allocation14 + $0xb8] sm:$0xff]
        %v4753 = vld [vmem:[#allocation14 + $0xc0] sm:$0xf]
        %v4754 = vld [vmem:[#allocation14 + $0xc4] sm:$0xff]
        %v4755 = vld [vmem:[#allocation14 + $0xcc] sm:$0xff]
        %v4756 = vld [vmem:[#allocation14 + $0xd4] sm:$0xff]
        %v4757 = vld [vmem:[#allocation14 + $0xdc] sm:$0xf]
        %v4758 = vld [vmem:[#allocation14 + $0xe0] sm:$0xff]
        %v4759 = vld [vmem:[#allocation14 + $0xe8] sm:$0xff]
        %v4760 = vld [vmem:[#allocation14 + $0xf0] sm:$0xff]
        %v4761 = vld [vmem:[#allocation14 + $0xf8] sm:$0xf]
        %v4762 = vld [vmem:[#allocation14 + $0xfc] sm:$0xff]
        %v4763 = vld [vmem:[#allocation14 + $0x104] sm:$0xff]
        %v4764 = vld [vmem:[#allocation14 + $0x10c] sm:$0xff]
        %v4765 = vld [vmem:[#allocation14 + $0x114] sm:$0xf]
        %v4766 = vld [vmem:[#allocation14 + $0x118] sm:$0xff]
        %v4767 = vld [vmem:[#allocation14 + $0x120] sm:$0xff]
        %v4768 = vld [vmem:[#allocation14 + $0x128] sm:$0xff]
        %v4769 = vld [vmem:[#allocation14 + $0x130] sm:$0xf]
        %v4770 = vld [vmem:[#allocation14 + $0x134] sm:$0xff]
        %v4771 = vld [vmem:[#allocation14 + $0x13c] sm:$0xff]
        %v4772 = vld [vmem:[#allocation14 + $0x144] sm:$0xff]
        %v4773 = vld [vmem:[#allocation14 + $0x14c] sm:$0xf]
        %v4774 = vld [vmem:[#allocation14 + $0x150] sm:$0xff]
        %v4775 = vld [vmem:[#allocation14 + $0x158] sm:$0xff]
        %v4776 = vld [vmem:[#allocation14 + $0x160] sm:$0xff]
        %v4777 = vld [vmem:[#allocation14 + $0x168] sm:$0xf]
        %v4778 = vld [vmem:[#allocation14 + $0x16c] sm:$0xff]
        %v4779 = vld [vmem:[#allocation14 + $0x174] sm:$0xff]
        %v4780 = vld [vmem:[#allocation14 + $0x17c] sm:$0xff]
        %v4781 = vld [vmem:[#allocation14 + $0x184] sm:$0xf]
        %v4782 = vld [vmem:[#allocation14 + $0x188] sm:$0xff]
        %v4783 = vld [vmem:[#allocation14 + $0x190] sm:$0xff]
        %v4784 = vld [vmem:[#allocation14 + $0x198] sm:$0xff]
        %v4785 = vld [vmem:[#allocation14 + $0x1a0] sm:$0xf]
        %v4786 = vld [vmem:[#allocation14 + $0x1a4] sm:$0xff]
        %v4787 = vld [vmem:[#allocation14 + $0x1ac] sm:$0xff]
        %v4788 = vld [vmem:[#allocation14 + $0x1b4] sm:$0xff]
        %v4789 = vld [vmem:[#allocation14 + $0x1bc] sm:$0xf]
        %v4854 = vunpack.c.l.b16 %v4726
        %v4855 = vunpack.c.h.b16 %v4726
        %v4856 = vunpack.c.l.b16 %v4727
        %v4857 = vunpack.c.h.b16 %v4727
        %v4858 = vunpack.c.l.b16 %v4728
        %v4859 = vunpack.c.h.b16 %v4728
        %v4860 = vunpack.c.l.b16 %v4729
        %v4861 = vunpack.c.l.b16 %v4730
        %v4862 = vunpack.c.h.b16 %v4730
        %v4863 = vunpack.c.l.b16 %v4731
        %v4864 = vunpack.c.h.b16 %v4731
        %v4865 = vunpack.c.l.b16 %v4732
        %v4866 = vunpack.c.h.b16 %v4732
        %v4867 = vunpack.c.l.b16 %v4733
        %v4868 = vunpack.c.l.b16 %v4734
        %v4869 = vunpack.c.h.b16 %v4734
        %v4870 = vunpack.c.l.b16 %v4735
        %v4871 = vunpack.c.h.b16 %v4735
        %v4872 = vunpack.c.l.b16 %v4736
        %v4873 = vunpack.c.h.b16 %v4736
        %v4874 = vunpack.c.l.b16 %v4737
        %v4875 = vunpack.c.l.b16 %v4738
        %v4876 = vunpack.c.h.b16 %v4738
        %v4877 = vunpack.c.l.b16 %v4739
        %v4878 = vunpack.c.h.b16 %v4739
        %v4879 = vunpack.c.l.b16 %v4740
        %v4880 = vunpack.c.h.b16 %v4740
        %v4881 = vunpack.c.l.b16 %v4741
        %v4882 = vunpack.c.l.b16 %v4742
        %v4883 = vunpack.c.h.b16 %v4742
        %v4884 = vunpack.c.l.b16 %v4743
        %v4885 = vunpack.c.h.b16 %v4743
        %v4886 = vunpack.c.l.b16 %v4744
        %v4887 = vunpack.c.h.b16 %v4744
        %v4888 = vunpack.c.l.b16 %v4745
        %v4889 = vunpack.c.l.b16 %v4746
        %v4890 = vunpack.c.h.b16 %v4746
        %v4891 = vunpack.c.l.b16 %v4747
        %v4892 = vunpack.c.h.b16 %v4747
        %v4893 = vunpack.c.l.b16 %v4748
        %v4894 = vunpack.c.h.b16 %v4748
        %v4895 = vunpack.c.l.b16 %v4749
        %v4896 = vunpack.c.l.b16 %v4750
        %v4897 = vunpack.c.h.b16 %v4750
        %v4898 = vunpack.c.l.b16 %v4751
        %v4899 = vunpack.c.h.b16 %v4751
        %v4900 = vunpack.c.l.b16 %v4752
        %v4901 = vunpack.c.h.b16 %v4752
        %v4902 = vunpack.c.l.b16 %v4753
        %v4903 = vunpack.c.l.b16 %v4754
        %v4904 = vunpack.c.h.b16 %v4754
        %v4905 = vunpack.c.l.b16 %v4755
        %v4906 = vunpack.c.h.b16 %v4755
        %v4907 = vunpack.c.l.b16 %v4756
        %v4908 = vunpack.c.h.b16 %v4756
        %v4909 = vunpack.c.l.b16 %v4757
        %v4910 = vunpack.c.l.b16 %v4758
        %v4911 = vunpack.c.h.b16 %v4758
        %v4912 = vunpack.c.l.b16 %v4759
        %v4913 = vunpack.c.h.b16 %v4759
        %v4914 = vunpack.c.l.b16 %v4760
        %v4915 = vunpack.c.h.b16 %v4760
        %v4916 = vunpack.c.l.b16 %v4761
        %v4917 = vunpack.c.l.b16 %v4762
        %v4918 = vunpack.c.h.b16 %v4762
        %v4919 = vunpack.c.l.b16 %v4763
        %v4920 = vunpack.c.h.b16 %v4763
        %v4921 = vunpack.c.l.b16 %v4764
        %v4922 = vunpack.c.h.b16 %v4764
        %v4923 = vunpack.c.l.b16 %v4765
        %v4924 = vunpack.c.l.b16 %v4766
        %v4925 = vunpack.c.h.b16 %v4766
        %v4926 = vunpack.c.l.b16 %v4767
        %v4927 = vunpack.c.h.b16 %v4767
        %v4928 = vunpack.c.l.b16 %v4768
        %v4929 = vunpack.c.h.b16 %v4768
        %v4930 = vunpack.c.l.b16 %v4769
        %v4931 = vunpack.c.l.b16 %v4770
        %v4932 = vunpack.c.h.b16 %v4770
        %v4933 = vunpack.c.l.b16 %v4771
        %v4934 = vunpack.c.h.b16 %v4771
        %v4935 = vunpack.c.l.b16 %v4772
        %v4936 = vunpack.c.h.b16 %v4772
        %v4937 = vunpack.c.l.b16 %v4773
        %v4938 = vunpack.c.l.b16 %v4774
        %v4939 = vunpack.c.h.b16 %v4774
        %v4940 = vunpack.c.l.b16 %v4775
        %v4941 = vunpack.c.h.b16 %v4775
        %v4942 = vunpack.c.l.b16 %v4776
        %v4943 = vunpack.c.h.b16 %v4776
        %v4944 = vunpack.c.l.b16 %v4777
        %v4945 = vunpack.c.l.b16 %v4778
        %v4946 = vunpack.c.h.b16 %v4778
        %v4947 = vunpack.c.l.b16 %v4779
        %v4948 = vunpack.c.h.b16 %v4779
        %v4949 = vunpack.c.l.b16 %v4780
        %v4950 = vunpack.c.h.b16 %v4780
        %v4951 = vunpack.c.l.b16 %v4781
        %v4952 = vunpack.c.l.b16 %v4782
        %v4953 = vunpack.c.h.b16 %v4782
        %v4954 = vunpack.c.l.b16 %v4783
        %v4955 = vunpack.c.h.b16 %v4783
        %v4956 = vunpack.c.l.b16 %v4784
        %v4957 = vunpack.c.h.b16 %v4784
        %v4958 = vunpack.c.l.b16 %v4785
        %v4959 = vunpack.c.l.b16 %v4786
        %v4960 = vunpack.c.h.b16 %v4786
        %v4961 = vunpack.c.l.b16 %v4787
        %v4962 = vunpack.c.h.b16 %v4787
        %v4963 = vunpack.c.l.b16 %v4788
        %v4964 = vunpack.c.h.b16 %v4788
        %v4965 = vunpack.c.l.b16 %v4789
        %v4966 = vpack.c.b16 %v4861, %v4854
        %v4967 = vpack.c.b16 %v4862, %v4855
        %v4968 = vpack.c.b16 %v4863, %v4856
        %v4969 = vpack.c.b16 %v4864, %v4857
        %v4970 = vpack.c.b16 %v4865, %v4858
        %v4971 = vpack.c.b16 %v4866, %v4859
        %v4972 = vpack.c.b16 %v4867, %v4860
        %v4973 = vpack.c.b16 %v4875, %v4868
        %v4974 = vpack.c.b16 %v4876, %v4869
        %v4975 = vpack.c.b16 %v4877, %v4870
        %v4976 = vpack.c.b16 %v4878, %v4871
        %v4977 = vpack.c.b16 %v4879, %v4872
        %v4978 = vpack.c.b16 %v4880, %v4873
        %v4979 = vpack.c.b16 %v4881, %v4874
        %v4980 = vpack.c.b16 %v4889, %v4882
        %v4981 = vpack.c.b16 %v4890, %v4883
        %v4982 = vpack.c.b16 %v4891, %v4884
        %v4983 = vpack.c.b16 %v4892, %v4885
        %v4984 = vpack.c.b16 %v4893, %v4886
        %v4985 = vpack.c.b16 %v4894, %v4887
        %v4986 = vpack.c.b16 %v4895, %v4888
        %v4987 = vpack.c.b16 %v4903, %v4896
        %v4988 = vpack.c.b16 %v4904, %v4897
        %v4989 = vpack.c.b16 %v4905, %v4898
        %v4990 = vpack.c.b16 %v4906, %v4899
        %v4991 = vpack.c.b16 %v4907, %v4900
        %v4992 = vpack.c.b16 %v4908, %v4901
        %v4993 = vpack.c.b16 %v4909, %v4902
        %v4994 = vpack.c.b16 %v4917, %v4910
        %v4995 = vpack.c.b16 %v4918, %v4911
        %v4996 = vpack.c.b16 %v4919, %v4912
        %v4997 = vpack.c.b16 %v4920, %v4913
        %v4998 = vpack.c.b16 %v4921, %v4914
        %v4999 = vpack.c.b16 %v4922, %v4915
        %v5000 = vpack.c.b16 %v4923, %v4916
        %v5001 = vpack.c.b16 %v4931, %v4924
        %v5002 = vpack.c.b16 %v4932, %v4925
        %v5003 = vpack.c.b16 %v4933, %v4926
        %v5004 = vpack.c.b16 %v4934, %v4927
        %v5005 = vpack.c.b16 %v4935, %v4928
        %v5006 = vpack.c.b16 %v4936, %v4929
        %v5007 = vpack.c.b16 %v4937, %v4930
        %v5008 = vpack.c.b16 %v4945, %v4938
        %v5009 = vpack.c.b16 %v4946, %v4939
        %v5010 = vpack.c.b16 %v4947, %v4940
        %v5011 = vpack.c.b16 %v4948, %v4941
        %v5012 = vpack.c.b16 %v4949, %v4942
        %v5013 = vpack.c.b16 %v4950, %v4943
        %v5014 = vpack.c.b16 %v4951, %v4944
        %v5015 = vpack.c.b16 %v4959, %v4952
        %v5016 = vpack.c.b16 %v4960, %v4953
        %v5017 = vpack.c.b16 %v4961, %v4954
        %v5018 = vpack.c.b16 %v4962, %v4955
        %v5019 = vpack.c.b16 %v4963, %v4956
        %v5020 = vpack.c.b16 %v4964, %v4957
        %v5021 = vpack.c.b16 %v4965, %v4958
        %5078 = vmatpush.bf16.msra.mxu0 %v5015
        %5079 = vmatpush.bf16.msra.mxu0 %v5008
        %5080 = vmatpush.bf16.msra.mxu0 %v5001
        %5081 = vmatpush.bf16.msra.mxu0 %v4994
        %5082 = vmatpush.bf16.msra.mxu0 %v4987
        %5083 = vmatpush.bf16.msra.mxu0 %v4980
        %5084 = vmatpush.bf16.msra.mxu0 %v4973
        %5085 = vmatpush.bf16.msra.mxu0 %v4966
        %5086 = vmatmul.bf16.gmra.mxu0 %v4718
        %v5087 = vpop.f32.mrf.mxu0
        %v5088 = vadd.f32 0.0, %v5087
        %v5089 = vpop.f32.mrf.mxu0
        %v5090 = vadd.f32 0.0, %v5089
        %5091 = vmatmul.bf16.gmra.mxu0 %v4719
        %v5092 = vpop.f32.mrf.mxu0
        %v5093 = vadd.f32 0.0, %v5092
        %v5094 = vpop.f32.mrf.mxu0
        %v5095 = vadd.f32 0.0, %v5094
        %5096 = vmatmul.bf16.gmra.mxu0 %v4720
        %v5097 = vpop.f32.mrf.mxu0
        %v5098 = vadd.f32 0.0, %v5097
        %v5099 = vpop.f32.mrf.mxu0
        %v5100 = vadd.f32 0.0, %v5099
        %5101 = vmatmul.bf16.gmra.mxu0 %v4721
        %v5102 = vpop.f32.mrf.mxu0
        %v5103 = vadd.f32 0.0, %v5102
        %v5104 = vpop.f32.mrf.mxu0
        %v5105 = vadd.f32 0.0, %v5104
        %5106 = vmatmul.bf16.gmra.mxu0 %v4722
        %v5107 = vpop.f32.mrf.mxu0
        %v5108 = vadd.f32 0.0, %v5107
        %v5109 = vpop.f32.mrf.mxu0
        %v5110 = vadd.f32 0.0, %v5109
        %5111 = vmatmul.bf16.gmra.mxu0 %v4723
        %v5112 = vpop.f32.mrf.mxu0
        %v5113 = vadd.f32 0.0, %v5112
        %v5114 = vpop.f32.mrf.mxu0
        %v5115 = vadd.f32 0.0, %v5114
        %5116 = vmatmul.bf16.gmra.mxu0 %v4724
        %v5117 = vpop.f32.mrf.mxu0
        %v5118 = vadd.f32 0.0, %v5117
        %v5119 = vpop.f32.mrf.mxu0
        %v5120 = vadd.f32 0.0, %v5119
        %5121 = vmatmul.bf16.gmra.mxu0 %v4725
        %v5122 = vpop.f32.mrf.mxu0
        %v5123 = vadd.f32 0.0, %v5122
        %v5124 = vpop.f32.mrf.mxu0
        %v5125 = vadd.f32 0.0, %v5124
        %5126 = vdwg.mxu0
        %5127 = vmatpush.bf16.msra.mxu0 %v5016
        %5128 = vmatpush.bf16.msra.mxu0 %v5009
        %5129 = vmatpush.bf16.msra.mxu0 %v5002
        %5130 = vmatpush.bf16.msra.mxu0 %v4995
        %5131 = vmatpush.bf16.msra.mxu0 %v4988
        %5132 = vmatpush.bf16.msra.mxu0 %v4981
        %5133 = vmatpush.bf16.msra.mxu0 %v4974
        %5134 = vmatpush.bf16.msra.mxu0 %v4967
        %5135 = vmatmul.bf16.gmra.mxu0 %v4718
        %v5136 = vpop.f32.mrf.mxu0
        %v5137 = vadd.f32 0.0, %v5136
        %v5138 = vpop.f32.mrf.mxu0
        %v5139 = vadd.f32 0.0, %v5138
        %5140 = vmatmul.bf16.gmra.mxu0 %v4719
        %v5141 = vpop.f32.mrf.mxu0
        %v5142 = vadd.f32 0.0, %v5141
        %v5143 = vpop.f32.mrf.mxu0
        %v5144 = vadd.f32 0.0, %v5143
        %5145 = vmatmul.bf16.gmra.mxu0 %v4720
        %v5146 = vpop.f32.mrf.mxu0
        %v5147 = vadd.f32 0.0, %v5146
        %v5148 = vpop.f32.mrf.mxu0
        %v5149 = vadd.f32 0.0, %v5148
        %5150 = vmatmul.bf16.gmra.mxu0 %v4721
        %v5151 = vpop.f32.mrf.mxu0
        %v5152 = vadd.f32 0.0, %v5151
        %v5153 = vpop.f32.mrf.mxu0
        %v5154 = vadd.f32 0.0, %v5153
        %5155 = vmatmul.bf16.gmra.mxu0 %v4722
        %v5156 = vpop.f32.mrf.mxu0
        %v5157 = vadd.f32 0.0, %v5156
        %v5158 = vpop.f32.mrf.mxu0
        %v5159 = vadd.f32 0.0, %v5158
        %5160 = vmatmul.bf16.gmra.mxu0 %v4723
        %v5161 = vpop.f32.mrf.mxu0
        %v5162 = vadd.f32 0.0, %v5161
        %v5163 = vpop.f32.mrf.mxu0
        %v5164 = vadd.f32 0.0, %v5163
        %5165 = vmatmul.bf16.gmra.mxu0 %v4724
        %v5166 = vpop.f32.mrf.mxu0
        %v5167 = vadd.f32 0.0, %v5166
        %v5168 = vpop.f32.mrf.mxu0
        %v5169 = vadd.f32 0.0, %v5168
        %5170 = vmatmul.bf16.gmra.mxu0 %v4725
        %v5171 = vpop.f32.mrf.mxu0
        %v5172 = vadd.f32 0.0, %v5171
        %v5173 = vpop.f32.mrf.mxu0
        %v5174 = vadd.f32 0.0, %v5173
        %5175 = vdwg.mxu0
        %5176 = vmatpush.bf16.msra.mxu0 %v5017
        %5177 = vmatpush.bf16.msra.mxu0 %v5010
        %5178 = vmatpush.bf16.msra.mxu0 %v5003
        %5179 = vmatpush.bf16.msra.mxu0 %v4996
        %5180 = vmatpush.bf16.msra.mxu0 %v4989
        %5181 = vmatpush.bf16.msra.mxu0 %v4982
        %5182 = vmatpush.bf16.msra.mxu0 %v4975
        %5183 = vmatpush.bf16.msra.mxu0 %v4968
        %5184 = vmatmul.bf16.gmra.mxu0 %v4718
        %v5185 = vpop.f32.mrf.mxu0
        %v5186 = vadd.f32 0.0, %v5185
        %v5187 = vpop.f32.mrf.mxu0
        %v5188 = vadd.f32 0.0, %v5187
        %5189 = vmatmul.bf16.gmra.mxu0 %v4719
        %v5190 = vpop.f32.mrf.mxu0
        %v5191 = vadd.f32 0.0, %v5190
        %v5192 = vpop.f32.mrf.mxu0
        %v5193 = vadd.f32 0.0, %v5192
        %5194 = vmatmul.bf16.gmra.mxu0 %v4720
        %v5195 = vpop.f32.mrf.mxu0
        %v5196 = vadd.f32 0.0, %v5195
        %v5197 = vpop.f32.mrf.mxu0
        %v5198 = vadd.f32 0.0, %v5197
        %5199 = vmatmul.bf16.gmra.mxu0 %v4721
        %v5200 = vpop.f32.mrf.mxu0
        %v5201 = vadd.f32 0.0, %v5200
        %v5202 = vpop.f32.mrf.mxu0
        %v5203 = vadd.f32 0.0, %v5202
        %5204 = vmatmul.bf16.gmra.mxu0 %v4722
        %v5205 = vpop.f32.mrf.mxu0
        %v5206 = vadd.f32 0.0, %v5205
        %v5207 = vpop.f32.mrf.mxu0
        %v5208 = vadd.f32 0.0, %v5207
        %5209 = vmatmul.bf16.gmra.mxu0 %v4723
        %v5210 = vpop.f32.mrf.mxu0
        %v5211 = vadd.f32 0.0, %v5210
        %v5212 = vpop.f32.mrf.mxu0
        %v5213 = vadd.f32 0.0, %v5212
        %5214 = vmatmul.bf16.gmra.mxu0 %v4724
        %v5215 = vpop.f32.mrf.mxu0
        %v5216 = vadd.f32 0.0, %v5215
        %v5217 = vpop.f32.mrf.mxu0
        %v5218 = vadd.f32 0.0, %v5217
        %5219 = vmatmul.bf16.gmra.mxu0 %v4725
        %v5220 = vpop.f32.mrf.mxu0
        %v5221 = vadd.f32 0.0, %v5220
        %v5222 = vpop.f32.mrf.mxu0
        %v5223 = vadd.f32 0.0, %v5222
        %5224 = vdwg.mxu0
        %5225 = vmatpush.bf16.msra.mxu0 %v5018
        %5226 = vmatpush.bf16.msra.mxu0 %v5011
        %5227 = vmatpush.bf16.msra.mxu0 %v5004
        %5228 = vmatpush.bf16.msra.mxu0 %v4997
        %5229 = vmatpush.bf16.msra.mxu0 %v4990
        %5230 = vmatpush.bf16.msra.mxu0 %v4983
        %5231 = vmatpush.bf16.msra.mxu0 %v4976
        %5232 = vmatpush.bf16.msra.mxu0 %v4969
        %5233 = vmatmul.bf16.gmra.mxu0 %v4718
        %v5234 = vpop.f32.mrf.mxu0
        %v5235 = vadd.f32 0.0, %v5234
        %v5236 = vpop.f32.mrf.mxu0
        %v5237 = vadd.f32 0.0, %v5236
        %5238 = vmatmul.bf16.gmra.mxu0 %v4719
        %v5239 = vpop.f32.mrf.mxu0
        %v5240 = vadd.f32 0.0, %v5239
        %v5241 = vpop.f32.mrf.mxu0
        %v5242 = vadd.f32 0.0, %v5241
        %5243 = vmatmul.bf16.gmra.mxu0 %v4720
        %v5244 = vpop.f32.mrf.mxu0
        %v5245 = vadd.f32 0.0, %v5244
        %v5246 = vpop.f32.mrf.mxu0
        %v5247 = vadd.f32 0.0, %v5246
        %5248 = vmatmul.bf16.gmra.mxu0 %v4721
        %v5249 = vpop.f32.mrf.mxu0
        %v5250 = vadd.f32 0.0, %v5249
        %v5251 = vpop.f32.mrf.mxu0
        %v5252 = vadd.f32 0.0, %v5251
        %5253 = vmatmul.bf16.gmra.mxu0 %v4722
        %v5254 = vpop.f32.mrf.mxu0
        %v5255 = vadd.f32 0.0, %v5254
        %v5256 = vpop.f32.mrf.mxu0
        %v5257 = vadd.f32 0.0, %v5256
        %5258 = vmatmul.bf16.gmra.mxu0 %v4723
        %v5259 = vpop.f32.mrf.mxu0
        %v5260 = vadd.f32 0.0, %v5259
        %v5261 = vpop.f32.mrf.mxu0
        %v5262 = vadd.f32 0.0, %v5261
        %5263 = vmatmul.bf16.gmra.mxu0 %v4724
        %v5264 = vpop.f32.mrf.mxu0
        %v5265 = vadd.f32 0.0, %v5264
        %v5266 = vpop.f32.mrf.mxu0
        %v5267 = vadd.f32 0.0, %v5266
        %5268 = vmatmul.bf16.gmra.mxu0 %v4725
        %v5269 = vpop.f32.mrf.mxu0
        %v5270 = vadd.f32 0.0, %v5269
        %v5271 = vpop.f32.mrf.mxu0
        %v5272 = vadd.f32 0.0, %v5271
        %5273 = vdwg.mxu0
        %5274 = vmatpush.bf16.msra.mxu0 %v5019
        %5275 = vmatpush.bf16.msra.mxu0 %v5012
        %5276 = vmatpush.bf16.msra.mxu0 %v5005
        %5277 = vmatpush.bf16.msra.mxu0 %v4998
        %5278 = vmatpush.bf16.msra.mxu0 %v4991
        %5279 = vmatpush.bf16.msra.mxu0 %v4984
        %5280 = vmatpush.bf16.msra.mxu0 %v4977
        %5281 = vmatpush.bf16.msra.mxu0 %v4970
        %5282 = vmatmul.bf16.gmra.mxu0 %v4718
        %v5283 = vpop.f32.mrf.mxu0
        %v5284 = vadd.f32 0.0, %v5283
        %v5285 = vpop.f32.mrf.mxu0
        %v5286 = vadd.f32 0.0, %v5285
        %5287 = vmatmul.bf16.gmra.mxu0 %v4719
        %v5288 = vpop.f32.mrf.mxu0
        %v5289 = vadd.f32 0.0, %v5288
        %v5290 = vpop.f32.mrf.mxu0
        %v5291 = vadd.f32 0.0, %v5290
        %5292 = vmatmul.bf16.gmra.mxu0 %v4720
        %v5293 = vpop.f32.mrf.mxu0
        %v5294 = vadd.f32 0.0, %v5293
        %v5295 = vpop.f32.mrf.mxu0
        %v5296 = vadd.f32 0.0, %v5295
        %5297 = vmatmul.bf16.gmra.mxu0 %v4721
        %v5298 = vpop.f32.mrf.mxu0
        %v5299 = vadd.f32 0.0, %v5298
        %v5300 = vpop.f32.mrf.mxu0
        %v5301 = vadd.f32 0.0, %v5300
        %5302 = vmatmul.bf16.gmra.mxu0 %v4722
        %v5303 = vpop.f32.mrf.mxu0
        %v5304 = vadd.f32 0.0, %v5303
        %v5305 = vpop.f32.mrf.mxu0
        %v5306 = vadd.f32 0.0, %v5305
        %5307 = vmatmul.bf16.gmra.mxu0 %v4723
        %v5308 = vpop.f32.mrf.mxu0
        %v5309 = vadd.f32 0.0, %v5308
        %v5310 = vpop.f32.mrf.mxu0
        %v5311 = vadd.f32 0.0, %v5310
        %5312 = vmatmul.bf16.gmra.mxu0 %v4724
        %v5313 = vpop.f32.mrf.mxu0
        %v5314 = vadd.f32 0.0, %v5313
        %v5315 = vpop.f32.mrf.mxu0
        %v5316 = vadd.f32 0.0, %v5315
        %5317 = vmatmul.bf16.gmra.mxu0 %v4725
        %v5318 = vpop.f32.mrf.mxu0
        %v5319 = vadd.f32 0.0, %v5318
        %v5320 = vpop.f32.mrf.mxu0
        %v5321 = vadd.f32 0.0, %v5320
        %5322 = vdwg.mxu0
        %5323 = vmatpush.bf16.msra.mxu0 %v5020
        %5324 = vmatpush.bf16.msra.mxu0 %v5013
        %5325 = vmatpush.bf16.msra.mxu0 %v5006
        %5326 = vmatpush.bf16.msra.mxu0 %v4999
        %5327 = vmatpush.bf16.msra.mxu0 %v4992
        %5328 = vmatpush.bf16.msra.mxu0 %v4985
        %5329 = vmatpush.bf16.msra.mxu0 %v4978
        %5330 = vmatpush.bf16.msra.mxu0 %v4971
        %5331 = vmatmul.bf16.gmra.mxu0 %v4718
        %v5332 = vpop.f32.mrf.mxu0
        %v5333 = vadd.f32 0.0, %v5332
        %v5334 = vpop.f32.mrf.mxu0
        %v5335 = vadd.f32 0.0, %v5334
        %5336 = vmatmul.bf16.gmra.mxu0 %v4719
        %v5337 = vpop.f32.mrf.mxu0
        %v5338 = vadd.f32 0.0, %v5337
        %v5339 = vpop.f32.mrf.mxu0
        %v5340 = vadd.f32 0.0, %v5339
        %5341 = vmatmul.bf16.gmra.mxu0 %v4720
        %v5342 = vpop.f32.mrf.mxu0
        %v5343 = vadd.f32 0.0, %v5342
        %v5344 = vpop.f32.mrf.mxu0
        %v5345 = vadd.f32 0.0, %v5344
        %5346 = vmatmul.bf16.gmra.mxu0 %v4721
        %v5347 = vpop.f32.mrf.mxu0
        %v5348 = vadd.f32 0.0, %v5347
        %v5349 = vpop.f32.mrf.mxu0
        %v5350 = vadd.f32 0.0, %v5349
        %5351 = vmatmul.bf16.gmra.mxu0 %v4722
        %v5352 = vpop.f32.mrf.mxu0
        %v5353 = vadd.f32 0.0, %v5352
        %v5354 = vpop.f32.mrf.mxu0
        %v5355 = vadd.f32 0.0, %v5354
        %5356 = vmatmul.bf16.gmra.mxu0 %v4723
        %v5357 = vpop.f32.mrf.mxu0
        %v5358 = vadd.f32 0.0, %v5357
        %v5359 = vpop.f32.mrf.mxu0
        %v5360 = vadd.f32 0.0, %v5359
        %5361 = vmatmul.bf16.gmra.mxu0 %v4724
        %v5362 = vpop.f32.mrf.mxu0
        %v5363 = vadd.f32 0.0, %v5362
        %v5364 = vpop.f32.mrf.mxu0
        %v5365 = vadd.f32 0.0, %v5364
        %5366 = vmatmul.bf16.gmra.mxu0 %v4725
        %v5367 = vpop.f32.mrf.mxu0
        %v5368 = vadd.f32 0.0, %v5367
        %v5369 = vpop.f32.mrf.mxu0
        %v5370 = vadd.f32 0.0, %v5369
        %5371 = vdwg.mxu0
        %5372 = vmatpush.bf16.msra.mxu0 %v5021
        %5373 = vmatpush.bf16.msra.mxu0 %v5014
        %5374 = vmatpush.bf16.msra.mxu0 %v5007
        %5375 = vmatpush.bf16.msra.mxu0 %v5000
        %5376 = vmatpush.bf16.msra.mxu0 %v4993
        %5377 = vmatpush.bf16.msra.mxu0 %v4986
        %5378 = vmatpush.bf16.msra.mxu0 %v4979
        %5379 = vmatpush.bf16.msra.mxu0 %v4972
        %5380 = vmatmul.bf16.gmra.mxu0 %v4718
        %v5381 = vpop.f32.mrf.mxu0
        %v5382 = vadd.f32 0.0, %v5381
        %v5383 = vpop.f32.mrf.mxu0
        %v5384 = vadd.f32 0.0, %v5383
        %5385 = vmatmul.bf16.gmra.mxu0 %v4719
        %v5386 = vpop.f32.mrf.mxu0
        %v5387 = vadd.f32 0.0, %v5386
        %v5388 = vpop.f32.mrf.mxu0
        %v5389 = vadd.f32 0.0, %v5388
        %5390 = vmatmul.bf16.gmra.mxu0 %v4720
        %v5391 = vpop.f32.mrf.mxu0
        %v5392 = vadd.f32 0.0, %v5391
        %v5393 = vpop.f32.mrf.mxu0
        %v5394 = vadd.f32 0.0, %v5393
        %5395 = vmatmul.bf16.gmra.mxu0 %v4721
        %v5396 = vpop.f32.mrf.mxu0
        %v5397 = vadd.f32 0.0, %v5396
        %v5398 = vpop.f32.mrf.mxu0
        %v5399 = vadd.f32 0.0, %v5398
        %5400 = vmatmul.bf16.gmra.mxu0 %v4722
        %v5401 = vpop.f32.mrf.mxu0
        %v5402 = vadd.f32 0.0, %v5401
        %v5403 = vpop.f32.mrf.mxu0
        %v5404 = vadd.f32 0.0, %v5403
        %5405 = vmatmul.bf16.gmra.mxu0 %v4723
        %v5406 = vpop.f32.mrf.mxu0
        %v5407 = vadd.f32 0.0, %v5406
        %v5408 = vpop.f32.mrf.mxu0
        %v5409 = vadd.f32 0.0, %v5408
        %5410 = vmatmul.bf16.gmra.mxu0 %v4724
        %v5411 = vpop.f32.mrf.mxu0
        %v5412 = vadd.f32 0.0, %v5411
        %v5413 = vpop.f32.mrf.mxu0
        %v5414 = vadd.f32 0.0, %v5413
        %5415 = vmatmul.bf16.gmra.mxu0 %v4725
        %v5416 = vpop.f32.mrf.mxu0
        %v5417 = vadd.f32 0.0, %v5416
        %v5418 = vpop.f32.mrf.mxu0
        %v5419 = vadd.f32 0.0, %v5418
        %5420 = vdwg.mxu0
        %v5485 = vunpack.c.l.b16 %v4654
        %v5486 = vunpack.c.h.b16 %v4654
        %v5487 = vunpack.c.l.b16 %v4655
        %v5488 = vunpack.c.h.b16 %v4655
        %v5489 = vunpack.c.l.b16 %v4656
        %v5490 = vunpack.c.h.b16 %v4656
        %v5491 = vunpack.c.l.b16 %v4657
        %v5492 = vunpack.c.l.b16 %v4658
        %v5493 = vunpack.c.h.b16 %v4658
        %v5494 = vunpack.c.l.b16 %v4659
        %v5495 = vunpack.c.h.b16 %v4659
        %v5496 = vunpack.c.l.b16 %v4660
        %v5497 = vunpack.c.h.b16 %v4660
        %v5498 = vunpack.c.l.b16 %v4661
        %v5499 = vunpack.c.l.b16 %v4662
        %v5500 = vunpack.c.h.b16 %v4662
        %v5501 = vunpack.c.l.b16 %v4663
        %v5502 = vunpack.c.h.b16 %v4663
        %v5503 = vunpack.c.l.b16 %v4664
        %v5504 = vunpack.c.h.b16 %v4664
        %v5505 = vunpack.c.l.b16 %v4665
        %v5506 = vunpack.c.l.b16 %v4666
        %v5507 = vunpack.c.h.b16 %v4666
        %v5508 = vunpack.c.l.b16 %v4667
        %v5509 = vunpack.c.h.b16 %v4667
        %v5510 = vunpack.c.l.b16 %v4668
        %v5511 = vunpack.c.h.b16 %v4668
        %v5512 = vunpack.c.l.b16 %v4669
        %v5513 = vunpack.c.l.b16 %v4670
        %v5514 = vunpack.c.h.b16 %v4670
        %v5515 = vunpack.c.l.b16 %v4671
        %v5516 = vunpack.c.h.b16 %v4671
        %v5517 = vunpack.c.l.b16 %v4672
        %v5518 = vunpack.c.h.b16 %v4672
        %v5519 = vunpack.c.l.b16 %v4673
        %v5520 = vunpack.c.l.b16 %v4674
        %v5521 = vunpack.c.h.b16 %v4674
        %v5522 = vunpack.c.l.b16 %v4675
        %v5523 = vunpack.c.h.b16 %v4675
        %v5524 = vunpack.c.l.b16 %v4676
        %v5525 = vunpack.c.h.b16 %v4676
        %v5526 = vunpack.c.l.b16 %v4677
        %v5527 = vunpack.c.l.b16 %v4678
        %v5528 = vunpack.c.h.b16 %v4678
        %v5529 = vunpack.c.l.b16 %v4679
        %v5530 = vunpack.c.h.b16 %v4679
        %v5531 = vunpack.c.l.b16 %v4680
        %v5532 = vunpack.c.h.b16 %v4680
        %v5533 = vunpack.c.l.b16 %v4681
        %v5534 = vunpack.c.l.b16 %v4682
        %v5535 = vunpack.c.h.b16 %v4682
        %v5536 = vunpack.c.l.b16 %v4683
        %v5537 = vunpack.c.h.b16 %v4683
        %v5538 = vunpack.c.l.b16 %v4684
        %v5539 = vunpack.c.h.b16 %v4684
        %v5540 = vunpack.c.l.b16 %v4685
        %v5541 = vunpack.c.l.b16 %v4686
        %v5542 = vunpack.c.h.b16 %v4686
        %v5543 = vunpack.c.l.b16 %v4687
        %v5544 = vunpack.c.h.b16 %v4687
        %v5545 = vunpack.c.l.b16 %v4688
        %v5546 = vunpack.c.h.b16 %v4688
        %v5547 = vunpack.c.l.b16 %v4689
        %v5548 = vunpack.c.l.b16 %v4690
        %v5549 = vunpack.c.h.b16 %v4690
        %v5550 = vunpack.c.l.b16 %v4691
        %v5551 = vunpack.c.h.b16 %v4691
        %v5552 = vunpack.c.l.b16 %v4692
        %v5553 = vunpack.c.h.b16 %v4692
        %v5554 = vunpack.c.l.b16 %v4693
        %v5555 = vunpack.c.l.b16 %v4694
        %v5556 = vunpack.c.h.b16 %v4694
        %v5557 = vunpack.c.l.b16 %v4695
        %v5558 = vunpack.c.h.b16 %v4695
        %v5559 = vunpack.c.l.b16 %v4696
        %v5560 = vunpack.c.h.b16 %v4696
        %v5561 = vunpack.c.l.b16 %v4697
        %v5562 = vunpack.c.l.b16 %v4698
        %v5563 = vunpack.c.h.b16 %v4698
        %v5564 = vunpack.c.l.b16 %v4699
        %v5565 = vunpack.c.h.b16 %v4699
        %v5566 = vunpack.c.l.b16 %v4700
        %v5567 = vunpack.c.h.b16 %v4700
        %v5568 = vunpack.c.l.b16 %v4701
        %v5569 = vunpack.c.l.b16 %v4702
        %v5570 = vunpack.c.h.b16 %v4702
        %v5571 = vunpack.c.l.b16 %v4703
        %v5572 = vunpack.c.h.b16 %v4703
        %v5573 = vunpack.c.l.b16 %v4704
        %v5574 = vunpack.c.h.b16 %v4704
        %v5575 = vunpack.c.l.b16 %v4705
        %v5576 = vunpack.c.l.b16 %v4706
        %v5577 = vunpack.c.h.b16 %v4706
        %v5578 = vunpack.c.l.b16 %v4707
        %v5579 = vunpack.c.h.b16 %v4707
        %v5580 = vunpack.c.l.b16 %v4708
        %v5581 = vunpack.c.h.b16 %v4708
        %v5582 = vunpack.c.l.b16 %v4709
        %v5583 = vunpack.c.l.b16 %v4710
        %v5584 = vunpack.c.h.b16 %v4710
        %v5585 = vunpack.c.l.b16 %v4711
        %v5586 = vunpack.c.h.b16 %v4711
        %v5587 = vunpack.c.l.b16 %v4712
        %v5588 = vunpack.c.h.b16 %v4712
        %v5589 = vunpack.c.l.b16 %v4713
        %v5590 = vunpack.c.l.b16 %v4714
        %v5591 = vunpack.c.h.b16 %v4714
        %v5592 = vunpack.c.l.b16 %v4715
        %v5593 = vunpack.c.h.b16 %v4715
        %v5594 = vunpack.c.l.b16 %v4716
        %v5595 = vunpack.c.h.b16 %v4716
        %v5596 = vunpack.c.l.b16 %v4717
        %v5597 = vpack.c.b16 %v5492, %v5485
        %v5598 = vpack.c.b16 %v5493, %v5486
        %v5599 = vpack.c.b16 %v5494, %v5487
        %v5600 = vpack.c.b16 %v5495, %v5488
        %v5601 = vpack.c.b16 %v5496, %v5489
        %v5602 = vpack.c.b16 %v5497, %v5490
        %v5603 = vpack.c.b16 %v5498, %v5491
        %v5604 = vpack.c.b16 %v5506, %v5499
        %v5605 = vpack.c.b16 %v5507, %v5500
        %v5606 = vpack.c.b16 %v5508, %v5501
        %v5607 = vpack.c.b16 %v5509, %v5502
        %v5608 = vpack.c.b16 %v5510, %v5503
        %v5609 = vpack.c.b16 %v5511, %v5504
        %v5610 = vpack.c.b16 %v5512, %v5505
        %v5611 = vpack.c.b16 %v5520, %v5513
        %v5612 = vpack.c.b16 %v5521, %v5514
        %v5613 = vpack.c.b16 %v5522, %v5515
        %v5614 = vpack.c.b16 %v5523, %v5516
        %v5615 = vpack.c.b16 %v5524, %v5517
        %v5616 = vpack.c.b16 %v5525, %v5518
        %v5617 = vpack.c.b16 %v5526, %v5519
        %v5618 = vpack.c.b16 %v5534, %v5527
        %v5619 = vpack.c.b16 %v5535, %v5528
        %v5620 = vpack.c.b16 %v5536, %v5529
        %v5621 = vpack.c.b16 %v5537, %v5530
        %v5622 = vpack.c.b16 %v5538, %v5531
        %v5623 = vpack.c.b16 %v5539, %v5532
        %v5624 = vpack.c.b16 %v5540, %v5533
        %v5625 = vpack.c.b16 %v5548, %v5541
        %v5626 = vpack.c.b16 %v5549, %v5542
        %v5627 = vpack.c.b16 %v5550, %v5543
        %v5628 = vpack.c.b16 %v5551, %v5544
        %v5629 = vpack.c.b16 %v5552, %v5545
        %v5630 = vpack.c.b16 %v5553, %v5546
        %v5631 = vpack.c.b16 %v5554, %v5547
        %v5632 = vpack.c.b16 %v5562, %v5555
        %v5633 = vpack.c.b16 %v5563, %v5556
        %v5634 = vpack.c.b16 %v5564, %v5557
        %v5635 = vpack.c.b16 %v5565, %v5558
        %v5636 = vpack.c.b16 %v5566, %v5559
        %v5637 = vpack.c.b16 %v5567, %v5560
        %v5638 = vpack.c.b16 %v5568, %v5561
        %v5639 = vpack.c.b16 %v5576, %v5569
        %v5640 = vpack.c.b16 %v5577, %v5570
        %v5641 = vpack.c.b16 %v5578, %v5571
        %v5642 = vpack.c.b16 %v5579, %v5572
        %v5643 = vpack.c.b16 %v5580, %v5573
        %v5644 = vpack.c.b16 %v5581, %v5574
        %v5645 = vpack.c.b16 %v5582, %v5575
        %v5646 = vpack.c.b16 %v5590, %v5583
        %v5647 = vpack.c.b16 %v5591, %v5584
        %v5648 = vpack.c.b16 %v5592, %v5585
        %v5649 = vpack.c.b16 %v5593, %v5586
        %v5650 = vpack.c.b16 %v5594, %v5587
        %v5651 = vpack.c.b16 %v5595, %v5588
        %v5652 = vpack.c.b16 %v5596, %v5589
        %5709 = vmatpush.bf16.msra.mxu0 %v5646
        %5710 = vmatpush.bf16.msra.mxu0 %v5639
        %5711 = vmatpush.bf16.msra.mxu0 %v5632
        %5712 = vmatpush.bf16.msra.mxu0 %v5625
        %5713 = vmatpush.bf16.msra.mxu0 %v5618
        %5714 = vmatpush.bf16.msra.mxu0 %v5611
        %5715 = vmatpush.bf16.msra.mxu0 %v5604
        %5716 = vmatpush.bf16.msra.mxu0 %v5597
        %5717 = vmatmul.bf16.gmra.mxu0 %v4646
        %v5718 = vpop.f32.mrf.mxu0
        %v5719 = vadd.f32 %v5088, %v5718
        %v5720 = vpop.f32.mrf.mxu0
        %v5721 = vadd.f32 %v5090, %v5720
        %5722 = vmatmul.bf16.gmra.mxu0 %v4647
        %v5723 = vpop.f32.mrf.mxu0
        %v5724 = vadd.f32 %v5093, %v5723
        %v5725 = vpop.f32.mrf.mxu0
        %v5726 = vadd.f32 %v5095, %v5725
        %5727 = vmatmul.bf16.gmra.mxu0 %v4648
        %v5728 = vpop.f32.mrf.mxu0
        %v5729 = vadd.f32 %v5098, %v5728
        %v5730 = vpop.f32.mrf.mxu0
        %v5731 = vadd.f32 %v5100, %v5730
        %5732 = vmatmul.bf16.gmra.mxu0 %v4649
        %v5733 = vpop.f32.mrf.mxu0
        %v5734 = vadd.f32 %v5103, %v5733
        %v5735 = vpop.f32.mrf.mxu0
        %v5736 = vadd.f32 %v5105, %v5735
        %5737 = vmatmul.bf16.gmra.mxu0 %v4650
        %v5738 = vpop.f32.mrf.mxu0
        %v5739 = vadd.f32 %v5108, %v5738
        %v5740 = vpop.f32.mrf.mxu0
        %v5741 = vadd.f32 %v5110, %v5740
        %5742 = vmatmul.bf16.gmra.mxu0 %v4651
        %v5743 = vpop.f32.mrf.mxu0
        %v5744 = vadd.f32 %v5113, %v5743
        %v5745 = vpop.f32.mrf.mxu0
        %v5746 = vadd.f32 %v5115, %v5745
        %5747 = vmatmul.bf16.gmra.mxu0 %v4652
        %v5748 = vpop.f32.mrf.mxu0
        %v5749 = vadd.f32 %v5118, %v5748
        %v5750 = vpop.f32.mrf.mxu0
        %v5751 = vadd.f32 %v5120, %v5750
        %5752 = vmatmul.bf16.gmra.mxu0 %v4653
        %v5753 = vpop.f32.mrf.mxu0
        %v5754 = vadd.f32 %v5123, %v5753
        %v5755 = vpop.f32.mrf.mxu0
        %v5756 = vadd.f32 %v5125, %v5755
        %5757 = vdwg.mxu0
        %5758 = vmatpush.bf16.msra.mxu0 %v5647
        %5759 = vmatpush.bf16.msra.mxu0 %v5640
        %5760 = vmatpush.bf16.msra.mxu0 %v5633
        %5761 = vmatpush.bf16.msra.mxu0 %v5626
        %5762 = vmatpush.bf16.msra.mxu0 %v5619
        %5763 = vmatpush.bf16.msra.mxu0 %v5612
        %5764 = vmatpush.bf16.msra.mxu0 %v5605
        %5765 = vmatpush.bf16.msra.mxu0 %v5598
        %5766 = vmatmul.bf16.gmra.mxu0 %v4646
        %v5767 = vpop.f32.mrf.mxu0
        %v5768 = vadd.f32 %v5137, %v5767
        %v5769 = vpop.f32.mrf.mxu0
        %v5770 = vadd.f32 %v5139, %v5769
        %5771 = vmatmul.bf16.gmra.mxu0 %v4647
        %v5772 = vpop.f32.mrf.mxu0
        %v5773 = vadd.f32 %v5142, %v5772
        %v5774 = vpop.f32.mrf.mxu0
        %v5775 = vadd.f32 %v5144, %v5774
        %5776 = vmatmul.bf16.gmra.mxu0 %v4648
        %v5777 = vpop.f32.mrf.mxu0
        %v5778 = vadd.f32 %v5147, %v5777
        %v5779 = vpop.f32.mrf.mxu0
        %v5780 = vadd.f32 %v5149, %v5779
        %5781 = vmatmul.bf16.gmra.mxu0 %v4649
        %v5782 = vpop.f32.mrf.mxu0
        %v5783 = vadd.f32 %v5152, %v5782
        %v5784 = vpop.f32.mrf.mxu0
        %v5785 = vadd.f32 %v5154, %v5784
        %5786 = vmatmul.bf16.gmra.mxu0 %v4650
        %v5787 = vpop.f32.mrf.mxu0
        %v5788 = vadd.f32 %v5157, %v5787
        %v5789 = vpop.f32.mrf.mxu0
        %v5790 = vadd.f32 %v5159, %v5789
        %5791 = vmatmul.bf16.gmra.mxu0 %v4651
        %v5792 = vpop.f32.mrf.mxu0
        %v5793 = vadd.f32 %v5162, %v5792
        %v5794 = vpop.f32.mrf.mxu0
        %v5795 = vadd.f32 %v5164, %v5794
        %5796 = vmatmul.bf16.gmra.mxu0 %v4652
        %v5797 = vpop.f32.mrf.mxu0
        %v5798 = vadd.f32 %v5167, %v5797
        %v5799 = vpop.f32.mrf.mxu0
        %v5800 = vadd.f32 %v5169, %v5799
        %5801 = vmatmul.bf16.gmra.mxu0 %v4653
        %v5802 = vpop.f32.mrf.mxu0
        %v5803 = vadd.f32 %v5172, %v5802
        %v5804 = vpop.f32.mrf.mxu0
        %v5805 = vadd.f32 %v5174, %v5804
        %5806 = vdwg.mxu0
        %5807 = vmatpush.bf16.msra.mxu0 %v5648
        %5808 = vmatpush.bf16.msra.mxu0 %v5641
        %5809 = vmatpush.bf16.msra.mxu0 %v5634
        %5810 = vmatpush.bf16.msra.mxu0 %v5627
        %5811 = vmatpush.bf16.msra.mxu0 %v5620
        %5812 = vmatpush.bf16.msra.mxu0 %v5613
        %5813 = vmatpush.bf16.msra.mxu0 %v5606
        %5814 = vmatpush.bf16.msra.mxu0 %v5599
        %5815 = vmatmul.bf16.gmra.mxu0 %v4646
        %v5816 = vpop.f32.mrf.mxu0
        %v5817 = vadd.f32 %v5186, %v5816
        %v5818 = vpop.f32.mrf.mxu0
        %v5819 = vadd.f32 %v5188, %v5818
        %5820 = vmatmul.bf16.gmra.mxu0 %v4647
        %v5821 = vpop.f32.mrf.mxu0
        %v5822 = vadd.f32 %v5191, %v5821
        %v5823 = vpop.f32.mrf.mxu0
        %v5824 = vadd.f32 %v5193, %v5823
        %5825 = vmatmul.bf16.gmra.mxu0 %v4648
        %v5826 = vpop.f32.mrf.mxu0
        %v5827 = vadd.f32 %v5196, %v5826
        %v5828 = vpop.f32.mrf.mxu0
        %v5829 = vadd.f32 %v5198, %v5828
        %5830 = vmatmul.bf16.gmra.mxu0 %v4649
        %v5831 = vpop.f32.mrf.mxu0
        %v5832 = vadd.f32 %v5201, %v5831
        %v5833 = vpop.f32.mrf.mxu0
        %v5834 = vadd.f32 %v5203, %v5833
        %5835 = vmatmul.bf16.gmra.mxu0 %v4650
        %v5836 = vpop.f32.mrf.mxu0
        %v5837 = vadd.f32 %v5206, %v5836
        %v5838 = vpop.f32.mrf.mxu0
        %v5839 = vadd.f32 %v5208, %v5838
        %5840 = vmatmul.bf16.gmra.mxu0 %v4651
        %v5841 = vpop.f32.mrf.mxu0
        %v5842 = vadd.f32 %v5211, %v5841
        %v5843 = vpop.f32.mrf.mxu0
        %v5844 = vadd.f32 %v5213, %v5843
        %5845 = vmatmul.bf16.gmra.mxu0 %v4652
        %v5846 = vpop.f32.mrf.mxu0
        %v5847 = vadd.f32 %v5216, %v5846
        %v5848 = vpop.f32.mrf.mxu0
        %v5849 = vadd.f32 %v5218, %v5848
        %5850 = vmatmul.bf16.gmra.mxu0 %v4653
        %v5851 = vpop.f32.mrf.mxu0
        %v5852 = vadd.f32 %v5221, %v5851
        %v5853 = vpop.f32.mrf.mxu0
        %v5854 = vadd.f32 %v5223, %v5853
        %5855 = vdwg.mxu0
        %5856 = vmatpush.bf16.msra.mxu0 %v5649
        %5857 = vmatpush.bf16.msra.mxu0 %v5642
        %5858 = vmatpush.bf16.msra.mxu0 %v5635
        %5859 = vmatpush.bf16.msra.mxu0 %v5628
        %5860 = vmatpush.bf16.msra.mxu0 %v5621
        %5861 = vmatpush.bf16.msra.mxu0 %v5614
        %5862 = vmatpush.bf16.msra.mxu0 %v5607
        %5863 = vmatpush.bf16.msra.mxu0 %v5600
        %5864 = vmatmul.bf16.gmra.mxu0 %v4646
        %v5865 = vpop.f32.mrf.mxu0
        %v5866 = vadd.f32 %v5235, %v5865
        %v5867 = vpop.f32.mrf.mxu0
        %v5868 = vadd.f32 %v5237, %v5867
        %5869 = vmatmul.bf16.gmra.mxu0 %v4647
        %v5870 = vpop.f32.mrf.mxu0
        %v5871 = vadd.f32 %v5240, %v5870
        %v5872 = vpop.f32.mrf.mxu0
        %v5873 = vadd.f32 %v5242, %v5872
        %5874 = vmatmul.bf16.gmra.mxu0 %v4648
        %v5875 = vpop.f32.mrf.mxu0
        %v5876 = vadd.f32 %v5245, %v5875
        %v5877 = vpop.f32.mrf.mxu0
        %v5878 = vadd.f32 %v5247, %v5877
        %5879 = vmatmul.bf16.gmra.mxu0 %v4649
        %v5880 = vpop.f32.mrf.mxu0
        %v5881 = vadd.f32 %v5250, %v5880
        %v5882 = vpop.f32.mrf.mxu0
        %v5883 = vadd.f32 %v5252, %v5882
        %5884 = vmatmul.bf16.gmra.mxu0 %v4650
        %v5885 = vpop.f32.mrf.mxu0
        %v5886 = vadd.f32 %v5255, %v5885
        %v5887 = vpop.f32.mrf.mxu0
        %v5888 = vadd.f32 %v5257, %v5887
        %5889 = vmatmul.bf16.gmra.mxu0 %v4651
        %v5890 = vpop.f32.mrf.mxu0
        %v5891 = vadd.f32 %v5260, %v5890
        %v5892 = vpop.f32.mrf.mxu0
        %v5893 = vadd.f32 %v5262, %v5892
        %5894 = vmatmul.bf16.gmra.mxu0 %v4652
        %v5895 = vpop.f32.mrf.mxu0
        %v5896 = vadd.f32 %v5265, %v5895
        %v5897 = vpop.f32.mrf.mxu0
        %v5898 = vadd.f32 %v5267, %v5897
        %5899 = vmatmul.bf16.gmra.mxu0 %v4653
        %v5900 = vpop.f32.mrf.mxu0
        %v5901 = vadd.f32 %v5270, %v5900
        %v5902 = vpop.f32.mrf.mxu0
        %v5903 = vadd.f32 %v5272, %v5902
        %5904 = vdwg.mxu0
        %5905 = vmatpush.bf16.msra.mxu0 %v5650
        %5906 = vmatpush.bf16.msra.mxu0 %v5643
        %5907 = vmatpush.bf16.msra.mxu0 %v5636
        %5908 = vmatpush.bf16.msra.mxu0 %v5629
        %5909 = vmatpush.bf16.msra.mxu0 %v5622
        %5910 = vmatpush.bf16.msra.mxu0 %v5615
        %5911 = vmatpush.bf16.msra.mxu0 %v5608
        %5912 = vmatpush.bf16.msra.mxu0 %v5601
        %5913 = vmatmul.bf16.gmra.mxu0 %v4646
        %v5914 = vpop.f32.mrf.mxu0
        %v5915 = vadd.f32 %v5284, %v5914
        %v5916 = vpop.f32.mrf.mxu0
        %v5917 = vadd.f32 %v5286, %v5916
        %5918 = vmatmul.bf16.gmra.mxu0 %v4647
        %v5919 = vpop.f32.mrf.mxu0
        %v5920 = vadd.f32 %v5289, %v5919
        %v5921 = vpop.f32.mrf.mxu0
        %v5922 = vadd.f32 %v5291, %v5921
        %5923 = vmatmul.bf16.gmra.mxu0 %v4648
        %v5924 = vpop.f32.mrf.mxu0
        %v5925 = vadd.f32 %v5294, %v5924
        %v5926 = vpop.f32.mrf.mxu0
        %v5927 = vadd.f32 %v5296, %v5926
        %5928 = vmatmul.bf16.gmra.mxu0 %v4649
        %v5929 = vpop.f32.mrf.mxu0
        %v5930 = vadd.f32 %v5299, %v5929
        %v5931 = vpop.f32.mrf.mxu0
        %v5932 = vadd.f32 %v5301, %v5931
        %5933 = vmatmul.bf16.gmra.mxu0 %v4650
        %v5934 = vpop.f32.mrf.mxu0
        %v5935 = vadd.f32 %v5304, %v5934
        %v5936 = vpop.f32.mrf.mxu0
        %v5937 = vadd.f32 %v5306, %v5936
        %5938 = vmatmul.bf16.gmra.mxu0 %v4651
        %v5939 = vpop.f32.mrf.mxu0
        %v5940 = vadd.f32 %v5309, %v5939
        %v5941 = vpop.f32.mrf.mxu0
        %v5942 = vadd.f32 %v5311, %v5941
        %5943 = vmatmul.bf16.gmra.mxu0 %v4652
        %v5944 = vpop.f32.mrf.mxu0
        %v5945 = vadd.f32 %v5314, %v5944
        %v5946 = vpop.f32.mrf.mxu0
        %v5947 = vadd.f32 %v5316, %v5946
        %5948 = vmatmul.bf16.gmra.mxu0 %v4653
        %v5949 = vpop.f32.mrf.mxu0
        %v5950 = vadd.f32 %v5319, %v5949
        %v5951 = vpop.f32.mrf.mxu0
        %v5952 = vadd.f32 %v5321, %v5951
        %5953 = vdwg.mxu0
        %5954 = vmatpush.bf16.msra.mxu0 %v5651
        %5955 = vmatpush.bf16.msra.mxu0 %v5644
        %5956 = vmatpush.bf16.msra.mxu0 %v5637
        %5957 = vmatpush.bf16.msra.mxu0 %v5630
        %5958 = vmatpush.bf16.msra.mxu0 %v5623
        %5959 = vmatpush.bf16.msra.mxu0 %v5616
        %5960 = vmatpush.bf16.msra.mxu0 %v5609
        %5961 = vmatpush.bf16.msra.mxu0 %v5602
        %5962 = vmatmul.bf16.gmra.mxu0 %v4646
        %v5963 = vpop.f32.mrf.mxu0
        %v5964 = vadd.f32 %v5333, %v5963
        %v5965 = vpop.f32.mrf.mxu0
        %v5966 = vadd.f32 %v5335, %v5965
        %5967 = vmatmul.bf16.gmra.mxu0 %v4647
        %v5968 = vpop.f32.mrf.mxu0
        %v5969 = vadd.f32 %v5338, %v5968
        %v5970 = vpop.f32.mrf.mxu0
        %v5971 = vadd.f32 %v5340, %v5970
        %5972 = vmatmul.bf16.gmra.mxu0 %v4648
        %v5973 = vpop.f32.mrf.mxu0
        %v5974 = vadd.f32 %v5343, %v5973
        %v5975 = vpop.f32.mrf.mxu0
        %v5976 = vadd.f32 %v5345, %v5975
        %5977 = vmatmul.bf16.gmra.mxu0 %v4649
        %v5978 = vpop.f32.mrf.mxu0
        %v5979 = vadd.f32 %v5348, %v5978
        %v5980 = vpop.f32.mrf.mxu0
        %v5981 = vadd.f32 %v5350, %v5980
        %5982 = vmatmul.bf16.gmra.mxu0 %v4650
        %v5983 = vpop.f32.mrf.mxu0
        %v5984 = vadd.f32 %v5353, %v5983
        %v5985 = vpop.f32.mrf.mxu0
        %v5986 = vadd.f32 %v5355, %v5985
        %5987 = vmatmul.bf16.gmra.mxu0 %v4651
        %v5988 = vpop.f32.mrf.mxu0
        %v5989 = vadd.f32 %v5358, %v5988
        %v5990 = vpop.f32.mrf.mxu0
        %v5991 = vadd.f32 %v5360, %v5990
        %5992 = vmatmul.bf16.gmra.mxu0 %v4652
        %v5993 = vpop.f32.mrf.mxu0
        %v5994 = vadd.f32 %v5363, %v5993
        %v5995 = vpop.f32.mrf.mxu0
        %v5996 = vadd.f32 %v5365, %v5995
        %5997 = vmatmul.bf16.gmra.mxu0 %v4653
        %v5998 = vpop.f32.mrf.mxu0
        %v5999 = vadd.f32 %v5368, %v5998
        %v6000 = vpop.f32.mrf.mxu0
        %v6001 = vadd.f32 %v5370, %v6000
        %6002 = vdwg.mxu0
        %6003 = vmatpush.bf16.msra.mxu0 %v5652
        %6004 = vmatpush.bf16.msra.mxu0 %v5645
        %6005 = vmatpush.bf16.msra.mxu0 %v5638
        %6006 = vmatpush.bf16.msra.mxu0 %v5631
        %6007 = vmatpush.bf16.msra.mxu0 %v5624
        %6008 = vmatpush.bf16.msra.mxu0 %v5617
        %6009 = vmatpush.bf16.msra.mxu0 %v5610
        %6010 = vmatpush.bf16.msra.mxu0 %v5603
        %6011 = vmatmul.bf16.gmra.mxu0 %v4646
        %v6012 = vpop.f32.mrf.mxu0
        %v6013 = vadd.f32 %v5382, %v6012
        %v6014 = vpop.f32.mrf.mxu0
        %v6015 = vadd.f32 %v5384, %v6014
        %6016 = vmatmul.bf16.gmra.mxu0 %v4647
        %v6017 = vpop.f32.mrf.mxu0
        %v6018 = vadd.f32 %v5387, %v6017
        %v6019 = vpop.f32.mrf.mxu0
        %v6020 = vadd.f32 %v5389, %v6019
        %6021 = vmatmul.bf16.gmra.mxu0 %v4648
        %v6022 = vpop.f32.mrf.mxu0
        %v6023 = vadd.f32 %v5392, %v6022
        %v6024 = vpop.f32.mrf.mxu0
        %v6025 = vadd.f32 %v5394, %v6024
        %6026 = vmatmul.bf16.gmra.mxu0 %v4649
        %v6027 = vpop.f32.mrf.mxu0
        %v6028 = vadd.f32 %v5397, %v6027
        %v6029 = vpop.f32.mrf.mxu0
        %v6030 = vadd.f32 %v5399, %v6029
        %6031 = vmatmul.bf16.gmra.mxu0 %v4650
        %v6032 = vpop.f32.mrf.mxu0
        %v6033 = vadd.f32 %v5402, %v6032
        %v6034 = vpop.f32.mrf.mxu0
        %v6035 = vadd.f32 %v5404, %v6034
        %6036 = vmatmul.bf16.gmra.mxu0 %v4651
        %v6037 = vpop.f32.mrf.mxu0
        %v6038 = vadd.f32 %v5407, %v6037
        %v6039 = vpop.f32.mrf.mxu0
        %v6040 = vadd.f32 %v5409, %v6039
        %6041 = vmatmul.bf16.gmra.mxu0 %v4652
        %v6042 = vpop.f32.mrf.mxu0
        %v6043 = vadd.f32 %v5412, %v6042
        %v6044 = vpop.f32.mrf.mxu0
        %v6045 = vadd.f32 %v5414, %v6044
        %6046 = vmatmul.bf16.gmra.mxu0 %v4653
        %v6047 = vpop.f32.mrf.mxu0
        %v6048 = vadd.f32 %v5417, %v6047
        %v6049 = vpop.f32.mrf.mxu0
        %v6050 = vadd.f32 %v5419, %v6049
        %6051 = vdwg.mxu0
        %v6052 = vld [vmem:[%s9] sm:$0xff]
        %v6054 = vperm.slane %v6052, 0
        %v6055 = vperm.slane %v6052, 1
        %v6056 = vperm.slane %v6052, 2
        %v6057 = vperm.slane %v6052, 3
        %v6058 = vperm.slane %v6052, 4
        %v6059 = vperm.slane %v6052, 5
        %v6060 = vperm.slane %v6052, 6
        %v6068 = vadd.f32 %v5719, %v6054
        %v6069 = vadd.f32 %v5768, %v6055
        %v6070 = vadd.f32 %v5817, %v6056
        %v6071 = vadd.f32 %v5866, %v6057
        %v6072 = vadd.f32 %v5915, %v6058
        %v6073 = vadd.f32 %v5964, %v6059
        %v6074 = vadd.f32 %v6013, %v6060
        %v6075 = vadd.f32 %v5721, %v6054
        %v6076 = vadd.f32 %v5770, %v6055
        %v6077 = vadd.f32 %v5819, %v6056
        %v6078 = vadd.f32 %v5868, %v6057
        %v6079 = vadd.f32 %v5917, %v6058
        %v6080 = vadd.f32 %v5966, %v6059
        %v6081 = vadd.f32 %v6015, %v6060
        %v6082 = vadd.f32 %v5724, %v6054
        %v6083 = vadd.f32 %v5773, %v6055
        %v6084 = vadd.f32 %v5822, %v6056
        %v6085 = vadd.f32 %v5871, %v6057
        %v6086 = vadd.f32 %v5920, %v6058
        %v6087 = vadd.f32 %v5969, %v6059
        %v6088 = vadd.f32 %v6018, %v6060
        %v6089 = vadd.f32 %v5726, %v6054
        %v6090 = vadd.f32 %v5775, %v6055
        %v6091 = vadd.f32 %v5824, %v6056
        %v6092 = vadd.f32 %v5873, %v6057
        %v6093 = vadd.f32 %v5922, %v6058
        %v6094 = vadd.f32 %v5971, %v6059
        %v6095 = vadd.f32 %v6020, %v6060
        %v6096 = vadd.f32 %v5729, %v6054
        %v6097 = vadd.f32 %v5778, %v6055
        %v6098 = vadd.f32 %v5827, %v6056
        %v6099 = vadd.f32 %v5876, %v6057
        %v6100 = vadd.f32 %v5925, %v6058
        %v6101 = vadd.f32 %v5974, %v6059
        %v6102 = vadd.f32 %v6023, %v6060
        %v6103 = vadd.f32 %v5731, %v6054
        %v6104 = vadd.f32 %v5780, %v6055
        %v6105 = vadd.f32 %v5829, %v6056
        %v6106 = vadd.f32 %v5878, %v6057
        %v6107 = vadd.f32 %v5927, %v6058
        %v6108 = vadd.f32 %v5976, %v6059
        %v6109 = vadd.f32 %v6025, %v6060
        %v6110 = vadd.f32 %v5734, %v6054
        %v6111 = vadd.f32 %v5783, %v6055
        %v6112 = vadd.f32 %v5832, %v6056
        %v6113 = vadd.f32 %v5881, %v6057
        %v6114 = vadd.f32 %v5930, %v6058
        %v6115 = vadd.f32 %v5979, %v6059
        %v6116 = vadd.f32 %v6028, %v6060
        %v6117 = vadd.f32 %v5736, %v6054
        %v6118 = vadd.f32 %v5785, %v6055
        %v6119 = vadd.f32 %v5834, %v6056
        %v6120 = vadd.f32 %v5883, %v6057
        %v6121 = vadd.f32 %v5932, %v6058
        %v6122 = vadd.f32 %v5981, %v6059
        %v6123 = vadd.f32 %v6030, %v6060
        %v6124 = vadd.f32 %v5739, %v6054
        %v6125 = vadd.f32 %v5788, %v6055
        %v6126 = vadd.f32 %v5837, %v6056
        %v6127 = vadd.f32 %v5886, %v6057
        %v6128 = vadd.f32 %v5935, %v6058
        %v6129 = vadd.f32 %v5984, %v6059
        %v6130 = vadd.f32 %v6033, %v6060
        %v6131 = vadd.f32 %v5741, %v6054
        %v6132 = vadd.f32 %v5790, %v6055
        %v6133 = vadd.f32 %v5839, %v6056
        %v6134 = vadd.f32 %v5888, %v6057
        %v6135 = vadd.f32 %v5937, %v6058
        %v6136 = vadd.f32 %v5986, %v6059
        %v6137 = vadd.f32 %v6035, %v6060
        %v6138 = vadd.f32 %v5744, %v6054
        %v6139 = vadd.f32 %v5793, %v6055
        %v6140 = vadd.f32 %v5842, %v6056
        %v6141 = vadd.f32 %v5891, %v6057
        %v6142 = vadd.f32 %v5940, %v6058
        %v6143 = vadd.f32 %v5989, %v6059
        %v6144 = vadd.f32 %v6038, %v6060
        %v6145 = vadd.f32 %v5746, %v6054
        %v6146 = vadd.f32 %v5795, %v6055
        %v6147 = vadd.f32 %v5844, %v6056
        %v6148 = vadd.f32 %v5893, %v6057
        %v6149 = vadd.f32 %v5942, %v6058
        %v6150 = vadd.f32 %v5991, %v6059
        %v6151 = vadd.f32 %v6040, %v6060
        %v6152 = vadd.f32 %v5749, %v6054
        %v6153 = vadd.f32 %v5798, %v6055
        %v6154 = vadd.f32 %v5847, %v6056
        %v6155 = vadd.f32 %v5896, %v6057
        %v6156 = vadd.f32 %v5945, %v6058
        %v6157 = vadd.f32 %v5994, %v6059
        %v6158 = vadd.f32 %v6043, %v6060
        %v6159 = vadd.f32 %v5751, %v6054
        %v6160 = vadd.f32 %v5800, %v6055
        %v6161 = vadd.f32 %v5849, %v6056
        %v6162 = vadd.f32 %v5898, %v6057
        %v6163 = vadd.f32 %v5947, %v6058
        %v6164 = vadd.f32 %v5996, %v6059
        %v6165 = vadd.f32 %v6045, %v6060
        %v6166 = vadd.f32 %v5754, %v6054
        %v6167 = vadd.f32 %v5803, %v6055
        %v6168 = vadd.f32 %v5852, %v6056
        %v6169 = vadd.f32 %v5901, %v6057
        %v6170 = vadd.f32 %v5950, %v6058
        %v6171 = vadd.f32 %v5999, %v6059
        %v6172 = vadd.f32 %v6048, %v6060
        %v6173 = vadd.f32 %v5756, %v6054
        %v6174 = vadd.f32 %v5805, %v6055
        %v6175 = vadd.f32 %v5854, %v6056
        %v6176 = vadd.f32 %v5903, %v6057
        %v6177 = vadd.f32 %v5952, %v6058
        %v6178 = vadd.f32 %v6001, %v6059
        %v6179 = vadd.f32 %v6050, %v6060
        %v6180 = vunpack.c.l.bf16 %v495
        %v6181 = vunpack.c.h.bf16 %v495
        %v6182 = vunpack.c.l.bf16 %v496
        %v6183 = vunpack.c.h.bf16 %v496
        %v6184 = vunpack.c.l.bf16 %v497
        %v6185 = vunpack.c.h.bf16 %v497
        %v6186 = vunpack.c.l.bf16 %v498
        %v6187 = vunpack.c.l.bf16 %v499
        %v6188 = vunpack.c.h.bf16 %v499
        %v6189 = vunpack.c.l.bf16 %v500
        %v6190 = vunpack.c.h.bf16 %v500
        %v6191 = vunpack.c.l.bf16 %v501
        %v6192 = vunpack.c.h.bf16 %v501
        %v6193 = vunpack.c.l.bf16 %v502
        %v6194 = vunpack.c.l.bf16 %v503
        %v6195 = vunpack.c.h.bf16 %v503
        %v6196 = vunpack.c.l.bf16 %v504
        %v6197 = vunpack.c.h.bf16 %v504
        %v6198 = vunpack.c.l.bf16 %v505
        %v6199 = vunpack.c.h.bf16 %v505
        %v6200 = vunpack.c.l.bf16 %v506
        %v6201 = vunpack.c.l.bf16 %v507
        %v6202 = vunpack.c.h.bf16 %v507
        %v6203 = vunpack.c.l.bf16 %v508
        %v6204 = vunpack.c.h.bf16 %v508
        %v6205 = vunpack.c.l.bf16 %v509
        %v6206 = vunpack.c.h.bf16 %v509
        %v6207 = vunpack.c.l.bf16 %v510
        %v6208 = vunpack.c.l.bf16 %v511
        %v6209 = vunpack.c.h.bf16 %v511
        %v6210 = vunpack.c.l.bf16 %v512
        %v6211 = vunpack.c.h.bf16 %v512
        %v6212 = vunpack.c.l.bf16 %v513
        %v6213 = vunpack.c.h.bf16 %v513
        %v6214 = vunpack.c.l.bf16 %v514
        %v6215 = vunpack.c.l.bf16 %v515
        %v6216 = vunpack.c.h.bf16 %v515
        %v6217 = vunpack.c.l.bf16 %v516
        %v6218 = vunpack.c.h.bf16 %v516
        %v6219 = vunpack.c.l.bf16 %v517
        %v6220 = vunpack.c.h.bf16 %v517
        %v6221 = vunpack.c.l.bf16 %v518
        %v6222 = vunpack.c.l.bf16 %v519
        %v6223 = vunpack.c.h.bf16 %v519
        %v6224 = vunpack.c.l.bf16 %v520
        %v6225 = vunpack.c.h.bf16 %v520
        %v6226 = vunpack.c.l.bf16 %v521
        %v6227 = vunpack.c.h.bf16 %v521
        %v6228 = vunpack.c.l.bf16 %v522
        %v6229 = vunpack.c.l.bf16 %v523
        %v6230 = vunpack.c.h.bf16 %v523
        %v6231 = vunpack.c.l.bf16 %v524
        %v6232 = vunpack.c.h.bf16 %v524
        %v6233 = vunpack.c.l.bf16 %v525
        %v6234 = vunpack.c.h.bf16 %v525
        %v6235 = vunpack.c.l.bf16 %v526
        %v6236 = vunpack.c.l.bf16 %v527
        %v6237 = vunpack.c.h.bf16 %v527
        %v6238 = vunpack.c.l.bf16 %v528
        %v6239 = vunpack.c.h.bf16 %v528
        %v6240 = vunpack.c.l.bf16 %v529
        %v6241 = vunpack.c.h.bf16 %v529
        %v6242 = vunpack.c.l.bf16 %v530
        %v6243 = vunpack.c.l.bf16 %v531
        %v6244 = vunpack.c.h.bf16 %v531
        %v6245 = vunpack.c.l.bf16 %v532
        %v6246 = vunpack.c.h.bf16 %v532
        %v6247 = vunpack.c.l.bf16 %v533
        %v6248 = vunpack.c.h.bf16 %v533
        %v6249 = vunpack.c.l.bf16 %v534
        %v6250 = vunpack.c.l.bf16 %v535
        %v6251 = vunpack.c.h.bf16 %v535
        %v6252 = vunpack.c.l.bf16 %v536
        %v6253 = vunpack.c.h.bf16 %v536
        %v6254 = vunpack.c.l.bf16 %v537
        %v6255 = vunpack.c.h.bf16 %v537
        %v6256 = vunpack.c.l.bf16 %v538
        %v6257 = vunpack.c.l.bf16 %v539
        %v6258 = vunpack.c.h.bf16 %v539
        %v6259 = vunpack.c.l.bf16 %v540
        %v6260 = vunpack.c.h.bf16 %v540
        %v6261 = vunpack.c.l.bf16 %v541
        %v6262 = vunpack.c.h.bf16 %v541
        %v6263 = vunpack.c.l.bf16 %v542
        %v6264 = vunpack.c.l.bf16 %v543
        %v6265 = vunpack.c.h.bf16 %v543
        %v6266 = vunpack.c.l.bf16 %v544
        %v6267 = vunpack.c.h.bf16 %v544
        %v6268 = vunpack.c.l.bf16 %v545
        %v6269 = vunpack.c.h.bf16 %v545
        %v6270 = vunpack.c.l.bf16 %v546
        %v6271 = vunpack.c.l.bf16 %v547
        %v6272 = vunpack.c.h.bf16 %v547
        %v6273 = vunpack.c.l.bf16 %v548
        %v6274 = vunpack.c.h.bf16 %v548
        %v6275 = vunpack.c.l.bf16 %v549
        %v6276 = vunpack.c.h.bf16 %v549
        %v6277 = vunpack.c.l.bf16 %v550
        %v6278 = vunpack.c.l.bf16 %v551
        %v6279 = vunpack.c.h.bf16 %v551
        %v6280 = vunpack.c.l.bf16 %v552
        %v6281 = vunpack.c.h.bf16 %v552
        %v6282 = vunpack.c.l.bf16 %v553
        %v6283 = vunpack.c.h.bf16 %v553
        %v6284 = vunpack.c.l.bf16 %v554
        %v6285 = vunpack.c.l.bf16 %v555
        %v6286 = vunpack.c.h.bf16 %v555
        %v6287 = vunpack.c.l.bf16 %v556
        %v6288 = vunpack.c.h.bf16 %v556
        %v6289 = vunpack.c.l.bf16 %v557
        %v6290 = vunpack.c.h.bf16 %v557
        %v6291 = vunpack.c.l.bf16 %v558
        %v6292 = vadd.f32 %v6068, %v6180
        %v6293 = vadd.f32 %v6069, %v6181
        %v6294 = vadd.f32 %v6070, %v6182
        %v6295 = vadd.f32 %v6071, %v6183
        %v6296 = vadd.f32 %v6072, %v6184
        %v6297 = vadd.f32 %v6073, %v6185
        %v6298 = vadd.f32 %v6074, %v6186
        %v6299 = vadd.f32 %v6075, %v6187
        %v6300 = vadd.f32 %v6076, %v6188
        %v6301 = vadd.f32 %v6077, %v6189
        %v6302 = vadd.f32 %v6078, %v6190
        %v6303 = vadd.f32 %v6079, %v6191
        %v6304 = vadd.f32 %v6080, %v6192
        %v6305 = vadd.f32 %v6081, %v6193
        %v6306 = vadd.f32 %v6082, %v6194
        %v6307 = vadd.f32 %v6083, %v6195
        %v6308 = vadd.f32 %v6084, %v6196
        %v6309 = vadd.f32 %v6085, %v6197
        %v6310 = vadd.f32 %v6086, %v6198
        %v6311 = vadd.f32 %v6087, %v6199
        %v6312 = vadd.f32 %v6088, %v6200
        %v6313 = vadd.f32 %v6089, %v6201
        %v6314 = vadd.f32 %v6090, %v6202
        %v6315 = vadd.f32 %v6091, %v6203
        %v6316 = vadd.f32 %v6092, %v6204
        %v6317 = vadd.f32 %v6093, %v6205
        %v6318 = vadd.f32 %v6094, %v6206
        %v6319 = vadd.f32 %v6095, %v6207
        %v6320 = vadd.f32 %v6096, %v6208
        %v6321 = vadd.f32 %v6097, %v6209
        %v6322 = vadd.f32 %v6098, %v6210
        %v6323 = vadd.f32 %v6099, %v6211
        %v6324 = vadd.f32 %v6100, %v6212
        %v6325 = vadd.f32 %v6101, %v6213
        %v6326 = vadd.f32 %v6102, %v6214
        %v6327 = vadd.f32 %v6103, %v6215
        %v6328 = vadd.f32 %v6104, %v6216
        %v6329 = vadd.f32 %v6105, %v6217
        %v6330 = vadd.f32 %v6106, %v6218
        %v6331 = vadd.f32 %v6107, %v6219
        %v6332 = vadd.f32 %v6108, %v6220
        %v6333 = vadd.f32 %v6109, %v6221
        %v6334 = vadd.f32 %v6110, %v6222
        %v6335 = vadd.f32 %v6111, %v6223
        %v6336 = vadd.f32 %v6112, %v6224
        %v6337 = vadd.f32 %v6113, %v6225
        %v6338 = vadd.f32 %v6114, %v6226
        %v6339 = vadd.f32 %v6115, %v6227
        %v6340 = vadd.f32 %v6116, %v6228
        %v6341 = vadd.f32 %v6117, %v6229
        %v6342 = vadd.f32 %v6118, %v6230
        %v6343 = vadd.f32 %v6119, %v6231
        %v6344 = vadd.f32 %v6120, %v6232
        %v6345 = vadd.f32 %v6121, %v6233
        %v6346 = vadd.f32 %v6122, %v6234
        %v6347 = vadd.f32 %v6123, %v6235
        %v6348 = vadd.f32 %v6124, %v6236
        %v6349 = vadd.f32 %v6125, %v6237
        %v6350 = vadd.f32 %v6126, %v6238
        %v6351 = vadd.f32 %v6127, %v6239
        %v6352 = vadd.f32 %v6128, %v6240
        %v6353 = vadd.f32 %v6129, %v6241
        %v6354 = vadd.f32 %v6130, %v6242
        %v6355 = vadd.f32 %v6131, %v6243
        %v6356 = vadd.f32 %v6132, %v6244
        %v6357 = vadd.f32 %v6133, %v6245
        %v6358 = vadd.f32 %v6134, %v6246
        %v6359 = vadd.f32 %v6135, %v6247
        %v6360 = vadd.f32 %v6136, %v6248
        %v6361 = vadd.f32 %v6137, %v6249
        %v6362 = vadd.f32 %v6138, %v6250
        %v6363 = vadd.f32 %v6139, %v6251
        %v6364 = vadd.f32 %v6140, %v6252
        %v6365 = vadd.f32 %v6141, %v6253
        %v6366 = vadd.f32 %v6142, %v6254
        %v6367 = vadd.f32 %v6143, %v6255
        %v6368 = vadd.f32 %v6144, %v6256
        %v6369 = vadd.f32 %v6145, %v6257
        %v6370 = vadd.f32 %v6146, %v6258
        %v6371 = vadd.f32 %v6147, %v6259
        %v6372 = vadd.f32 %v6148, %v6260
        %v6373 = vadd.f32 %v6149, %v6261
        %v6374 = vadd.f32 %v6150, %v6262
        %v6375 = vadd.f32 %v6151, %v6263
        %v6376 = vadd.f32 %v6152, %v6264
        %v6377 = vadd.f32 %v6153, %v6265
        %v6378 = vadd.f32 %v6154, %v6266
        %v6379 = vadd.f32 %v6155, %v6267
        %v6380 = vadd.f32 %v6156, %v6268
        %v6381 = vadd.f32 %v6157, %v6269
        %v6382 = vadd.f32 %v6158, %v6270
        %v6383 = vadd.f32 %v6159, %v6271
        %v6384 = vadd.f32 %v6160, %v6272
        %v6385 = vadd.f32 %v6161, %v6273
        %v6386 = vadd.f32 %v6162, %v6274
        %v6387 = vadd.f32 %v6163, %v6275
        %v6388 = vadd.f32 %v6164, %v6276
        %v6389 = vadd.f32 %v6165, %v6277
        %v6390 = vadd.f32 %v6166, %v6278
        %v6391 = vadd.f32 %v6167, %v6279
        %v6392 = vadd.f32 %v6168, %v6280
        %v6393 = vadd.f32 %v6169, %v6281
        %v6394 = vadd.f32 %v6170, %v6282
        %v6395 = vadd.f32 %v6171, %v6283
        %v6396 = vadd.f32 %v6172, %v6284
        %v6397 = vadd.f32 %v6173, %v6285
        %v6398 = vadd.f32 %v6174, %v6286
        %v6399 = vadd.f32 %v6175, %v6287
        %v6400 = vadd.f32 %v6176, %v6288
        %v6401 = vadd.f32 %v6177, %v6289
        %v6402 = vadd.f32 %v6178, %v6290
        %v6403 = vadd.f32 %v6179, %v6291
        %v6404 = vmax.f32 %v6292, 0.0
        %v6405 = vmax.f32 %v6293, 0.0
        %v6406 = vmax.f32 %v6294, 0.0
        %v6407 = vmax.f32 %v6295, 0.0
        %v6408 = vmax.f32 %v6296, 0.0
        %v6409 = vmax.f32 %v6297, 0.0
        %v6410 = vmax.f32 %v6298, 0.0
        %v6411 = vmax.f32 %v6299, 0.0
        %v6412 = vmax.f32 %v6300, 0.0
        %v6413 = vmax.f32 %v6301, 0.0
        %v6414 = vmax.f32 %v6302, 0.0
        %v6415 = vmax.f32 %v6303, 0.0
        %v6416 = vmax.f32 %v6304, 0.0
        %v6417 = vmax.f32 %v6305, 0.0
        %v6418 = vmax.f32 %v6306, 0.0
        %v6419 = vmax.f32 %v6307, 0.0
        %v6420 = vmax.f32 %v6308, 0.0
        %v6421 = vmax.f32 %v6309, 0.0
        %v6422 = vmax.f32 %v6310, 0.0
        %v6423 = vmax.f32 %v6311, 0.0
        %v6424 = vmax.f32 %v6312, 0.0
        %v6425 = vmax.f32 %v6313, 0.0
        %v6426 = vmax.f32 %v6314, 0.0
        %v6427 = vmax.f32 %v6315, 0.0
        %v6428 = vmax.f32 %v6316, 0.0
        %v6429 = vmax.f32 %v6317, 0.0
        %v6430 = vmax.f32 %v6318, 0.0
        %v6431 = vmax.f32 %v6319, 0.0
        %v6432 = vmax.f32 %v6320, 0.0
        %v6433 = vmax.f32 %v6321, 0.0
        %v6434 = vmax.f32 %v6322, 0.0
        %v6435 = vmax.f32 %v6323, 0.0
        %v6436 = vmax.f32 %v6324, 0.0
        %v6437 = vmax.f32 %v6325, 0.0
        %v6438 = vmax.f32 %v6326, 0.0
        %v6439 = vmax.f32 %v6327, 0.0
        %v6440 = vmax.f32 %v6328, 0.0
        %v6441 = vmax.f32 %v6329, 0.0
        %v6442 = vmax.f32 %v6330, 0.0
        %v6443 = vmax.f32 %v6331, 0.0
        %v6444 = vmax.f32 %v6332, 0.0
        %v6445 = vmax.f32 %v6333, 0.0
        %v6446 = vmax.f32 %v6334, 0.0
        %v6447 = vmax.f32 %v6335, 0.0
        %v6448 = vmax.f32 %v6336, 0.0
        %v6449 = vmax.f32 %v6337, 0.0
        %v6450 = vmax.f32 %v6338, 0.0
        %v6451 = vmax.f32 %v6339, 0.0
        %v6452 = vmax.f32 %v6340, 0.0
        %v6453 = vmax.f32 %v6341, 0.0
        %v6454 = vmax.f32 %v6342, 0.0
        %v6455 = vmax.f32 %v6343, 0.0
        %v6456 = vmax.f32 %v6344, 0.0
        %v6457 = vmax.f32 %v6345, 0.0
        %v6458 = vmax.f32 %v6346, 0.0
        %v6459 = vmax.f32 %v6347, 0.0
        %v6460 = vmax.f32 %v6348, 0.0
        %v6461 = vmax.f32 %v6349, 0.0
        %v6462 = vmax.f32 %v6350, 0.0
        %v6463 = vmax.f32 %v6351, 0.0
        %v6464 = vmax.f32 %v6352, 0.0
        %v6465 = vmax.f32 %v6353, 0.0
        %v6466 = vmax.f32 %v6354, 0.0
        %v6467 = vmax.f32 %v6355, 0.0
        %v6468 = vmax.f32 %v6356, 0.0
        %v6469 = vmax.f32 %v6357, 0.0
        %v6470 = vmax.f32 %v6358, 0.0
        %v6471 = vmax.f32 %v6359, 0.0
        %v6472 = vmax.f32 %v6360, 0.0
        %v6473 = vmax.f32 %v6361, 0.0
        %v6474 = vmax.f32 %v6362, 0.0
        %v6475 = vmax.f32 %v6363, 0.0
        %v6476 = vmax.f32 %v6364, 0.0
        %v6477 = vmax.f32 %v6365, 0.0
        %v6478 = vmax.f32 %v6366, 0.0
        %v6479 = vmax.f32 %v6367, 0.0
        %v6480 = vmax.f32 %v6368, 0.0
        %v6481 = vmax.f32 %v6369, 0.0
        %v6482 = vmax.f32 %v6370, 0.0
        %v6483 = vmax.f32 %v6371, 0.0
        %v6484 = vmax.f32 %v6372, 0.0
        %v6485 = vmax.f32 %v6373, 0.0
        %v6486 = vmax.f32 %v6374, 0.0
        %v6487 = vmax.f32 %v6375, 0.0
        %v6488 = vmax.f32 %v6376, 0.0
        %v6489 = vmax.f32 %v6377, 0.0
        %v6490 = vmax.f32 %v6378, 0.0
        %v6491 = vmax.f32 %v6379, 0.0
        %v6492 = vmax.f32 %v6380, 0.0
        %v6493 = vmax.f32 %v6381, 0.0
        %v6494 = vmax.f32 %v6382, 0.0
        %v6495 = vmax.f32 %v6383, 0.0
        %v6496 = vmax.f32 %v6384, 0.0
        %v6497 = vmax.f32 %v6385, 0.0
        %v6498 = vmax.f32 %v6386, 0.0
        %v6499 = vmax.f32 %v6387, 0.0
        %v6500 = vmax.f32 %v6388, 0.0
        %v6501 = vmax.f32 %v6389, 0.0
        %v6502 = vmax.f32 %v6390, 0.0
        %v6503 = vmax.f32 %v6391, 0.0
        %v6504 = vmax.f32 %v6392, 0.0
        %v6505 = vmax.f32 %v6393, 0.0
        %v6506 = vmax.f32 %v6394, 0.0
        %v6507 = vmax.f32 %v6395, 0.0
        %v6508 = vmax.f32 %v6396, 0.0
        %v6509 = vmax.f32 %v6397, 0.0
        %v6510 = vmax.f32 %v6398, 0.0
        %v6511 = vmax.f32 %v6399, 0.0
        %v6512 = vmax.f32 %v6400, 0.0
        %v6513 = vmax.f32 %v6401, 0.0
        %v6514 = vmax.f32 %v6402, 0.0
        %v6515 = vmax.f32 %v6403, 0.0
        %v6516 = vpack.c.bf16 %v6405, %v6404
        %v6517 = vpack.c.bf16 %v6407, %v6406
        %v6518 = vpack.c.bf16 %v6409, %v6408
        %v6519 = vpack.c.bf16 %v6410, %v6410
        %v6520 = vpack.c.bf16 %v6412, %v6411
        %v6521 = vpack.c.bf16 %v6414, %v6413
        %v6522 = vpack.c.bf16 %v6416, %v6415
        %v6523 = vpack.c.bf16 %v6417, %v6417
        %v6524 = vpack.c.bf16 %v6419, %v6418
        %v6525 = vpack.c.bf16 %v6421, %v6420
        %v6526 = vpack.c.bf16 %v6423, %v6422
        %v6527 = vpack.c.bf16 %v6424, %v6424
        %v6528 = vpack.c.bf16 %v6426, %v6425
        %v6529 = vpack.c.bf16 %v6428, %v6427
        %v6530 = vpack.c.bf16 %v6430, %v6429
        %v6531 = vpack.c.bf16 %v6431, %v6431
        %v6532 = vpack.c.bf16 %v6433, %v6432
        %v6533 = vpack.c.bf16 %v6435, %v6434
        %v6534 = vpack.c.bf16 %v6437, %v6436
        %v6535 = vpack.c.bf16 %v6438, %v6438
        %v6536 = vpack.c.bf16 %v6440, %v6439
        %v6537 = vpack.c.bf16 %v6442, %v6441
        %v6538 = vpack.c.bf16 %v6444, %v6443
        %v6539 = vpack.c.bf16 %v6445, %v6445
        %v6540 = vpack.c.bf16 %v6447, %v6446
        %v6541 = vpack.c.bf16 %v6449, %v6448
        %v6542 = vpack.c.bf16 %v6451, %v6450
        %v6543 = vpack.c.bf16 %v6452, %v6452
        %v6544 = vpack.c.bf16 %v6454, %v6453
        %v6545 = vpack.c.bf16 %v6456, %v6455
        %v6546 = vpack.c.bf16 %v6458, %v6457
        %v6547 = vpack.c.bf16 %v6459, %v6459
        %v6548 = vpack.c.bf16 %v6461, %v6460
        %v6549 = vpack.c.bf16 %v6463, %v6462
        %v6550 = vpack.c.bf16 %v6465, %v6464
        %v6551 = vpack.c.bf16 %v6466, %v6466
        %v6552 = vpack.c.bf16 %v6468, %v6467
        %v6553 = vpack.c.bf16 %v6470, %v6469
        %v6554 = vpack.c.bf16 %v6472, %v6471
        %v6555 = vpack.c.bf16 %v6473, %v6473
        %v6556 = vpack.c.bf16 %v6475, %v6474
        %v6557 = vpack.c.bf16 %v6477, %v6476
        %v6558 = vpack.c.bf16 %v6479, %v6478
        %v6559 = vpack.c.bf16 %v6480, %v6480
        %v6560 = vpack.c.bf16 %v6482, %v6481
        %v6561 = vpack.c.bf16 %v6484, %v6483
        %v6562 = vpack.c.bf16 %v6486, %v6485
        %v6563 = vpack.c.bf16 %v6487, %v6487
        %v6564 = vpack.c.bf16 %v6489, %v6488
        %v6565 = vpack.c.bf16 %v6491, %v6490
        %v6566 = vpack.c.bf16 %v6493, %v6492
        %v6567 = vpack.c.bf16 %v6494, %v6494
        %v6568 = vpack.c.bf16 %v6496, %v6495
        %v6569 = vpack.c.bf16 %v6498, %v6497
        %v6570 = vpack.c.bf16 %v6500, %v6499
        %v6571 = vpack.c.bf16 %v6501, %v6501
        %v6572 = vpack.c.bf16 %v6503, %v6502
        %v6573 = vpack.c.bf16 %v6505, %v6504
        %v6574 = vpack.c.bf16 %v6507, %v6506
        %v6575 = vpack.c.bf16 %v6508, %v6508
        %v6576 = vpack.c.bf16 %v6510, %v6509
        %v6577 = vpack.c.bf16 %v6512, %v6511
        %v6578 = vpack.c.bf16 %v6514, %v6513
        %v6579 = vpack.c.bf16 %v6515, %v6515
        %6580 = vst [vmem:[%s492] sm:$0xff] %v6516
        %6581 = vst [vmem:[%s492 + $0x8] sm:$0xff] %v6517
        %6582 = vst [vmem:[%s492 + $0x10] sm:$0xff] %v6518
        %6583 = vst [vmem:[%s492 + $0x18] sm:$0xf] %v6519
        %6584 = vst [vmem:[%s492 + $0x1c] sm:$0xff] %v6520
        %6585 = vst [vmem:[%s492 + $0x24] sm:$0xff] %v6521
        %6586 = vst [vmem:[%s492 + $0x2c] sm:$0xff] %v6522
        %6587 = vst [vmem:[%s492 + $0x34] sm:$0xf] %v6523
        %6588 = vst [vmem:[%s492 + $0x38] sm:$0xff] %v6524
        %6589 = vst [vmem:[%s492 + $0x40] sm:$0xff] %v6525
        %6590 = vst [vmem:[%s492 + $0x48] sm:$0xff] %v6526
        %6591 = vst [vmem:[%s492 + $0x50] sm:$0xf] %v6527
        %6592 = vst [vmem:[%s492 + $0x54] sm:$0xff] %v6528
        %6593 = vst [vmem:[%s492 + $0x5c] sm:$0xff] %v6529
        %6594 = vst [vmem:[%s492 + $0x64] sm:$0xff] %v6530
        %6595 = vst [vmem:[%s492 + $0x6c] sm:$0xf] %v6531
        %6596 = vst [vmem:[%s492 + $0x70] sm:$0xff] %v6532
        %6597 = vst [vmem:[%s492 + $0x78] sm:$0xff] %v6533
        %6598 = vst [vmem:[%s492 + $0x80] sm:$0xff] %v6534
        %6599 = vst [vmem:[%s492 + $0x88] sm:$0xf] %v6535
        %6600 = vst [vmem:[%s492 + $0x8c] sm:$0xff] %v6536
        %6601 = vst [vmem:[%s492 + $0x94] sm:$0xff] %v6537
        %6602 = vst [vmem:[%s492 + $0x9c] sm:$0xff] %v6538
        %6603 = vst [vmem:[%s492 + $0xa4] sm:$0xf] %v6539
        %6604 = vst [vmem:[%s492 + $0xa8] sm:$0xff] %v6540
        %6605 = vst [vmem:[%s492 + $0xb0] sm:$0xff] %v6541
        %6606 = vst [vmem:[%s492 + $0xb8] sm:$0xff] %v6542
        %6607 = vst [vmem:[%s492 + $0xc0] sm:$0xf] %v6543
        %6608 = vst [vmem:[%s492 + $0xc4] sm:$0xff] %v6544
        %6609 = vst [vmem:[%s492 + $0xcc] sm:$0xff] %v6545
        %6610 = vst [vmem:[%s492 + $0xd4] sm:$0xff] %v6546
        %6611 = vst [vmem:[%s492 + $0xdc] sm:$0xf] %v6547
        %6612 = vst [vmem:[%s492 + $0xe0] sm:$0xff] %v6548
        %6613 = vst [vmem:[%s492 + $0xe8] sm:$0xff] %v6549
        %6614 = vst [vmem:[%s492 + $0xf0] sm:$0xff] %v6550
        %6615 = vst [vmem:[%s492 + $0xf8] sm:$0xf] %v6551
        %6616 = vst [vmem:[%s492 + $0xfc] sm:$0xff] %v6552
        %6617 = vst [vmem:[%s492 + $0x104] sm:$0xff] %v6553
        %6618 = vst [vmem:[%s492 + $0x10c] sm:$0xff] %v6554
        %6619 = vst [vmem:[%s492 + $0x114] sm:$0xf] %v6555
        %6620 = vst [vmem:[%s492 + $0x118] sm:$0xff] %v6556
        %6621 = vst [vmem:[%s492 + $0x120] sm:$0xff] %v6557
        %6622 = vst [vmem:[%s492 + $0x128] sm:$0xff] %v6558
        %6623 = vst [vmem:[%s492 + $0x130] sm:$0xf] %v6559
        %6624 = vst [vmem:[%s492 + $0x134] sm:$0xff] %v6560
        %6625 = vst [vmem:[%s492 + $0x13c] sm:$0xff] %v6561
        %6626 = vst [vmem:[%s492 + $0x144] sm:$0xff] %v6562
        %6627 = vst [vmem:[%s492 + $0x14c] sm:$0xf] %v6563
        %6628 = vst [vmem:[%s492 + $0x150] sm:$0xff] %v6564
        %6629 = vst [vmem:[%s492 + $0x158] sm:$0xff] %v6565
        %6630 = vst [vmem:[%s492 + $0x160] sm:$0xff] %v6566
        %6631 = vst [vmem:[%s492 + $0x168] sm:$0xf] %v6567
        %6632 = vst [vmem:[%s492 + $0x16c] sm:$0xff] %v6568
        %6633 = vst [vmem:[%s492 + $0x174] sm:$0xff] %v6569
        %6634 = vst [vmem:[%s492 + $0x17c] sm:$0xff] %v6570
        %6635 = vst [vmem:[%s492 + $0x184] sm:$0xf] %v6571
        %6636 = vst [vmem:[%s492 + $0x188] sm:$0xff] %v6572
        %6637 = vst [vmem:[%s492 + $0x190] sm:$0xff] %v6573
        %6638 = vst [vmem:[%s492 + $0x198] sm:$0xff] %v6574
        %6639 = vst [vmem:[%s492 + $0x1a0] sm:$0xf] %v6575
        %6640 = vst [vmem:[%s492 + $0x1a4] sm:$0xff] %v6576
        %6641 = vst [vmem:[%s492 + $0x1ac] sm:$0xff] %v6577
        %6642 = vst [vmem:[%s492 + $0x1b4] sm:$0xff] %v6578
        %6643 = vst [vmem:[%s492 + $0x1bc] sm:$0xf] %v6579
        %s6644 = sand.u32 %s254, 1
        %s6645 = scalar_lea.sflag [#allocation4], %s6644
        %s6646 = sand.u32 %s254, 1
        %s6647 = smul.addr %s6646, 448
        %s6648 = scalar_lea.vmem [#allocation16], %s6647
        // Predicated region
        $region93: #{tpu_custom_call.1} parent=59 // pred_check
          %p6649 = pneg %p264
        $region94: #{tpu_custom_call.1} parent=59 // pred_check_branch
          %6651 = sbr.rel (%p6649) target = $region96
        $region95: #{tpu_custom_call.1} parent=59 // pred_region
          %s6652 = smul.u32 16, %s31
          %6654 = vsyncadd %s6645, 0
          %s6655 = smul.addr %s6652, 7
          %s6656 = smul.addr %s6655, 4
          %s6657 = scalar_lea.hbm %s10, %s6656
          %s6658 = sshll.u32 %s6648, 4
          %s6659 = int_to_ptr.vmem [resolvable:$true] %s6658
          %s6660 = sshll.u32 %s6657, 4
          %s6661 = int_to_ptr.hbm [resolvable:$true] %s6660
          %6666 = dma.vmem_to_hbm [thread:$0]  %s6659, 7168, %s6661, %s6645, 448, 448, 28
        $region96: #{tpu_custom_call.1} parent=59 // pred_fallthru
          _
      $region60: #{tpu_custom_call.1} parent=5 // pred_fallthru
        _
      %p6667 = scmp.le.s32.totalorder 2, %s26
      // Predicated region
      $region97: #{tpu_custom_call.1} parent=5 // pred_check
        %p6668 = pneg %p6667
      $region98: #{tpu_custom_call.1} parent=5 // pred_check_branch
        %6670 = sbr.rel (%p6668) target = $region100
      $region99: #{tpu_custom_call.1} parent=5 // pred_region
        %s6671 = ssub.s32 %s26, 2
        // Predicated region
        $region101: #{tpu_custom_call.1} parent=99 // pred_check
          %p6672 = pneg %p270
        $region102: #{tpu_custom_call.1} parent=99 // pred_check_branch
          %6674 = sbr.rel (%p6672) target = $region104
        $region103: #{tpu_custom_call.1} parent=99 // pred_region
          %s6675 = sand.u32 %s255, 1
          %s6676 = scalar_lea.sflag [#allocation4], %s6675
          %s6677 = sand.u32 %s255, 1
          %s6678 = smul.addr %s6677, 448
          %s6679 = scalar_lea.vmem [#allocation16], %s6678
          %6681 = dma.done %s6676, 7168
        $region104: #{tpu_custom_call.1} parent=99 // pred_fallthru
          _
      $region100: #{tpu_custom_call.1} parent=5 // pred_fallthru
        _
    $region6: #{tpu_custom_call.1} parent=1 // loop_footer
      %s30 = sadd.s32 1, %s26
    $region7: #{tpu_custom_call.1} parent=1 // loop_footer_branch
      %25 = sbr.rel target = $region3
    $region8: #{tpu_custom_call.1} parent=1 // loop_exit
      _
    %6682 = vsyncpa [#allocation3], 1
    %s6683 = scalar_lea.sflag [#allocation3], 1
    %6684 = vsyncpa %s6683, 1
    %6685 = vsyncpa [#allocation6], 1
    %6686 = vsyncpa [#allocation9], 1
    %6687 = vsyncpa [#allocation12], 1
    %6688 = vsyncpa [#allocation15], 1
    %6689 = vsyncpa [#allocation4], 1
    %s6690 = scalar_lea.sflag [#allocation4], 1
    %6691 = vsyncpa %s6690, 1

</llo_original>
